<compile_context>
chip_gen: v7x
topology: tpu7x:2x2x1
jax: 0.10.0
libtpu: 0.0.40
codegen_flags: <defaults>
</compile_context>

<pallas_src>
import math
from functools import partial

import jax
import jax.numpy as jnp
from jax.experimental import pallas as pl
from jax.experimental.pallas import tpu as pltpu


def _layer_norm(y, g, b, eps=1e-5):
    mean = jnp.mean(y, axis=-1, keepdims=True)
    var = jnp.mean(jnp.square(y - mean), axis=-1, keepdims=True)
    return (y - mean) * jax.lax.rsqrt(var + eps) * g + b


# --------------------------------------------------------------------------- #
# Fused kernel: whole Prosody_Encoder forward for one batch block (Bblk*T rows)
# --------------------------------------------------------------------------- #
def prosody_kernel(enc_ref, sty_ref, m_ref, am_ref, tp_ref, tf_ref,
                   pre_w, pre_b, sty_w, sty_b,
                   wqkv, bqkv, wo, bo, ln1g, ln1b,
                   w1, b1, w2, b2, ln2g, ln2b, proj_w,
                   o_ref,
                   *, num_heads, n_blocks, kp, kf):
    R, C = enc_ref.shape                     # R = Bblk * T rows, C feature lanes
    dh = C // num_heads
    scale = 1.0 / math.sqrt(dh)

    mask = m_ref[...]                        # [R, 1]  1.0 on valid frames
    add_mask = am_ref[0]                     # [R, R]  block-diag + length mask (0 / -1e9)
    taps_p = [tp_ref[k] for k in range(kp)]  # [R, 1]  prenet-conv halo masks
    taps_f = [tf_ref[k] for k in range(kf)]  # [R, 1]  FFN-conv halo masks

    def shift_rows(x, d):
        # shifted[r] = x[r + d] (rows shifted in from outside the block are 0).
        # Built directly from the in-register value: no pad scratch, no
        # store->reload.  (pltpu.roll(x, (-d) % R, axis=0) is the XLU variant.)
        cols = x.shape[1]
        z = jnp.zeros((abs(d), cols), jnp.float32)
        if d > 0:
            return jnp.concatenate([x[d:, :], z], axis=0)
        return jnp.concatenate([z, x[:d, :]], axis=0)

    def conv1d_same(x, w_ref, w_base, K, taps):
        # 'same' Conv1d as K shifted-operand matmuls; halo masks zero taps that
        # would cross a batch-element boundary inside the flattened row block.
        p = (K - 1) // 2
        acc = None
        for k in range(K):
            d = k - p
            xs = x if d == 0 else shift_rows(x, d) * taps[k]
            term = jnp.dot(xs, w_ref[w_base + k],
                           preferred_element_type=jnp.float32)
            acc = term if acc is None else acc + term
        return acc

    # ---- prenet Conv1d(K=kp, same pad) + style Conv1d(K=1) + mask ---------- #
    x = conv1d_same(enc_ref[...], pre_w, 0, kp, taps_p) + pre_b[...]
    x = x + jnp.dot(sty_ref[...], sty_w[...],
                    preferred_element_type=jnp.float32) + sty_b[...]
    x = x * mask

    # ---- FFT blocks (post-LN FastSpeech style, dropout off) ---------------- #
    for n in range(n_blocks):
        # Multi-head self-attention: fused QKV, lane-concat heads, ONE wo dot.
        qkv = jnp.dot(x, wqkv[n], preferred_element_type=jnp.float32) + bqkv[n]
        heads = []
        for h in range(num_heads):
            q = qkv[:, h * dh:(h + 1) * dh]
            k_ = qkv[:, C + h * dh:C + (h + 1) * dh]
            v = qkv[:, 2 * C + h * dh:2 * C + (h + 1) * dh]
            s = jax.lax.dot_general(q, k_, (((1,), (1,)), ((), ())),
                                    preferred_element_type=jnp.float32) * scale
            s = s + add_mask
            s = s - jnp.max(s, axis=-1, keepdims=True)
            p = jnp.exp(s)
            p = p * pl.reciprocal(jnp.sum(p, axis=-1, keepdims=True),
                                  approx=True)
            heads.append(jnp.dot(p, v, preferred_element_type=jnp.float32))
        o = jnp.concatenate(heads, axis=-1)                    # [R, C]
        attn = jnp.dot(o, wo[n], preferred_element_type=jnp.float32) + bo[n]
        x = _layer_norm(attn + x, ln1g[n], ln1b[n]) * mask

        # Conv FFN: Conv1d(C->4C, kf) -> ReLU -> Conv1d(4C->C, kf)
        hid = conv1d_same(x, w1, n * kf, kf, taps_f) + b1[n]
        hid = jnp.maximum(hid, 0.0)
        y = conv1d_same(hid, w2, n * kf, kf, taps_f) + b2[n]
        x = _layer_norm(y + x, ln2g[n], ln2b[n]) * mask

    # ---- final 1x1 projection (lane-padded to 128, no bias) + mask ---------- #
    o_ref[...] = jnp.dot(x, proj_w[...],
                         preferred_element_type=jnp.float32) * mask


# --------------------------------------------------------------------------- #
# Wrapper
# --------------------------------------------------------------------------- #
def prosody_encoder_forward(params, encodings, styles, lengths,
                            prenet_kernel_size, ffn_kernel_size, num_heads):
    """encodings: [B, C, T], styles: [B, Cs, T] (PyTorch NCT). Returns [B, N_Mel//4, T]."""
    B, C, T = encodings.shape
    Cs = styles.shape[1]
    kp, kf = prenet_kernel_size, ffn_kernel_size
    out_dim = params["proj_w"].shape[1]
    out_pad = ((out_dim + 127) // 128) * 128          # lane-dense output store

    # Batch blocking: aim for >=128 MXU rows per step, but keep >=2 grid steps
    # when B >= 2 so both v7x TensorCores get work (v5e/v6e: ~0.35 us/step cost).
    bblk = max(1, min(B, -(-128 // T)))
    if B >= 2:
        bblk = min(bblk, -(-B // 2))
    grid_b = -(-B // bblk)
    if (bblk * T) % 8 != 0:                           # keep block sublane-aligned
        bblk, grid_b = B, 1
    B_pad = grid_b * bblk
    Rblk = bblk * T

    x_enc = jnp.transpose(encodings, (0, 2, 1)).astype(jnp.float32)   # [B, T, C]
    x_sty = jnp.transpose(styles, (0, 2, 1)).astype(jnp.float32)      # [B, T, Cs]
    valid = (jnp.arange(T)[None, :] < lengths[:, None]).astype(jnp.float32)  # [B, T]
    if B_pad > B:
        x_enc = jnp.pad(x_enc, ((0, B_pad - B), (0, 0), (0, 0)))
        x_sty = jnp.pad(x_sty, ((0, B_pad - B), (0, 0), (0, 0)))
        valid = jnp.pad(valid, ((0, B_pad - B), (0, 0)))

    enc_flat = x_enc.reshape(B_pad * T, C)
    sty_flat = x_sty.reshape(B_pad * T, Cs)
    mask_rows = valid.reshape(B_pad * T, 1)

    # Additive attention mask per grid block: block-diagonal over batch elements
    # in the flattened rows + key-length masking.
    bid = jnp.repeat(jnp.arange(B_pad, dtype=jnp.int32), T).reshape(grid_b, Rblk)
    same = bid[:, :, None] == bid[:, None, :]
    keyok = valid.reshape(grid_b, Rblk)[:, None, :] > 0.5
    add_mask = jnp.where(same & keyok, 0.0, -1e9).astype(jnp.float32)  # [grid_b,R,R]

    # Conv halo masks: zero taps that would reach outside [0, T) of a batch element.
    row_t = jnp.tile(jnp.arange(T, dtype=jnp.int32), bblk)             # [Rblk]
    def tap_masks(K):
        d = jnp.arange(K, dtype=jnp.int32) - (K - 1) // 2
        pos = row_t[None, :] + d[:, None]
        return (((pos >= 0) & (pos < T)).astype(jnp.float32))[:, :, None]  # [K,R,1]
    taps_p = tap_masks(kp)
    taps_f = tap_masks(kf)

    proj_w = jnp.pad(params["proj_w"], ((0, 0), (0, out_pad - out_dim)))
    n_blocks = params["wqkv"].shape[0]

    weight_names = ("prenet_w", "prenet_b", "style_w", "style_b",
                    "wqkv", "bqkv", "wo", "bo", "ln1_g", "ln1_b",
                    "w1", "b1", "w2", "b2", "ln2_g", "ln2_b")
    weights = [params[name] for name in weight_names] + [proj_w]

    def full_spec(arr):
        nd = arr.ndim
        return pl.BlockSpec(arr.shape, lambda b, _nd=nd: (0,) * _nd)

    kernel = partial(prosody_kernel, num_heads=num_heads, n_blocks=n_blocks,
                     kp=kp, kf=kf)

    out = pl.pallas_call(
        kernel,
        out_shape=jax.ShapeDtypeStruct((B_pad * T, out_pad), jnp.float32),
        grid=(grid_b,),
        in_specs=[pl.BlockSpec((Rblk, C), lambda i: (i, 0)),
                  pl.BlockSpec((Rblk, Cs), lambda i: (i, 0)),
                  pl.BlockSpec((Rblk, 1), lambda i: (i, 0)),
                  pl.BlockSpec((1, Rblk, Rblk), lambda i: (i, 0, 0)),
                  full_spec(taps_p), full_spec(taps_f)]
                 + [full_spec(w) for w in weights],
        out_specs=pl.BlockSpec((Rblk, out_pad), lambda i: (i, 0)),
        compiler_params=pltpu.CompilerParams(
            dimension_semantics=("parallel",)),
    )(enc_flat, sty_flat, mask_rows, add_mask, taps_p, taps_f, *weights)

    out = out.reshape(B_pad, T, out_pad)[:B, :, :out_dim]
    # TODO(synk): keep the NTC layout downstream (or consume the padded lanes)
    # instead of this wrapper transpose once T grows to real-model sizes.
    return jnp.transpose(out, (0, 2, 1))   # back to NCT [B, N_Mel//4, T]


# --------------------------------------------------------------------------- #
# Parameters
# --------------------------------------------------------------------------- #
def init_params(key, C, Cs, H, Kp, kf, n_blocks, out_dim):
    Ch = 4 * C
    keys = iter(jax.random.split(key, 32))

    def nrm(shape, scale=0.1):
        return jax.random.normal(next(keys), shape, jnp.float32) * scale

    return {
        "prenet_w": nrm((Kp, C, C)),            # [tap, c_in, c_out]
        "prenet_b": nrm((1, C)),
        "style_w": nrm((Cs, C)),
        "style_b": nrm((1, C)),
        "wqkv": nrm((n_blocks, C, 3 * C)),      # Q|K|V fused along output dim
        "bqkv": nrm((n_blocks, 1, 3 * C)),
        "wo": nrm((n_blocks, C, C)),
        "bo": nrm((n_blocks, 1, C)),
        "ln1_g": jnp.ones((n_blocks, 1, C), jnp.float32),
        "ln1_b": jnp.zeros((n_blocks, 1, C), jnp.float32),
        "w1": nrm((n_blocks * kf, C, Ch)),      # taps stacked: index n*kf + k
        "b1": nrm((n_blocks, 1, Ch)),
        "w2": nrm((n_blocks * kf, Ch, C)),
        "b2": nrm((n_blocks, 1, C)),
        "ln2_g": jnp.ones((n_blocks, 1, C), jnp.float32),
        "ln2_b": jnp.zeros((n_blocks, 1, C), jnp.float32),
        "proj_w": nrm((C, out_dim)),            # 1x1 conv, no bias
    }


# --------------------------------------------------------------------------- #
if __name__ == "__main__":
    # Hyper-parameters (small, consistent with the module):
    #   Encoder.Size = Prosody_Encoder.Size = 32, Style.Size = 16
    #   Prenet.Kernel_Size = 5, Residual.{Head=2, Kernel_Size=3, Stack=2}
    #   Sound.N_Mel = 80 -> projection channels = 20
    B, T = 2, 16
    C, Cs, H = 32, 16, 2
    Kp, kf, n_blocks = 5, 3, 2
    n_mel = 80
    out_dim = n_mel // 4

    key = jax.random.PRNGKey(0)
    k_enc, k_sty, k_par = jax.random.split(key, 3)
    encodings = jax.random.normal(k_enc, (B, C, T), jnp.float32)   # [B, C, T]
    styles = jax.random.normal(k_sty, (B, Cs, T), jnp.float32)     # [B, Cs, T]
    lengths = jnp.array([T, T - 4], jnp.int32)

    params = init_params(k_par, C, Cs, H, Kp, kf, n_blocks, out_dim)

    out = prosody_encoder_forward(params, encodings, styles, lengths,
                                  prenet_kernel_size=Kp, ffn_kernel_size=kf,
                                  num_heads=H)
    out = jax.block_until_ready(out)
    assert out.shape == (B, out_dim, T), out.shape
    assert bool(jnp.all(jnp.isfinite(out)))
    print("KERNEL_OK")
</pallas_src>

<mosaic_0001>
module attributes {stable_mosaic.version = 11 : i64} {
  func.func @prosody_kernel(%arg0: i32, %arg1: memref<16x32xf32, #tpu.memory_space<vmem>>, %arg2: memref<16x16xf32, #tpu.memory_space<vmem>>, %arg3: memref<16x1xf32, #tpu.memory_space<vmem>>, %arg4: memref<1x16x16xf32, #tpu.memory_space<vmem>>, %arg5: memref<5x16x1xf32, #tpu.memory_space<vmem>>, %arg6: memref<3x16x1xf32, #tpu.memory_space<vmem>>, %arg7: memref<5x32x32xf32, #tpu.memory_space<vmem>>, %arg8: memref<1x32xf32, #tpu.memory_space<vmem>>, %arg9: memref<16x32xf32, #tpu.memory_space<vmem>>, %arg10: memref<1x32xf32, #tpu.memory_space<vmem>>, %arg11: memref<2x32x96xf32, #tpu.memory_space<vmem>>, %arg12: memref<2x1x96xf32, #tpu.memory_space<vmem>>, %arg13: memref<2x32x32xf32, #tpu.memory_space<vmem>>, %arg14: memref<2x1x32xf32, #tpu.memory_space<vmem>>, %arg15: memref<2x1x32xf32, #tpu.memory_space<vmem>>, %arg16: memref<2x1x32xf32, #tpu.memory_space<vmem>>, %arg17: memref<6x32x128xf32, #tpu.memory_space<vmem>>, %arg18: memref<2x1x128xf32, #tpu.memory_space<vmem>>, %arg19: memref<6x128x32xf32, #tpu.memory_space<vmem>>, %arg20: memref<2x1x32xf32, #tpu.memory_space<vmem>>, %arg21: memref<2x1x32xf32, #tpu.memory_space<vmem>>, %arg22: memref<2x1x32xf32, #tpu.memory_space<vmem>>, %arg23: memref<32x128xf32, #tpu.memory_space<vmem>>, %arg24: memref<16x128xf32, #tpu.memory_space<vmem>>) attributes {dimension_semantics = [#tpu.dimension_semantics<parallel>], iteration_bounds = array<i64: 2>, scalar_prefetch = 0 : i64, scratch_operands = 0 : i64, tpu.core_type = #tpu.core_type<tc>, window_params = [{transform_indices = @transform_0, window_bounds = array<i64: 16, 32>}, {transform_indices = @transform_1, window_bounds = array<i64: 16, 16>}, {transform_indices = @transform_2, window_bounds = array<i64: 16, 1>}, {transform_indices = @transform_3, window_bounds = array<i64: 1, 16, 16>}, {pipeline_mode = #tpu.pipeline_mode<synchronous>, transform_indices = @transform_4, window_bounds = array<i64: 5, 16, 1>}, {pipeline_mode = #tpu.pipeline_mode<synchronous>, transform_indices = @transform_5, window_bounds = array<i64: 3, 16, 1>}, {pipeline_mode = #tpu.pipeline_mode<synchronous>, transform_indices = @transform_6, window_bounds = array<i64: 5, 32, 32>}, {pipeline_mode = #tpu.pipeline_mode<synchronous>, transform_indices = @transform_7, window_bounds = array<i64: 1, 32>}, {pipeline_mode = #tpu.pipeline_mode<synchronous>, transform_indices = @transform_8, window_bounds = array<i64: 16, 32>}, {pipeline_mode = #tpu.pipeline_mode<synchronous>, transform_indices = @transform_9, window_bounds = array<i64: 1, 32>}, {pipeline_mode = #tpu.pipeline_mode<synchronous>, transform_indices = @transform_10, window_bounds = array<i64: 2, 32, 96>}, {pipeline_mode = #tpu.pipeline_mode<synchronous>, transform_indices = @transform_11, window_bounds = array<i64: 2, 1, 96>}, {pipeline_mode = #tpu.pipeline_mode<synchronous>, transform_indices = @transform_12, window_bounds = array<i64: 2, 32, 32>}, {pipeline_mode = #tpu.pipeline_mode<synchronous>, transform_indices = @transform_13, window_bounds = array<i64: 2, 1, 32>}, {pipeline_mode = #tpu.pipeline_mode<synchronous>, transform_indices = @transform_14, window_bounds = array<i64: 2, 1, 32>}, {pipeline_mode = #tpu.pipeline_mode<synchronous>, transform_indices = @transform_15, window_bounds = array<i64: 2, 1, 32>}, {pipeline_mode = #tpu.pipeline_mode<synchronous>, transform_indices = @transform_16, window_bounds = array<i64: 6, 32, 128>}, {pipeline_mode = #tpu.pipeline_mode<synchronous>, transform_indices = @transform_17, window_bounds = array<i64: 2, 1, 128>}, {pipeline_mode = #tpu.pipeline_mode<synchronous>, transform_indices = @transform_18, window_bounds = array<i64: 6, 128, 32>}, {pipeline_mode = #tpu.pipeline_mode<synchronous>, transform_indices = @transform_19, window_bounds = array<i64: 2, 1, 32>}, {pipeline_mode = #tpu.pipeline_mode<synchronous>, transform_indices = @transform_20, window_bounds = array<i64: 2, 1, 32>}, {pipeline_mode = #tpu.pipeline_mode<synchronous>, transform_indices = @transform_21, window_bounds = array<i64: 2, 1, 32>}, {pipeline_mode = #tpu.pipeline_mode<synchronous>, transform_indices = @transform_22, window_bounds = array<i64: 32, 128>}, {transform_indices = @transform_23, window_bounds = array<i64: 16, 128>}]} {
    %c0 = arith.constant 0 : index
    %c0_0 = arith.constant 0 : index
    %0 = vector.load %arg3[%c0, %c0_0] : memref<16x1xf32, #tpu.memory_space<vmem>>, vector<16x1xf32>
    %c0_1 = arith.constant 0 : index
    %c0_2 = arith.constant 0 : index
    %c0_3 = arith.constant 0 : index
    %1 = vector.load %arg4[%c0_1, %c0_2, %c0_3] : memref<1x16x16xf32, #tpu.memory_space<vmem>>, vector<1x16x16xf32>
    %2 = vector.shape_cast %1 : vector<1x16x16xf32> to vector<16x16xf32>
    %c0_4 = arith.constant 0 : index
    %c0_5 = arith.constant 0 : index
    %c0_6 = arith.constant 0 : index
    %3 = vector.load %arg5[%c0_4, %c0_5, %c0_6] : memref<5x16x1xf32, #tpu.memory_space<vmem>>, vector<1x16x1xf32>
    %4 = vector.shape_cast %3 : vector<1x16x1xf32> to vector<16x1xf32>
    %c1 = arith.constant 1 : index
    %c0_7 = arith.constant 0 : index
    %c0_8 = arith.constant 0 : index
    %5 = vector.load %arg5[%c1, %c0_7, %c0_8] : memref<5x16x1xf32, #tpu.memory_space<vmem>>, vector<1x16x1xf32>
    %6 = vector.shape_cast %5 : vector<1x16x1xf32> to vector<16x1xf32>
    %c3 = arith.constant 3 : index
    %c0_9 = arith.constant 0 : index
    %c0_10 = arith.constant 0 : index
    %7 = vector.load %arg5[%c3, %c0_9, %c0_10] : memref<5x16x1xf32, #tpu.memory_space<vmem>>, vector<1x16x1xf32>
    %8 = vector.shape_cast %7 : vector<1x16x1xf32> to vector<16x1xf32>
    %c4 = arith.constant 4 : index
    %c0_11 = arith.constant 0 : index
    %c0_12 = arith.constant 0 : index
    %9 = vector.load %arg5[%c4, %c0_11, %c0_12] : memref<5x16x1xf32, #tpu.memory_space<vmem>>, vector<1x16x1xf32>
    %10 = vector.shape_cast %9 : vector<1x16x1xf32> to vector<16x1xf32>
    %c0_13 = arith.constant 0 : index
    %c0_14 = arith.constant 0 : index
    %c0_15 = arith.constant 0 : index
    %11 = vector.load %arg6[%c0_13, %c0_14, %c0_15] : memref<3x16x1xf32, #tpu.memory_space<vmem>>, vector<1x16x1xf32>
    %12 = vector.shape_cast %11 : vector<1x16x1xf32> to vector<16x1xf32>
    %c2 = arith.constant 2 : index
    %c0_16 = arith.constant 0 : index
    %c0_17 = arith.constant 0 : index
    %13 = vector.load %arg6[%c2, %c0_16, %c0_17] : memref<3x16x1xf32, #tpu.memory_space<vmem>>, vector<1x16x1xf32>
    %14 = vector.shape_cast %13 : vector<1x16x1xf32> to vector<16x1xf32>
    %c0_18 = arith.constant 0 : index
    %c0_19 = arith.constant 0 : index
    %15 = vector.load %arg1[%c0_18, %c0_19] : memref<16x32xf32, #tpu.memory_space<vmem>>, vector<16x32xf32>
    %cst = arith.constant 0.000000e+00 : f32
    %16 = vector.broadcast %cst : f32 to vector<2x32xf32>
    %17 = vector.extract_strided_slice %15 {offsets = [0, 0], sizes = [14, 32], strides = [1, 1]} : vector<16x32xf32> to vector<14x32xf32>
    %18 = tpu.concatenate %16, %17 in 0 : vector<2x32xf32>, vector<14x32xf32> -> vector<16x32xf32>
    %19 = vector.broadcast %4 : vector<16x1xf32> to vector<16x32xf32>
    %20 = arith.mulf %18, %19 : vector<16x32xf32>
    %c0_20 = arith.constant 0 : index
    %c0_21 = arith.constant 0 : index
    %c0_22 = arith.constant 0 : index
    %21 = vector.load %arg7[%c0_20, %c0_21, %c0_22] : memref<5x32x32xf32, #tpu.memory_space<vmem>>, vector<1x32x32xf32>
    %22 = vector.shape_cast %21 : vector<1x32x32xf32> to vector<32x32xf32>
    %cst_23 = arith.constant dense<0.000000e+00> : vector<16x32xf32>
    %23 = tpu.matmul %20, %22, %cst_23 {dimension_numbers = #tpu.dot_dimension_numbers<[1], [0], [0], [1], [0, 0, 1, 1], [], []>} : vector<16x32xf32>, vector<32x32xf32>, vector<16x32xf32> -> vector<16x32xf32>
    %cst_24 = arith.constant 0.000000e+00 : f32
    %24 = vector.broadcast %cst_24 : f32 to vector<1x32xf32>
    %25 = vector.extract_strided_slice %15 {offsets = [0, 0], sizes = [15, 32], strides = [1, 1]} : vector<16x32xf32> to vector<15x32xf32>
    %26 = tpu.concatenate %24, %25 in 0 : vector<1x32xf32>, vector<15x32xf32> -> vector<16x32xf32>
    %27 = vector.broadcast %6 : vector<16x1xf32> to vector<16x32xf32>
    %28 = arith.mulf %26, %27 : vector<16x32xf32>
    %c1_25 = arith.constant 1 : index
    %c0_26 = arith.constant 0 : index
    %c0_27 = arith.constant 0 : index
    %29 = vector.load %arg7[%c1_25, %c0_26, %c0_27] : memref<5x32x32xf32, #tpu.memory_space<vmem>>, vector<1x32x32xf32>
    %30 = vector.shape_cast %29 : vector<1x32x32xf32> to vector<32x32xf32>
    %cst_28 = arith.constant dense<0.000000e+00> : vector<16x32xf32>
    %31 = tpu.matmul %28, %30, %cst_28 {dimension_numbers = #tpu.dot_dimension_numbers<[1], [0], [0], [1], [0, 0, 1, 1], [], []>} : vector<16x32xf32>, vector<32x32xf32>, vector<16x32xf32> -> vector<16x32xf32>
    %32 = arith.addf %23, %31 : vector<16x32xf32>
    %c2_29 = arith.constant 2 : index
    %c0_30 = arith.constant 0 : index
    %c0_31 = arith.constant 0 : index
    %33 = vector.load %arg7[%c2_29, %c0_30, %c0_31] : memref<5x32x32xf32, #tpu.memory_space<vmem>>, vector<1x32x32xf32>
    %34 = vector.shape_cast %33 : vector<1x32x32xf32> to vector<32x32xf32>
    %cst_32 = arith.constant dense<0.000000e+00> : vector<16x32xf32>
    %35 = tpu.matmul %15, %34, %cst_32 {dimension_numbers = #tpu.dot_dimension_numbers<[1], [0], [0], [1], [0, 0, 1, 1], [], []>} : vector<16x32xf32>, vector<32x32xf32>, vector<16x32xf32> -> vector<16x32xf32>
    %36 = arith.addf %32, %35 : vector<16x32xf32>
    %cst_33 = arith.constant 0.000000e+00 : f32
    %37 = vector.broadcast %cst_33 : f32 to vector<1x32xf32>
    %38 = vector.extract_strided_slice %15 {offsets = [1, 0], sizes = [15, 32], strides = [1, 1]} : vector<16x32xf32> to vector<15x32xf32>
    %39 = tpu.concatenate %38, %37 in 0 : vector<15x32xf32>, vector<1x32xf32> -> vector<16x32xf32>
    %40 = vector.broadcast %8 : vector<16x1xf32> to vector<16x32xf32>
    %41 = arith.mulf %39, %40 : vector<16x32xf32>
    %c3_34 = arith.constant 3 : index
    %c0_35 = arith.constant 0 : index
    %c0_36 = arith.constant 0 : index
    %42 = vector.load %arg7[%c3_34, %c0_35, %c0_36] : memref<5x32x32xf32, #tpu.memory_space<vmem>>, vector<1x32x32xf32>
    %43 = vector.shape_cast %42 : vector<1x32x32xf32> to vector<32x32xf32>
    %cst_37 = arith.constant dense<0.000000e+00> : vector<16x32xf32>
    %44 = tpu.matmul %41, %43, %cst_37 {dimension_numbers = #tpu.dot_dimension_numbers<[1], [0], [0], [1], [0, 0, 1, 1], [], []>} : vector<16x32xf32>, vector<32x32xf32>, vector<16x32xf32> -> vector<16x32xf32>
    %45 = arith.addf %36, %44 : vector<16x32xf32>
    %cst_38 = arith.constant 0.000000e+00 : f32
    %46 = vector.broadcast %cst_38 : f32 to vector<2x32xf32>
    %47 = vector.extract_strided_slice %15 {offsets = [2, 0], sizes = [14, 32], strides = [1, 1]} : vector<16x32xf32> to vector<14x32xf32>
    %48 = tpu.concatenate %47, %46 in 0 : vector<14x32xf32>, vector<2x32xf32> -> vector<16x32xf32>
    %49 = vector.broadcast %10 : vector<16x1xf32> to vector<16x32xf32>
    %50 = arith.mulf %48, %49 : vector<16x32xf32>
    %c4_39 = arith.constant 4 : index
    %c0_40 = arith.constant 0 : index
    %c0_41 = arith.constant 0 : index
    %51 = vector.load %arg7[%c4_39, %c0_40, %c0_41] : memref<5x32x32xf32, #tpu.memory_space<vmem>>, vector<1x32x32xf32>
    %52 = vector.shape_cast %51 : vector<1x32x32xf32> to vector<32x32xf32>
    %cst_42 = arith.constant dense<0.000000e+00> : vector<16x32xf32>
    %53 = tpu.matmul %50, %52, %cst_42 {dimension_numbers = #tpu.dot_dimension_numbers<[1], [0], [0], [1], [0, 0, 1, 1], [], []>} : vector<16x32xf32>, vector<32x32xf32>, vector<16x32xf32> -> vector<16x32xf32>
    %54 = arith.addf %45, %53 : vector<16x32xf32>
    %c0_43 = arith.constant 0 : index
    %c0_44 = arith.constant 0 : index
    %55 = vector.load %arg8[%c0_43, %c0_44] : memref<1x32xf32, #tpu.memory_space<vmem>>, vector<1x32xf32>
    %56 = vector.broadcast %55 : vector<1x32xf32> to vector<16x32xf32>
    %57 = arith.addf %54, %56 : vector<16x32xf32>
    %c0_45 = arith.constant 0 : index
    %c0_46 = arith.constant 0 : index
    %58 = vector.load %arg2[%c0_45, %c0_46] : memref<16x16xf32, #tpu.memory_space<vmem>>, vector<16x16xf32>
    %c0_47 = arith.constant 0 : index
    %c0_48 = arith.constant 0 : index
    %59 = vector.load %arg9[%c0_47, %c0_48] : memref<16x32xf32, #tpu.memory_space<vmem>>, vector<16x32xf32>
    %cst_49 = arith.constant dense<0.000000e+00> : vector<16x32xf32>
    %60 = tpu.matmul %58, %59, %cst_49 {dimension_numbers = #tpu.dot_dimension_numbers<[1], [0], [0], [1], [0, 0, 1, 1], [], []>} : vector<16x16xf32>, vector<16x32xf32>, vector<16x32xf32> -> vector<16x32xf32>
    %61 = arith.addf %57, %60 : vector<16x32xf32>
    %c0_50 = arith.constant 0 : index
    %c0_51 = arith.constant 0 : index
    %62 = vector.load %arg10[%c0_50, %c0_51] : memref<1x32xf32, #tpu.memory_space<vmem>>, vector<1x32xf32>
    %63 = vector.broadcast %62 : vector<1x32xf32> to vector<16x32xf32>
    %64 = arith.addf %61, %63 : vector<16x32xf32>
    %65 = vector.broadcast %0 : vector<16x1xf32> to vector<16x32xf32>
    %66 = arith.mulf %64, %65 : vector<16x32xf32>
    %c0_52 = arith.constant 0 : index
    %c0_53 = arith.constant 0 : index
    %c0_54 = arith.constant 0 : index
    %67 = vector.load %arg11[%c0_52, %c0_53, %c0_54] : memref<2x32x96xf32, #tpu.memory_space<vmem>>, vector<1x32x96xf32>
    %68 = vector.shape_cast %67 : vector<1x32x96xf32> to vector<32x96xf32>
    %cst_55 = arith.constant dense<0.000000e+00> : vector<16x96xf32>
    %69 = tpu.matmul %66, %68, %cst_55 {dimension_numbers = #tpu.dot_dimension_numbers<[1], [0], [0], [1], [0, 0, 1, 1], [], []>} : vector<16x32xf32>, vector<32x96xf32>, vector<16x96xf32> -> vector<16x96xf32>
    %c0_56 = arith.constant 0 : index
    %c0_57 = arith.constant 0 : index
    %c0_58 = arith.constant 0 : index
    %70 = vector.load %arg12[%c0_56, %c0_57, %c0_58] : memref<2x1x96xf32, #tpu.memory_space<vmem>>, vector<1x1x96xf32>
    %71 = vector.shape_cast %70 : vector<1x1x96xf32> to vector<1x96xf32>
    %72 = vector.broadcast %71 : vector<1x96xf32> to vector<16x96xf32>
    %73 = arith.addf %69, %72 : vector<16x96xf32>
    %74 = vector.extract_strided_slice %73 {offsets = [0, 0], sizes = [16, 16], strides = [1, 1]} : vector<16x96xf32> to vector<16x16xf32>
    %75 = vector.extract_strided_slice %73 {offsets = [0, 32], sizes = [16, 16], strides = [1, 1]} : vector<16x96xf32> to vector<16x16xf32>
    %76 = vector.extract_strided_slice %73 {offsets = [0, 64], sizes = [16, 16], strides = [1, 1]} : vector<16x96xf32> to vector<16x16xf32>
    %cst_59 = arith.constant dense<0.000000e+00> : vector<16x16xf32>
    %77 = tpu.matmul %74, %75, %cst_59 {dimension_numbers = #tpu.dot_dimension_numbers<[1], [1], [0], [0], [0, 0, 1, 0], [], []>} : vector<16x16xf32>, vector<16x16xf32>, vector<16x16xf32> -> vector<16x16xf32>
    %cst_60 = arith.constant 2.500000e-01 : f32
    %78 = vector.broadcast %cst_60 : f32 to vector<16x16xf32>
    %79 = arith.mulf %77, %78 : vector<16x16xf32>
    %80 = arith.addf %79, %2 : vector<16x16xf32>
    %cst_61 = arith.constant dense<0xFF800000> : vector<16xf32>
    %81 = vector.multi_reduction <maximumf>, %80, %cst_61 [1] : vector<16x16xf32> to vector<16xf32>
    %82 = vector.shape_cast %81 : vector<16xf32> to vector<16x1xf32>
    %83 = vector.broadcast %82 : vector<16x1xf32> to vector<16x16xf32>
    %84 = arith.subf %80, %83 : vector<16x16xf32>
    %85 = math.exp %84 : vector<16x16xf32>
    %cst_62 = arith.constant dense<0.000000e+00> : vector<16xf32>
    %86 = vector.multi_reduction <add>, %85, %cst_62 [1] : vector<16x16xf32> to vector<16xf32>
    %87 = vector.shape_cast %86 : vector<16xf32> to vector<16x1xf32>
    %88 = tpu.reciprocal %87 {approx = true} : vector<16x1xf32> -> vector<16x1xf32>
    %89 = vector.broadcast %88 : vector<16x1xf32> to vector<16x16xf32>
    %90 = arith.mulf %85, %89 : vector<16x16xf32>
    %cst_63 = arith.constant dense<0.000000e+00> : vector<16x16xf32>
    %91 = tpu.matmul %90, %76, %cst_63 {dimension_numbers = #tpu.dot_dimension_numbers<[1], [0], [0], [1], [0, 0, 1, 1], [], []>} : vector<16x16xf32>, vector<16x16xf32>, vector<16x16xf32> -> vector<16x16xf32>
    %92 = vector.extract_strided_slice %73 {offsets = [0, 16], sizes = [16, 16], strides = [1, 1]} : vector<16x96xf32> to vector<16x16xf32>
    %93 = vector.extract_strided_slice %73 {offsets = [0, 48], sizes = [16, 16], strides = [1, 1]} : vector<16x96xf32> to vector<16x16xf32>
    %94 = vector.extract_strided_slice %73 {offsets = [0, 80], sizes = [16, 16], strides = [1, 1]} : vector<16x96xf32> to vector<16x16xf32>
    %cst_64 = arith.constant dense<0.000000e+00> : vector<16x16xf32>
    %95 = tpu.matmul %92, %93, %cst_64 {dimension_numbers = #tpu.dot_dimension_numbers<[1], [1], [0], [0], [0, 0, 1, 0], [], []>} : vector<16x16xf32>, vector<16x16xf32>, vector<16x16xf32> -> vector<16x16xf32>
    %cst_65 = arith.constant 2.500000e-01 : f32
    %96 = vector.broadcast %cst_65 : f32 to vector<16x16xf32>
    %97 = arith.mulf %95, %96 : vector<16x16xf32>
    %98 = arith.addf %97, %2 : vector<16x16xf32>
    %cst_66 = arith.constant dense<0xFF800000> : vector<16xf32>
    %99 = vector.multi_reduction <maximumf>, %98, %cst_66 [1] : vector<16x16xf32> to vector<16xf32>
    %100 = vector.shape_cast %99 : vector<16xf32> to vector<16x1xf32>
    %101 = vector.broadcast %100 : vector<16x1xf32> to vector<16x16xf32>
    %102 = arith.subf %98, %101 : vector<16x16xf32>
    %103 = math.exp %102 : vector<16x16xf32>
    %cst_67 = arith.constant dense<0.000000e+00> : vector<16xf32>
    %104 = vector.multi_reduction <add>, %103, %cst_67 [1] : vector<16x16xf32> to vector<16xf32>
    %105 = vector.shape_cast %104 : vector<16xf32> to vector<16x1xf32>
    %106 = tpu.reciprocal %105 {approx = true} : vector<16x1xf32> -> vector<16x1xf32>
    %107 = vector.broadcast %106 : vector<16x1xf32> to vector<16x16xf32>
    %108 = arith.mulf %103, %107 : vector<16x16xf32>
    %cst_68 = arith.constant dense<0.000000e+00> : vector<16x16xf32>
    %109 = tpu.matmul %108, %94, %cst_68 {dimension_numbers = #tpu.dot_dimension_numbers<[1], [0], [0], [1], [0, 0, 1, 1], [], []>} : vector<16x16xf32>, vector<16x16xf32>, vector<16x16xf32> -> vector<16x16xf32>
    %110 = tpu.concatenate %91, %109 in 1 : vector<16x16xf32>, vector<16x16xf32> -> vector<16x32xf32>
    %c0_69 = arith.constant 0 : index
    %c0_70 = arith.constant 0 : index
    %c0_71 = arith.constant 0 : index
    %111 = vector.load %arg13[%c0_69, %c0_70, %c0_71] : memref<2x32x32xf32, #tpu.memory_space<vmem>>, vector<1x32x32xf32>
    %112 = vector.shape_cast %111 : vector<1x32x32xf32> to vector<32x32xf32>
    %cst_72 = arith.constant dense<0.000000e+00> : vector<16x32xf32>
    %113 = tpu.matmul %110, %112, %cst_72 {dimension_numbers = #tpu.dot_dimension_numbers<[1], [0], [0], [1], [0, 0, 1, 1], [], []>} : vector<16x32xf32>, vector<32x32xf32>, vector<16x32xf32> -> vector<16x32xf32>
    %c0_73 = arith.constant 0 : index
    %c0_74 = arith.constant 0 : index
    %c0_75 = arith.constant 0 : index
    %114 = vector.load %arg14[%c0_73, %c0_74, %c0_75] : memref<2x1x32xf32, #tpu.memory_space<vmem>>, vector<1x1x32xf32>
    %115 = vector.shape_cast %114 : vector<1x1x32xf32> to vector<1x32xf32>
    %116 = vector.broadcast %115 : vector<1x32xf32> to vector<16x32xf32>
    %117 = arith.addf %113, %116 : vector<16x32xf32>
    %118 = arith.addf %117, %66 : vector<16x32xf32>
    %c0_76 = arith.constant 0 : index
    %c0_77 = arith.constant 0 : index
    %c0_78 = arith.constant 0 : index
    %119 = vector.load %arg15[%c0_76, %c0_77, %c0_78] : memref<2x1x32xf32, #tpu.memory_space<vmem>>, vector<1x1x32xf32>
    %120 = vector.shape_cast %119 : vector<1x1x32xf32> to vector<1x32xf32>
    %c0_79 = arith.constant 0 : index
    %c0_80 = arith.constant 0 : index
    %c0_81 = arith.constant 0 : index
    %121 = vector.load %arg16[%c0_79, %c0_80, %c0_81] : memref<2x1x32xf32, #tpu.memory_space<vmem>>, vector<1x1x32xf32>
    %122 = vector.shape_cast %121 : vector<1x1x32xf32> to vector<1x32xf32>
    %cst_82 = arith.constant dense<0.000000e+00> : vector<16xf32>
    %123 = vector.multi_reduction <add>, %118, %cst_82 [1] : vector<16x32xf32> to vector<16xf32>
    %124 = vector.shape_cast %123 : vector<16xf32> to vector<16x1xf32>
    %cst_83 = arith.constant 3.200000e+01 : f32
    %125 = vector.broadcast %cst_83 : f32 to vector<16x1xf32>
    %126 = arith.divf %124, %125 : vector<16x1xf32>
    %127 = vector.broadcast %126 : vector<16x1xf32> to vector<16x32xf32>
    %128 = arith.subf %118, %127 : vector<16x32xf32>
    %129 = arith.mulf %128, %128 : vector<16x32xf32>
    %cst_84 = arith.constant dense<0.000000e+00> : vector<16xf32>
    %130 = vector.multi_reduction <add>, %129, %cst_84 [1] : vector<16x32xf32> to vector<16xf32>
    %131 = vector.shape_cast %130 : vector<16xf32> to vector<16x1xf32>
    %cst_85 = arith.constant 3.200000e+01 : f32
    %132 = vector.broadcast %cst_85 : f32 to vector<16x1xf32>
    %133 = arith.divf %131, %132 : vector<16x1xf32>
    %134 = vector.broadcast %126 : vector<16x1xf32> to vector<16x32xf32>
    %135 = arith.subf %118, %134 : vector<16x32xf32>
    %cst_86 = arith.constant 9.99999974E-6 : f32
    %136 = vector.broadcast %cst_86 : f32 to vector<16x1xf32>
    %137 = arith.addf %133, %136 : vector<16x1xf32>
    %138 = math.rsqrt %137 : vector<16x1xf32>
    %139 = vector.broadcast %138 : vector<16x1xf32> to vector<16x32xf32>
    %140 = arith.mulf %135, %139 : vector<16x32xf32>
    %141 = vector.broadcast %120 : vector<1x32xf32> to vector<16x32xf32>
    %142 = arith.mulf %140, %141 : vector<16x32xf32>
    %143 = vector.broadcast %122 : vector<1x32xf32> to vector<16x32xf32>
    %144 = arith.addf %142, %143 : vector<16x32xf32>
    %145 = vector.broadcast %0 : vector<16x1xf32> to vector<16x32xf32>
    %146 = arith.mulf %144, %145 : vector<16x32xf32>
    %cst_87 = arith.constant 0.000000e+00 : f32
    %147 = vector.broadcast %cst_87 : f32 to vector<1x32xf32>
    %148 = vector.extract_strided_slice %146 {offsets = [0, 0], sizes = [15, 32], strides = [1, 1]} : vector<16x32xf32> to vector<15x32xf32>
    %149 = tpu.concatenate %147, %148 in 0 : vector<1x32xf32>, vector<15x32xf32> -> vector<16x32xf32>
    %150 = vector.broadcast %12 : vector<16x1xf32> to vector<16x32xf32>
    %151 = arith.mulf %149, %150 : vector<16x32xf32>
    %c0_88 = arith.constant 0 : index
    %c0_89 = arith.constant 0 : index
    %c0_90 = arith.constant 0 : index
    %152 = vector.load %arg17[%c0_88, %c0_89, %c0_90] : memref<6x32x128xf32, #tpu.memory_space<vmem>>, vector<1x32x128xf32>
    %153 = vector.shape_cast %152 : vector<1x32x128xf32> to vector<32x128xf32>
    %cst_91 = arith.constant dense<0.000000e+00> : vector<16x128xf32>
    %154 = tpu.matmul %151, %153, %cst_91 {dimension_numbers = #tpu.dot_dimension_numbers<[1], [0], [0], [1], [0, 0, 1, 1], [], []>} : vector<16x32xf32>, vector<32x128xf32>, vector<16x128xf32> -> vector<16x128xf32>
    %c1_92 = arith.constant 1 : index
    %c0_93 = arith.constant 0 : index
    %c0_94 = arith.constant 0 : index
    %155 = vector.load %arg17[%c1_92, %c0_93, %c0_94] : memref<6x32x128xf32, #tpu.memory_space<vmem>>, vector<1x32x128xf32>
    %156 = vector.shape_cast %155 : vector<1x32x128xf32> to vector<32x128xf32>
    %cst_95 = arith.constant dense<0.000000e+00> : vector<16x128xf32>
    %157 = tpu.matmul %146, %156, %cst_95 {dimension_numbers = #tpu.dot_dimension_numbers<[1], [0], [0], [1], [0, 0, 1, 1], [], []>} : vector<16x32xf32>, vector<32x128xf32>, vector<16x128xf32> -> vector<16x128xf32>
    %158 = arith.addf %154, %157 : vector<16x128xf32>
    %cst_96 = arith.constant 0.000000e+00 : f32
    %159 = vector.broadcast %cst_96 : f32 to vector<1x32xf32>
    %160 = vector.extract_strided_slice %146 {offsets = [1, 0], sizes = [15, 32], strides = [1, 1]} : vector<16x32xf32> to vector<15x32xf32>
    %161 = tpu.concatenate %160, %159 in 0 : vector<15x32xf32>, vector<1x32xf32> -> vector<16x32xf32>
    %162 = vector.broadcast %14 : vector<16x1xf32> to vector<16x32xf32>
    %163 = arith.mulf %161, %162 : vector<16x32xf32>
    %c2_97 = arith.constant 2 : index
    %c0_98 = arith.constant 0 : index
    %c0_99 = arith.constant 0 : index
    %164 = vector.load %arg17[%c2_97, %c0_98, %c0_99] : memref<6x32x128xf32, #tpu.memory_space<vmem>>, vector<1x32x128xf32>
    %165 = vector.shape_cast %164 : vector<1x32x128xf32> to vector<32x128xf32>
    %cst_100 = arith.constant dense<0.000000e+00> : vector<16x128xf32>
    %166 = tpu.matmul %163, %165, %cst_100 {dimension_numbers = #tpu.dot_dimension_numbers<[1], [0], [0], [1], [0, 0, 1, 1], [], []>} : vector<16x32xf32>, vector<32x128xf32>, vector<16x128xf32> -> vector<16x128xf32>
    %167 = arith.addf %158, %166 : vector<16x128xf32>
    %c0_101 = arith.constant 0 : index
    %c0_102 = arith.constant 0 : index
    %c0_103 = arith.constant 0 : index
    %168 = vector.load %arg18[%c0_101, %c0_102, %c0_103] : memref<2x1x128xf32, #tpu.memory_space<vmem>>, vector<1x1x128xf32>
    %169 = vector.shape_cast %168 : vector<1x1x128xf32> to vector<1x128xf32>
    %170 = vector.broadcast %169 : vector<1x128xf32> to vector<16x128xf32>
    %171 = arith.addf %167, %170 : vector<16x128xf32>
    %cst_104 = arith.constant 0.000000e+00 : f32
    %172 = vector.broadcast %cst_104 : f32 to vector<16x128xf32>
    %173 = arith.maximumf %171, %172 : vector<16x128xf32>
    %cst_105 = arith.constant 0.000000e+00 : f32
    %174 = vector.broadcast %cst_105 : f32 to vector<1x128xf32>
    %175 = vector.extract_strided_slice %173 {offsets = [0, 0], sizes = [15, 128], strides = [1, 1]} : vector<16x128xf32> to vector<15x128xf32>
    %176 = tpu.concatenate %174, %175 in 0 : vector<1x128xf32>, vector<15x128xf32> -> vector<16x128xf32>
    %177 = vector.broadcast %12 : vector<16x1xf32> to vector<16x128xf32>
    %178 = arith.mulf %176, %177 : vector<16x128xf32>
    %c0_106 = arith.constant 0 : index
    %c0_107 = arith.constant 0 : index
    %c0_108 = arith.constant 0 : index
    %179 = vector.load %arg19[%c0_106, %c0_107, %c0_108] : memref<6x128x32xf32, #tpu.memory_space<vmem>>, vector<1x128x32xf32>
    %180 = vector.shape_cast %179 : vector<1x128x32xf32> to vector<128x32xf32>
    %cst_109 = arith.constant dense<0.000000e+00> : vector<16x32xf32>
    %181 = tpu.matmul %178, %180, %cst_109 {dimension_numbers = #tpu.dot_dimension_numbers<[1], [0], [0], [1], [0, 0, 1, 1], [], []>} : vector<16x128xf32>, vector<128x32xf32>, vector<16x32xf32> -> vector<16x32xf32>
    %c1_110 = arith.constant 1 : index
    %c0_111 = arith.constant 0 : index
    %c0_112 = arith.constant 0 : index
    %182 = vector.load %arg19[%c1_110, %c0_111, %c0_112] : memref<6x128x32xf32, #tpu.memory_space<vmem>>, vector<1x128x32xf32>
    %183 = vector.shape_cast %182 : vector<1x128x32xf32> to vector<128x32xf32>
    %cst_113 = arith.constant dense<0.000000e+00> : vector<16x32xf32>
    %184 = tpu.matmul %173, %183, %cst_113 {dimension_numbers = #tpu.dot_dimension_numbers<[1], [0], [0], [1], [0, 0, 1, 1], [], []>} : vector<16x128xf32>, vector<128x32xf32>, vector<16x32xf32> -> vector<16x32xf32>
    %185 = arith.addf %181, %184 : vector<16x32xf32>
    %cst_114 = arith.constant 0.000000e+00 : f32
    %186 = vector.broadcast %cst_114 : f32 to vector<1x128xf32>
    %187 = vector.extract_strided_slice %173 {offsets = [1, 0], sizes = [15, 128], strides = [1, 1]} : vector<16x128xf32> to vector<15x128xf32>
    %188 = tpu.concatenate %187, %186 in 0 : vector<15x128xf32>, vector<1x128xf32> -> vector<16x128xf32>
    %189 = vector.broadcast %14 : vector<16x1xf32> to vector<16x128xf32>
    %190 = arith.mulf %188, %189 : vector<16x128xf32>
    %c2_115 = arith.constant 2 : index
    %c0_116 = arith.constant 0 : index
    %c0_117 = arith.constant 0 : index
    %191 = vector.load %arg19[%c2_115, %c0_116, %c0_117] : memref<6x128x32xf32, #tpu.memory_space<vmem>>, vector<1x128x32xf32>
    %192 = vector.shape_cast %191 : vector<1x128x32xf32> to vector<128x32xf32>
    %cst_118 = arith.constant dense<0.000000e+00> : vector<16x32xf32>
    %193 = tpu.matmul %190, %192, %cst_118 {dimension_numbers = #tpu.dot_dimension_numbers<[1], [0], [0], [1], [0, 0, 1, 1], [], []>} : vector<16x128xf32>, vector<128x32xf32>, vector<16x32xf32> -> vector<16x32xf32>
    %194 = arith.addf %185, %193 : vector<16x32xf32>
    %c0_119 = arith.constant 0 : index
    %c0_120 = arith.constant 0 : index
    %c0_121 = arith.constant 0 : index
    %195 = vector.load %arg20[%c0_119, %c0_120, %c0_121] : memref<2x1x32xf32, #tpu.memory_space<vmem>>, vector<1x1x32xf32>
    %196 = vector.shape_cast %195 : vector<1x1x32xf32> to vector<1x32xf32>
    %197 = vector.broadcast %196 : vector<1x32xf32> to vector<16x32xf32>
    %198 = arith.addf %194, %197 : vector<16x32xf32>
    %199 = arith.addf %198, %146 : vector<16x32xf32>
    %c0_122 = arith.constant 0 : index
    %c0_123 = arith.constant 0 : index
    %c0_124 = arith.constant 0 : index
    %200 = vector.load %arg21[%c0_122, %c0_123, %c0_124] : memref<2x1x32xf32, #tpu.memory_space<vmem>>, vector<1x1x32xf32>
    %201 = vector.shape_cast %200 : vector<1x1x32xf32> to vector<1x32xf32>
    %c0_125 = arith.constant 0 : index
    %c0_126 = arith.constant 0 : index
    %c0_127 = arith.constant 0 : index
    %202 = vector.load %arg22[%c0_125, %c0_126, %c0_127] : memref<2x1x32xf32, #tpu.memory_space<vmem>>, vector<1x1x32xf32>
    %203 = vector.shape_cast %202 : vector<1x1x32xf32> to vector<1x32xf32>
    %cst_128 = arith.constant dense<0.000000e+00> : vector<16xf32>
    %204 = vector.multi_reduction <add>, %199, %cst_128 [1] : vector<16x32xf32> to vector<16xf32>
    %205 = vector.shape_cast %204 : vector<16xf32> to vector<16x1xf32>
    %cst_129 = arith.constant 3.200000e+01 : f32
    %206 = vector.broadcast %cst_129 : f32 to vector<16x1xf32>
    %207 = arith.divf %205, %206 : vector<16x1xf32>
    %208 = vector.broadcast %207 : vector<16x1xf32> to vector<16x32xf32>
    %209 = arith.subf %199, %208 : vector<16x32xf32>
    %210 = arith.mulf %209, %209 : vector<16x32xf32>
    %cst_130 = arith.constant dense<0.000000e+00> : vector<16xf32>
    %211 = vector.multi_reduction <add>, %210, %cst_130 [1] : vector<16x32xf32> to vector<16xf32>
    %212 = vector.shape_cast %211 : vector<16xf32> to vector<16x1xf32>
    %cst_131 = arith.constant 3.200000e+01 : f32
    %213 = vector.broadcast %cst_131 : f32 to vector<16x1xf32>
    %214 = arith.divf %212, %213 : vector<16x1xf32>
    %215 = vector.broadcast %207 : vector<16x1xf32> to vector<16x32xf32>
    %216 = arith.subf %199, %215 : vector<16x32xf32>
    %cst_132 = arith.constant 9.99999974E-6 : f32
    %217 = vector.broadcast %cst_132 : f32 to vector<16x1xf32>
    %218 = arith.addf %214, %217 : vector<16x1xf32>
    %219 = math.rsqrt %218 : vector<16x1xf32>
    %220 = vector.broadcast %219 : vector<16x1xf32> to vector<16x32xf32>
    %221 = arith.mulf %216, %220 : vector<16x32xf32>
    %222 = vector.broadcast %201 : vector<1x32xf32> to vector<16x32xf32>
    %223 = arith.mulf %221, %222 : vector<16x32xf32>
    %224 = vector.broadcast %203 : vector<1x32xf32> to vector<16x32xf32>
    %225 = arith.addf %223, %224 : vector<16x32xf32>
    %226 = vector.broadcast %0 : vector<16x1xf32> to vector<16x32xf32>
    %227 = arith.mulf %225, %226 : vector<16x32xf32>
    %c1_133 = arith.constant 1 : index
    %c0_134 = arith.constant 0 : index
    %c0_135 = arith.constant 0 : index
    %228 = vector.load %arg11[%c1_133, %c0_134, %c0_135] : memref<2x32x96xf32, #tpu.memory_space<vmem>>, vector<1x32x96xf32>
    %229 = vector.shape_cast %228 : vector<1x32x96xf32> to vector<32x96xf32>
    %cst_136 = arith.constant dense<0.000000e+00> : vector<16x96xf32>
    %230 = tpu.matmul %227, %229, %cst_136 {dimension_numbers = #tpu.dot_dimension_numbers<[1], [0], [0], [1], [0, 0, 1, 1], [], []>} : vector<16x32xf32>, vector<32x96xf32>, vector<16x96xf32> -> vector<16x96xf32>
    %c1_137 = arith.constant 1 : index
    %c0_138 = arith.constant 0 : index
    %c0_139 = arith.constant 0 : index
    %231 = vector.load %arg12[%c1_137, %c0_138, %c0_139] : memref<2x1x96xf32, #tpu.memory_space<vmem>>, vector<1x1x96xf32>
    %232 = vector.shape_cast %231 : vector<1x1x96xf32> to vector<1x96xf32>
    %233 = vector.broadcast %232 : vector<1x96xf32> to vector<16x96xf32>
    %234 = arith.addf %230, %233 : vector<16x96xf32>
    %235 = vector.extract_strided_slice %234 {offsets = [0, 0], sizes = [16, 16], strides = [1, 1]} : vector<16x96xf32> to vector<16x16xf32>
    %236 = vector.extract_strided_slice %234 {offsets = [0, 32], sizes = [16, 16], strides = [1, 1]} : vector<16x96xf32> to vector<16x16xf32>
    %237 = vector.extract_strided_slice %234 {offsets = [0, 64], sizes = [16, 16], strides = [1, 1]} : vector<16x96xf32> to vector<16x16xf32>
    %cst_140 = arith.constant dense<0.000000e+00> : vector<16x16xf32>
    %238 = tpu.matmul %235, %236, %cst_140 {dimension_numbers = #tpu.dot_dimension_numbers<[1], [1], [0], [0], [0, 0, 1, 0], [], []>} : vector<16x16xf32>, vector<16x16xf32>, vector<16x16xf32> -> vector<16x16xf32>
    %cst_141 = arith.constant 2.500000e-01 : f32
    %239 = vector.broadcast %cst_141 : f32 to vector<16x16xf32>
    %240 = arith.mulf %238, %239 : vector<16x16xf32>
    %241 = arith.addf %240, %2 : vector<16x16xf32>
    %cst_142 = arith.constant dense<0xFF800000> : vector<16xf32>
    %242 = vector.multi_reduction <maximumf>, %241, %cst_142 [1] : vector<16x16xf32> to vector<16xf32>
    %243 = vector.shape_cast %242 : vector<16xf32> to vector<16x1xf32>
    %244 = vector.broadcast %243 : vector<16x1xf32> to vector<16x16xf32>
    %245 = arith.subf %241, %244 : vector<16x16xf32>
    %246 = math.exp %245 : vector<16x16xf32>
    %cst_143 = arith.constant dense<0.000000e+00> : vector<16xf32>
    %247 = vector.multi_reduction <add>, %246, %cst_143 [1] : vector<16x16xf32> to vector<16xf32>
    %248 = vector.shape_cast %247 : vector<16xf32> to vector<16x1xf32>
    %249 = tpu.reciprocal %248 {approx = true} : vector<16x1xf32> -> vector<16x1xf32>
    %250 = vector.broadcast %249 : vector<16x1xf32> to vector<16x16xf32>
    %251 = arith.mulf %246, %250 : vector<16x16xf32>
    %cst_144 = arith.constant dense<0.000000e+00> : vector<16x16xf32>
    %252 = tpu.matmul %251, %237, %cst_144 {dimension_numbers = #tpu.dot_dimension_numbers<[1], [0], [0], [1], [0, 0, 1, 1], [], []>} : vector<16x16xf32>, vector<16x16xf32>, vector<16x16xf32> -> vector<16x16xf32>
    %253 = vector.extract_strided_slice %234 {offsets = [0, 16], sizes = [16, 16], strides = [1, 1]} : vector<16x96xf32> to vector<16x16xf32>
    %254 = vector.extract_strided_slice %234 {offsets = [0, 48], sizes = [16, 16], strides = [1, 1]} : vector<16x96xf32> to vector<16x16xf32>
    %255 = vector.extract_strided_slice %234 {offsets = [0, 80], sizes = [16, 16], strides = [1, 1]} : vector<16x96xf32> to vector<16x16xf32>
    %cst_145 = arith.constant dense<0.000000e+00> : vector<16x16xf32>
    %256 = tpu.matmul %253, %254, %cst_145 {dimension_numbers = #tpu.dot_dimension_numbers<[1], [1], [0], [0], [0, 0, 1, 0], [], []>} : vector<16x16xf32>, vector<16x16xf32>, vector<16x16xf32> -> vector<16x16xf32>
    %cst_146 = arith.constant 2.500000e-01 : f32
    %257 = vector.broadcast %cst_146 : f32 to vector<16x16xf32>
    %258 = arith.mulf %256, %257 : vector<16x16xf32>
    %259 = arith.addf %258, %2 : vector<16x16xf32>
    %cst_147 = arith.constant dense<0xFF800000> : vector<16xf32>
    %260 = vector.multi_reduction <maximumf>, %259, %cst_147 [1] : vector<16x16xf32> to vector<16xf32>
    %261 = vector.shape_cast %260 : vector<16xf32> to vector<16x1xf32>
    %262 = vector.broadcast %261 : vector<16x1xf32> to vector<16x16xf32>
    %263 = arith.subf %259, %262 : vector<16x16xf32>
    %264 = math.exp %263 : vector<16x16xf32>
    %cst_148 = arith.constant dense<0.000000e+00> : vector<16xf32>
    %265 = vector.multi_reduction <add>, %264, %cst_148 [1] : vector<16x16xf32> to vector<16xf32>
    %266 = vector.shape_cast %265 : vector<16xf32> to vector<16x1xf32>
    %267 = tpu.reciprocal %266 {approx = true} : vector<16x1xf32> -> vector<16x1xf32>
    %268 = vector.broadcast %267 : vector<16x1xf32> to vector<16x16xf32>
    %269 = arith.mulf %264, %268 : vector<16x16xf32>
    %cst_149 = arith.constant dense<0.000000e+00> : vector<16x16xf32>
    %270 = tpu.matmul %269, %255, %cst_149 {dimension_numbers = #tpu.dot_dimension_numbers<[1], [0], [0], [1], [0, 0, 1, 1], [], []>} : vector<16x16xf32>, vector<16x16xf32>, vector<16x16xf32> -> vector<16x16xf32>
    %271 = tpu.concatenate %252, %270 in 1 : vector<16x16xf32>, vector<16x16xf32> -> vector<16x32xf32>
    %c1_150 = arith.constant 1 : index
    %c0_151 = arith.constant 0 : index
    %c0_152 = arith.constant 0 : index
    %272 = vector.load %arg13[%c1_150, %c0_151, %c0_152] : memref<2x32x32xf32, #tpu.memory_space<vmem>>, vector<1x32x32xf32>
    %273 = vector.shape_cast %272 : vector<1x32x32xf32> to vector<32x32xf32>
    %cst_153 = arith.constant dense<0.000000e+00> : vector<16x32xf32>
    %274 = tpu.matmul %271, %273, %cst_153 {dimension_numbers = #tpu.dot_dimension_numbers<[1], [0], [0], [1], [0, 0, 1, 1], [], []>} : vector<16x32xf32>, vector<32x32xf32>, vector<16x32xf32> -> vector<16x32xf32>
    %c1_154 = arith.constant 1 : index
    %c0_155 = arith.constant 0 : index
    %c0_156 = arith.constant 0 : index
    %275 = vector.load %arg14[%c1_154, %c0_155, %c0_156] : memref<2x1x32xf32, #tpu.memory_space<vmem>>, vector<1x1x32xf32>
    %276 = vector.shape_cast %275 : vector<1x1x32xf32> to vector<1x32xf32>
    %277 = vector.broadcast %276 : vector<1x32xf32> to vector<16x32xf32>
    %278 = arith.addf %274, %277 : vector<16x32xf32>
    %279 = arith.addf %278, %227 : vector<16x32xf32>
    %c1_157 = arith.constant 1 : index
    %c0_158 = arith.constant 0 : index
    %c0_159 = arith.constant 0 : index
    %280 = vector.load %arg15[%c1_157, %c0_158, %c0_159] : memref<2x1x32xf32, #tpu.memory_space<vmem>>, vector<1x1x32xf32>
    %281 = vector.shape_cast %280 : vector<1x1x32xf32> to vector<1x32xf32>
    %c1_160 = arith.constant 1 : index
    %c0_161 = arith.constant 0 : index
    %c0_162 = arith.constant 0 : index
    %282 = vector.load %arg16[%c1_160, %c0_161, %c0_162] : memref<2x1x32xf32, #tpu.memory_space<vmem>>, vector<1x1x32xf32>
    %283 = vector.shape_cast %282 : vector<1x1x32xf32> to vector<1x32xf32>
    %cst_163 = arith.constant dense<0.000000e+00> : vector<16xf32>
    %284 = vector.multi_reduction <add>, %279, %cst_163 [1] : vector<16x32xf32> to vector<16xf32>
    %285 = vector.shape_cast %284 : vector<16xf32> to vector<16x1xf32>
    %cst_164 = arith.constant 3.200000e+01 : f32
    %286 = vector.broadcast %cst_164 : f32 to vector<16x1xf32>
    %287 = arith.divf %285, %286 : vector<16x1xf32>
    %288 = vector.broadcast %287 : vector<16x1xf32> to vector<16x32xf32>
    %289 = arith.subf %279, %288 : vector<16x32xf32>
    %290 = arith.mulf %289, %289 : vector<16x32xf32>
    %cst_165 = arith.constant dense<0.000000e+00> : vector<16xf32>
    %291 = vector.multi_reduction <add>, %290, %cst_165 [1] : vector<16x32xf32> to vector<16xf32>
    %292 = vector.shape_cast %291 : vector<16xf32> to vector<16x1xf32>
    %cst_166 = arith.constant 3.200000e+01 : f32
    %293 = vector.broadcast %cst_166 : f32 to vector<16x1xf32>
    %294 = arith.divf %292, %293 : vector<16x1xf32>
    %295 = vector.broadcast %287 : vector<16x1xf32> to vector<16x32xf32>
    %296 = arith.subf %279, %295 : vector<16x32xf32>
    %cst_167 = arith.constant 9.99999974E-6 : f32
    %297 = vector.broadcast %cst_167 : f32 to vector<16x1xf32>
    %298 = arith.addf %294, %297 : vector<16x1xf32>
    %299 = math.rsqrt %298 : vector<16x1xf32>
    %300 = vector.broadcast %299 : vector<16x1xf32> to vector<16x32xf32>
    %301 = arith.mulf %296, %300 : vector<16x32xf32>
    %302 = vector.broadcast %281 : vector<1x32xf32> to vector<16x32xf32>
    %303 = arith.mulf %301, %302 : vector<16x32xf32>
    %304 = vector.broadcast %283 : vector<1x32xf32> to vector<16x32xf32>
    %305 = arith.addf %303, %304 : vector<16x32xf32>
    %306 = vector.broadcast %0 : vector<16x1xf32> to vector<16x32xf32>
    %307 = arith.mulf %305, %306 : vector<16x32xf32>
    %cst_168 = arith.constant 0.000000e+00 : f32
    %308 = vector.broadcast %cst_168 : f32 to vector<1x32xf32>
    %309 = vector.extract_strided_slice %307 {offsets = [0, 0], sizes = [15, 32], strides = [1, 1]} : vector<16x32xf32> to vector<15x32xf32>
    %310 = tpu.concatenate %308, %309 in 0 : vector<1x32xf32>, vector<15x32xf32> -> vector<16x32xf32>
    %311 = vector.broadcast %12 : vector<16x1xf32> to vector<16x32xf32>
    %312 = arith.mulf %310, %311 : vector<16x32xf32>
    %c3_169 = arith.constant 3 : index
    %c0_170 = arith.constant 0 : index
    %c0_171 = arith.constant 0 : index
    %313 = vector.load %arg17[%c3_169, %c0_170, %c0_171] : memref<6x32x128xf32, #tpu.memory_space<vmem>>, vector<1x32x128xf32>
    %314 = vector.shape_cast %313 : vector<1x32x128xf32> to vector<32x128xf32>
    %cst_172 = arith.constant dense<0.000000e+00> : vector<16x128xf32>
    %315 = tpu.matmul %312, %314, %cst_172 {dimension_numbers = #tpu.dot_dimension_numbers<[1], [0], [0], [1], [0, 0, 1, 1], [], []>} : vector<16x32xf32>, vector<32x128xf32>, vector<16x128xf32> -> vector<16x128xf32>
    %c4_173 = arith.constant 4 : index
    %c0_174 = arith.constant 0 : index
    %c0_175 = arith.constant 0 : index
    %316 = vector.load %arg17[%c4_173, %c0_174, %c0_175] : memref<6x32x128xf32, #tpu.memory_space<vmem>>, vector<1x32x128xf32>
    %317 = vector.shape_cast %316 : vector<1x32x128xf32> to vector<32x128xf32>
    %cst_176 = arith.constant dense<0.000000e+00> : vector<16x128xf32>
    %318 = tpu.matmul %307, %317, %cst_176 {dimension_numbers = #tpu.dot_dimension_numbers<[1], [0], [0], [1], [0, 0, 1, 1], [], []>} : vector<16x32xf32>, vector<32x128xf32>, vector<16x128xf32> -> vector<16x128xf32>
    %319 = arith.addf %315, %318 : vector<16x128xf32>
    %cst_177 = arith.constant 0.000000e+00 : f32
    %320 = vector.broadcast %cst_177 : f32 to vector<1x32xf32>
    %321 = vector.extract_strided_slice %307 {offsets = [1, 0], sizes = [15, 32], strides = [1, 1]} : vector<16x32xf32> to vector<15x32xf32>
    %322 = tpu.concatenate %321, %320 in 0 : vector<15x32xf32>, vector<1x32xf32> -> vector<16x32xf32>
    %323 = vector.broadcast %14 : vector<16x1xf32> to vector<16x32xf32>
    %324 = arith.mulf %322, %323 : vector<16x32xf32>
    %c5 = arith.constant 5 : index
    %c0_178 = arith.constant 0 : index
    %c0_179 = arith.constant 0 : index
    %325 = vector.load %arg17[%c5, %c0_178, %c0_179] : memref<6x32x128xf32, #tpu.memory_space<vmem>>, vector<1x32x128xf32>
    %326 = vector.shape_cast %325 : vector<1x32x128xf32> to vector<32x128xf32>
    %cst_180 = arith.constant dense<0.000000e+00> : vector<16x128xf32>
    %327 = tpu.matmul %324, %326, %cst_180 {dimension_numbers = #tpu.dot_dimension_numbers<[1], [0], [0], [1], [0, 0, 1, 1], [], []>} : vector<16x32xf32>, vector<32x128xf32>, vector<16x128xf32> -> vector<16x128xf32>
    %328 = arith.addf %319, %327 : vector<16x128xf32>
    %c1_181 = arith.constant 1 : index
    %c0_182 = arith.constant 0 : index
    %c0_183 = arith.constant 0 : index
    %329 = vector.load %arg18[%c1_181, %c0_182, %c0_183] : memref<2x1x128xf32, #tpu.memory_space<vmem>>, vector<1x1x128xf32>
    %330 = vector.shape_cast %329 : vector<1x1x128xf32> to vector<1x128xf32>
    %331 = vector.broadcast %330 : vector<1x128xf32> to vector<16x128xf32>
    %332 = arith.addf %328, %331 : vector<16x128xf32>
    %cst_184 = arith.constant 0.000000e+00 : f32
    %333 = vector.broadcast %cst_184 : f32 to vector<16x128xf32>
    %334 = arith.maximumf %332, %333 : vector<16x128xf32>
    %cst_185 = arith.constant 0.000000e+00 : f32
    %335 = vector.broadcast %cst_185 : f32 to vector<1x128xf32>
    %336 = vector.extract_strided_slice %334 {offsets = [0, 0], sizes = [15, 128], strides = [1, 1]} : vector<16x128xf32> to vector<15x128xf32>
    %337 = tpu.concatenate %335, %336 in 0 : vector<1x128xf32>, vector<15x128xf32> -> vector<16x128xf32>
    %338 = vector.broadcast %12 : vector<16x1xf32> to vector<16x128xf32>
    %339 = arith.mulf %337, %338 : vector<16x128xf32>
    %c3_186 = arith.constant 3 : index
    %c0_187 = arith.constant 0 : index
    %c0_188 = arith.constant 0 : index
    %340 = vector.load %arg19[%c3_186, %c0_187, %c0_188] : memref<6x128x32xf32, #tpu.memory_space<vmem>>, vector<1x128x32xf32>
    %341 = vector.shape_cast %340 : vector<1x128x32xf32> to vector<128x32xf32>
    %cst_189 = arith.constant dense<0.000000e+00> : vector<16x32xf32>
    %342 = tpu.matmul %339, %341, %cst_189 {dimension_numbers = #tpu.dot_dimension_numbers<[1], [0], [0], [1], [0, 0, 1, 1], [], []>} : vector<16x128xf32>, vector<128x32xf32>, vector<16x32xf32> -> vector<16x32xf32>
    %c4_190 = arith.constant 4 : index
    %c0_191 = arith.constant 0 : index
    %c0_192 = arith.constant 0 : index
    %343 = vector.load %arg19[%c4_190, %c0_191, %c0_192] : memref<6x128x32xf32, #tpu.memory_space<vmem>>, vector<1x128x32xf32>
    %344 = vector.shape_cast %343 : vector<1x128x32xf32> to vector<128x32xf32>
    %cst_193 = arith.constant dense<0.000000e+00> : vector<16x32xf32>
    %345 = tpu.matmul %334, %344, %cst_193 {dimension_numbers = #tpu.dot_dimension_numbers<[1], [0], [0], [1], [0, 0, 1, 1], [], []>} : vector<16x128xf32>, vector<128x32xf32>, vector<16x32xf32> -> vector<16x32xf32>
    %346 = arith.addf %342, %345 : vector<16x32xf32>
    %cst_194 = arith.constant 0.000000e+00 : f32
    %347 = vector.broadcast %cst_194 : f32 to vector<1x128xf32>
    %348 = vector.extract_strided_slice %334 {offsets = [1, 0], sizes = [15, 128], strides = [1, 1]} : vector<16x128xf32> to vector<15x128xf32>
    %349 = tpu.concatenate %348, %347 in 0 : vector<15x128xf32>, vector<1x128xf32> -> vector<16x128xf32>
    %350 = vector.broadcast %14 : vector<16x1xf32> to vector<16x128xf32>
    %351 = arith.mulf %349, %350 : vector<16x128xf32>
    %c5_195 = arith.constant 5 : index
    %c0_196 = arith.constant 0 : index
    %c0_197 = arith.constant 0 : index
    %352 = vector.load %arg19[%c5_195, %c0_196, %c0_197] : memref<6x128x32xf32, #tpu.memory_space<vmem>>, vector<1x128x32xf32>
    %353 = vector.shape_cast %352 : vector<1x128x32xf32> to vector<128x32xf32>
    %cst_198 = arith.constant dense<0.000000e+00> : vector<16x32xf32>
    %354 = tpu.matmul %351, %353, %cst_198 {dimension_numbers = #tpu.dot_dimension_numbers<[1], [0], [0], [1], [0, 0, 1, 1], [], []>} : vector<16x128xf32>, vector<128x32xf32>, vector<16x32xf32> -> vector<16x32xf32>
    %355 = arith.addf %346, %354 : vector<16x32xf32>
    %c1_199 = arith.constant 1 : index
    %c0_200 = arith.constant 0 : index
    %c0_201 = arith.constant 0 : index
    %356 = vector.load %arg20[%c1_199, %c0_200, %c0_201] : memref<2x1x32xf32, #tpu.memory_space<vmem>>, vector<1x1x32xf32>
    %357 = vector.shape_cast %356 : vector<1x1x32xf32> to vector<1x32xf32>
    %358 = vector.broadcast %357 : vector<1x32xf32> to vector<16x32xf32>
    %359 = arith.addf %355, %358 : vector<16x32xf32>
    %360 = arith.addf %359, %307 : vector<16x32xf32>
    %c1_202 = arith.constant 1 : index
    %c0_203 = arith.constant 0 : index
    %c0_204 = arith.constant 0 : index
    %361 = vector.load %arg21[%c1_202, %c0_203, %c0_204] : memref<2x1x32xf32, #tpu.memory_space<vmem>>, vector<1x1x32xf32>
    %362 = vector.shape_cast %361 : vector<1x1x32xf32> to vector<1x32xf32>
    %c1_205 = arith.constant 1 : index
    %c0_206 = arith.constant 0 : index
    %c0_207 = arith.constant 0 : index
    %363 = vector.load %arg22[%c1_205, %c0_206, %c0_207] : memref<2x1x32xf32, #tpu.memory_space<vmem>>, vector<1x1x32xf32>
    %364 = vector.shape_cast %363 : vector<1x1x32xf32> to vector<1x32xf32>
    %cst_208 = arith.constant dense<0.000000e+00> : vector<16xf32>
    %365 = vector.multi_reduction <add>, %360, %cst_208 [1] : vector<16x32xf32> to vector<16xf32>
    %366 = vector.shape_cast %365 : vector<16xf32> to vector<16x1xf32>
    %cst_209 = arith.constant 3.200000e+01 : f32
    %367 = vector.broadcast %cst_209 : f32 to vector<16x1xf32>
    %368 = arith.divf %366, %367 : vector<16x1xf32>
    %369 = vector.broadcast %368 : vector<16x1xf32> to vector<16x32xf32>
    %370 = arith.subf %360, %369 : vector<16x32xf32>
    %371 = arith.mulf %370, %370 : vector<16x32xf32>
    %cst_210 = arith.constant dense<0.000000e+00> : vector<16xf32>
    %372 = vector.multi_reduction <add>, %371, %cst_210 [1] : vector<16x32xf32> to vector<16xf32>
    %373 = vector.shape_cast %372 : vector<16xf32> to vector<16x1xf32>
    %cst_211 = arith.constant 3.200000e+01 : f32
    %374 = vector.broadcast %cst_211 : f32 to vector<16x1xf32>
    %375 = arith.divf %373, %374 : vector<16x1xf32>
    %376 = vector.broadcast %368 : vector<16x1xf32> to vector<16x32xf32>
    %377 = arith.subf %360, %376 : vector<16x32xf32>
    %cst_212 = arith.constant 9.99999974E-6 : f32
    %378 = vector.broadcast %cst_212 : f32 to vector<16x1xf32>
    %379 = arith.addf %375, %378 : vector<16x1xf32>
    %380 = math.rsqrt %379 : vector<16x1xf32>
    %381 = vector.broadcast %380 : vector<16x1xf32> to vector<16x32xf32>
    %382 = arith.mulf %377, %381 : vector<16x32xf32>
    %383 = vector.broadcast %362 : vector<1x32xf32> to vector<16x32xf32>
    %384 = arith.mulf %382, %383 : vector<16x32xf32>
    %385 = vector.broadcast %364 : vector<1x32xf32> to vector<16x32xf32>
    %386 = arith.addf %384, %385 : vector<16x32xf32>
    %387 = vector.broadcast %0 : vector<16x1xf32> to vector<16x32xf32>
    %388 = arith.mulf %386, %387 : vector<16x32xf32>
    %c0_213 = arith.constant 0 : index
    %c0_214 = arith.constant 0 : index
    %389 = vector.load %arg23[%c0_213, %c0_214] : memref<32x128xf32, #tpu.memory_space<vmem>>, vector<32x128xf32>
    %cst_215 = arith.constant dense<0.000000e+00> : vector<16x128xf32>
    %390 = tpu.matmul %388, %389, %cst_215 {dimension_numbers = #tpu.dot_dimension_numbers<[1], [0], [0], [1], [0, 0, 1, 1], [], []>} : vector<16x32xf32>, vector<32x128xf32>, vector<16x128xf32> -> vector<16x128xf32>
    %391 = vector.broadcast %0 : vector<16x1xf32> to vector<16x128xf32>
    %392 = arith.mulf %390, %391 : vector<16x128xf32>
    %c0_216 = arith.constant 0 : index
    %c0_217 = arith.constant 0 : index
    %393 = vector.load %arg24[%c0_216, %c0_217] : memref<16x128xf32, #tpu.memory_space<vmem>>, vector<16x128xf32>
    tpu.vector_store %arg24[%c0_216, %c0_217], %392 {strides = array<i32>} : memref<16x128xf32, #tpu.memory_space<vmem>>, vector<16x128xf32>,
    return
  }
  func.func @transform_0(%arg0: i32) -> (i32, i32) {
    %c0_i32 = arith.constant 0 : i32
    %c0_i32_0 = arith.constant 0 : i32
    return %arg0, %c0_i32 : i32, i32
  }
  func.func @transform_1(%arg0: i32) -> (i32, i32) {
    %c0_i32 = arith.constant 0 : i32
    %c0_i32_0 = arith.constant 0 : i32
    return %arg0, %c0_i32 : i32, i32
  }
  func.func @transform_2(%arg0: i32) -> (i32, i32) {
    %c0_i32 = arith.constant 0 : i32
    %c0_i32_0 = arith.constant 0 : i32
    return %arg0, %c0_i32 : i32, i32
  }
  func.func @transform_3(%arg0: i32) -> (i32, i32, i32) {
    %c0_i32 = arith.constant 0 : i32
    %c0_i32_0 = arith.constant 0 : i32
    %c0_i32_1 = arith.constant 0 : i32
    return %arg0, %c0_i32, %c0_i32_0 : i32, i32, i32
  }
  func.func @transform_4(%arg0: i32) -> (i32, i32, i32) {
    %c0_i32 = arith.constant 0 : i32
    %c0_i32_0 = arith.constant 0 : i32
    %c0_i32_1 = arith.constant 0 : i32
    %c0_i32_2 = arith.constant 0 : i32
    return %c0_i32, %c0_i32_0, %c0_i32_1 : i32, i32, i32
  }
  func.func @transform_5(%arg0: i32) -> (i32, i32, i32) {
    %c0_i32 = arith.constant 0 : i32
    %c0_i32_0 = arith.constant 0 : i32
    %c0_i32_1 = arith.constant 0 : i32
    %c0_i32_2 = arith.constant 0 : i32
    return %c0_i32, %c0_i32_0, %c0_i32_1 : i32, i32, i32
  }
  func.func @transform_6(%arg0: i32) -> (i32, i32, i32) {
    %c0_i32 = arith.constant 0 : i32
    %c0_i32_0 = arith.constant 0 : i32
    %c0_i32_1 = arith.constant 0 : i32
    %c0_i32_2 = arith.constant 0 : i32
    return %c0_i32, %c0_i32_0, %c0_i32_1 : i32, i32, i32
  }
  func.func @transform_7(%arg0: i32) -> (i32, i32) {
    %c0_i32 = arith.constant 0 : i32
    %c0_i32_0 = arith.constant 0 : i32
    %c0_i32_1 = arith.constant 0 : i32
    return %c0_i32, %c0_i32_0 : i32, i32
  }
  func.func @transform_8(%arg0: i32) -> (i32, i32) {
    %c0_i32 = arith.constant 0 : i32
    %c0_i32_0 = arith.constant 0 : i32
    %c0_i32_1 = arith.constant 0 : i32
    return %c0_i32, %c0_i32_0 : i32, i32
  }
  func.func @transform_9(%arg0: i32) -> (i32, i32) {
    %c0_i32 = arith.constant 0 : i32
    %c0_i32_0 = arith.constant 0 : i32
    %c0_i32_1 = arith.constant 0 : i32
    return %c0_i32, %c0_i32_0 : i32, i32
  }
  func.func @transform_10(%arg0: i32) -> (i32, i32, i32) {
    %c0_i32 = arith.constant 0 : i32
    %c0_i32_0 = arith.constant 0 : i32
    %c0_i32_1 = arith.constant 0 : i32
    %c0_i32_2 = arith.constant 0 : i32
    return %c0_i32, %c0_i32_0, %c0_i32_1 : i32, i32, i32
  }
  func.func @transform_11(%arg0: i32) -> (i32, i32, i32) {
    %c0_i32 = arith.constant 0 : i32
    %c0_i32_0 = arith.constant 0 : i32
    %c0_i32_1 = arith.constant 0 : i32
    %c0_i32_2 = arith.constant 0 : i32
    return %c0_i32, %c0_i32_0, %c0_i32_1 : i32, i32, i32
  }
  func.func @transform_12(%arg0: i32) -> (i32, i32, i32) {
    %c0_i32 = arith.constant 0 : i32
    %c0_i32_0 = arith.constant 0 : i32
    %c0_i32_1 = arith.constant 0 : i32
    %c0_i32_2 = arith.constant 0 : i32
    return %c0_i32, %c0_i32_0, %c0_i32_1 : i32, i32, i32
  }
  func.func @transform_13(%arg0: i32) -> (i32, i32, i32) {
    %c0_i32 = arith.constant 0 : i32
    %c0_i32_0 = arith.constant 0 : i32
    %c0_i32_1 = arith.constant 0 : i32
    %c0_i32_2 = arith.constant 0 : i32
    return %c0_i32, %c0_i32_0, %c0_i32_1 : i32, i32, i32
  }
  func.func @transform_14(%arg0: i32) -> (i32, i32, i32) {
    %c0_i32 = arith.constant 0 : i32
    %c0_i32_0 = arith.constant 0 : i32
    %c0_i32_1 = arith.constant 0 : i32
    %c0_i32_2 = arith.constant 0 : i32
    return %c0_i32, %c0_i32_0, %c0_i32_1 : i32, i32, i32
  }
  func.func @transform_15(%arg0: i32) -> (i32, i32, i32) {
    %c0_i32 = arith.constant 0 : i32
    %c0_i32_0 = arith.constant 0 : i32
    %c0_i32_1 = arith.constant 0 : i32
    %c0_i32_2 = arith.constant 0 : i32
    return %c0_i32, %c0_i32_0, %c0_i32_1 : i32, i32, i32
  }
  func.func @transform_16(%arg0: i32) -> (i32, i32, i32) {
    %c0_i32 = arith.constant 0 : i32
    %c0_i32_0 = arith.constant 0 : i32
    %c0_i32_1 = arith.constant 0 : i32
    %c0_i32_2 = arith.constant 0 : i32
    return %c0_i32, %c0_i32_0, %c0_i32_1 : i32, i32, i32
  }
  func.func @transform_17(%arg0: i32) -> (i32, i32, i32) {
    %c0_i32 = arith.constant 0 : i32
    %c0_i32_0 = arith.constant 0 : i32
    %c0_i32_1 = arith.constant 0 : i32
    %c0_i32_2 = arith.constant 0 : i32
    return %c0_i32, %c0_i32_0, %c0_i32_1 : i32, i32, i32
  }
  func.func @transform_18(%arg0: i32) -> (i32, i32, i32) {
    %c0_i32 = arith.constant 0 : i32
    %c0_i32_0 = arith.constant 0 : i32
    %c0_i32_1 = arith.constant 0 : i32
    %c0_i32_2 = arith.constant 0 : i32
    return %c0_i32, %c0_i32_0, %c0_i32_1 : i32, i32, i32
  }
  func.func @transform_19(%arg0: i32) -> (i32, i32, i32) {
    %c0_i32 = arith.constant 0 : i32
    %c0_i32_0 = arith.constant 0 : i32
    %c0_i32_1 = arith.constant 0 : i32
    %c0_i32_2 = arith.constant 0 : i32
    return %c0_i32, %c0_i32_0, %c0_i32_1 : i32, i32, i32
  }
  func.func @transform_20(%arg0: i32) -> (i32, i32, i32) {
    %c0_i32 = arith.constant 0 : i32
    %c0_i32_0 = arith.constant 0 : i32
    %c0_i32_1 = arith.constant 0 : i32
    %c0_i32_2 = arith.constant 0 : i32
    return %c0_i32, %c0_i32_0, %c0_i32_1 : i32, i32, i32
  }
  func.func @transform_21(%arg0: i32) -> (i32, i32, i32) {
    %c0_i32 = arith.constant 0 : i32
    %c0_i32_0 = arith.constant 0 : i32
    %c0_i32_1 = arith.constant 0 : i32
    %c0_i32_2 = arith.constant 0 : i32
    return %c0_i32, %c0_i32_0, %c0_i32_1 : i32, i32, i32
  }
  func.func @transform_22(%arg0: i32) -> (i32, i32) {
    %c0_i32 = arith.constant 0 : i32
    %c0_i32_0 = arith.constant 0 : i32
    %c0_i32_1 = arith.constant 0 : i32
    return %c0_i32, %c0_i32_0 : i32, i32
  }
  func.func @transform_23(%arg0: i32) -> (i32, i32) {
    %c0_i32 = arith.constant 0 : i32
    %c0_i32_0 = arith.constant 0 : i32
    return %arg0, %c0_i32 : i32, i32
  }
}

</mosaic_0001>

<llo_original>
// kernel: tpu_custom_call.1
$region0: #{tpu_custom_call.1}
  #allocation0 [shape = 'u32[]', space=smem, size = 0x4, offset = 0x4, fixed_abs, tag = 'smem constant byte address 0x4 - core index']
  #allocation1 [shape = 'u32[144,128]{1,0:T(1,128)}', space=vmem, size = 0x12000, scoped, tag = 'internal scratch']
  %s0 = inlined_call_operand.vmem [shape: f32[32,32], index: 0, kind: input, shape index: {}]
  %s1 = inlined_call_operand.vmem [shape: f32[32,16], index: 1, kind: input, shape index: {}]
  %s2 = inlined_call_operand.vmem [shape: f32[32,1], index: 2, kind: input, shape index: {}]
  %s3 = inlined_call_operand.vmem [shape: f32[2,16,16], index: 3, kind: input, shape index: {}]
  %s4 = inlined_call_operand.vmem [shape: f32[5,16,1], index: 4, kind: input, shape index: {}]
  %s5 = inlined_call_operand.vmem [shape: f32[3,16,1], index: 5, kind: input, shape index: {}]
  %s6 = inlined_call_operand.vmem [shape: f32[5,32,32], index: 6, kind: input, shape index: {}]
  %s7 = inlined_call_operand.vmem [shape: f32[1,32], index: 7, kind: input, shape index: {}]
  %s8 = inlined_call_operand.vmem [shape: f32[16,32], index: 8, kind: input, shape index: {}]
  %s9 = inlined_call_operand.vmem [shape: f32[1,32], index: 9, kind: input, shape index: {}]
  %s10 = inlined_call_operand.vmem [shape: f32[2,32,96], index: 10, kind: input, shape index: {}]
  %s11 = inlined_call_operand.vmem [shape: f32[2,1,96], index: 11, kind: input, shape index: {}]
  %s12 = inlined_call_operand.vmem [shape: f32[2,32,32], index: 12, kind: input, shape index: {}]
  %s13 = inlined_call_operand.vmem [shape: f32[2,1,32], index: 13, kind: input, shape index: {}]
  %s14 = inlined_call_operand.vmem [shape: f32[2,1,32], index: 14, kind: input, shape index: {}]
  %s15 = inlined_call_operand.vmem [shape: f32[2,1,32], index: 15, kind: input, shape index: {}]
  %s16 = inlined_call_operand.vmem [shape: f32[6,32,128], index: 16, kind: input, shape index: {}]
  %s17 = inlined_call_operand.vmem [shape: f32[2,1,128], index: 17, kind: input, shape index: {}]
  %s18 = inlined_call_operand.vmem [shape: f32[6,128,32], index: 18, kind: input, shape index: {}]
  %s19 = inlined_call_operand.vmem [shape: f32[2,1,32], index: 19, kind: input, shape index: {}]
  %s20 = inlined_call_operand.vmem [shape: f32[2,1,32], index: 20, kind: input, shape index: {}]
  %s21 = inlined_call_operand.vmem [shape: f32[2,1,32], index: 21, kind: input, shape index: {}]
  %s22 = inlined_call_operand.vmem [shape: f32[32,128], index: 22, kind: input, shape index: {}]
  %s23 = inlined_call_operand.hbm [shape: f32[32,128], index: 23, kind: output, shape index: {}]
  %s24 = sld [smem:[#allocation0]]
  $region125: #{tpu_custom_call.1} parent=0
    _
  %s26 = ssub.s32 1, %s24
  %s27 = scalar_select 0, %s26, %s24
  $region1: #{tpu_custom_call.1} parent=0
    #allocation2 [shape = 'u8[16384]{0}', space=vmem, size = 0x4000, scoped, tag = 'output window, operand 0']
    #allocation3 [shape = 's32[2]{0}', space=sflag, size = 0x8, scoped, tag = 'scoped memory for tpu_custom_call.1']
    %28 = vsyncpa [#allocation3], 0
    %s29 = scalar_lea.sflag [#allocation3], 1
    %30 = vsyncpa %s29, 0
    loop: start=0, step=1, limit=4
    $region2: #{tpu_custom_call.1} parent=1 // loop_pre_header
      _
    $region3: #{tpu_custom_call.1} parent=1 // loop_header
      %s32 = sphi 0, %s36
      %p33 = scmp.ge.s32.totalorder %s32, 4
      %s42 = sphi 0, %s44
      %s45 = sphi 0, %s42
      %s46 = sphi 0, %s45
      %s62 = sphi 0, %s46
      %s68 = sphi 0, %s70
      %s71 = sphi 0, %s68
      %s72 = sphi 0, %s71
      %s88 = sphi 0, %s72
      %s94 = sphi 0, %s96
      %s97 = sphi 0, %s94
      %s98 = sphi 0, %s97
      %s114 = sphi 0, %s98
      %s120 = sphi 0, %s122
      %s123 = sphi 0, %s120
      %s124 = sphi 0, %s123
      %s140 = sphi 0, %s124
      %s144 = sphi 0, %s144
      %s146 = sphi 0, %s144
      %s147 = sphi 0, %s146
      %s161 = sphi 0, %s147
      %s165 = sphi 0, %s165
      %s167 = sphi 0, %s165
      %s168 = sphi 0, %s167
      %s182 = sphi 0, %s168
      %s186 = sphi 0, %s186
      %s188 = sphi 0, %s186
      %s189 = sphi 0, %s188
      %s203 = sphi 0, %s189
      %s207 = sphi 0, %s207
      %s209 = sphi 0, %s207
      %s210 = sphi 0, %s209
      %s224 = sphi 0, %s210
      %s228 = sphi 0, %s228
      %s230 = sphi 0, %s228
      %s231 = sphi 0, %s230
      %s245 = sphi 0, %s231
      %s249 = sphi 0, %s249
      %s251 = sphi 0, %s249
      %s252 = sphi 0, %s251
      %s266 = sphi 0, %s252
      %s270 = sphi 0, %s270
      %s272 = sphi 0, %s270
      %s273 = sphi 0, %s272
      %s287 = sphi 0, %s273
      %s291 = sphi 0, %s291
      %s293 = sphi 0, %s291
      %s294 = sphi 0, %s293
      %s308 = sphi 0, %s294
      %s312 = sphi 0, %s312
      %s314 = sphi 0, %s312
      %s315 = sphi 0, %s314
      %s329 = sphi 0, %s315
      %s333 = sphi 0, %s333
      %s335 = sphi 0, %s333
      %s336 = sphi 0, %s335
      %s350 = sphi 0, %s336
      %s354 = sphi 0, %s354
      %s356 = sphi 0, %s354
      %s357 = sphi 0, %s356
      %s371 = sphi 0, %s357
      %s375 = sphi 0, %s375
      %s377 = sphi 0, %s375
      %s378 = sphi 0, %s377
      %s392 = sphi 0, %s378
      %s396 = sphi 0, %s396
      %s398 = sphi 0, %s396
      %s399 = sphi 0, %s398
      %s413 = sphi 0, %s399
      %s417 = sphi 0, %s417
      %s419 = sphi 0, %s417
      %s420 = sphi 0, %s419
      %s434 = sphi 0, %s420
      %s438 = sphi 0, %s438
      %s440 = sphi 0, %s438
      %s441 = sphi 0, %s440
      %s455 = sphi 0, %s441
      %s459 = sphi 0, %s459
      %s461 = sphi 0, %s459
      %s462 = sphi 0, %s461
      %s476 = sphi 0, %s462
      %s480 = sphi 0, %s480
      %s482 = sphi 0, %s480
      %s483 = sphi 0, %s482
      %s497 = sphi 0, %s483
      %s501 = sphi 0, %s501
      %s503 = sphi 0, %s501
      %s504 = sphi 0, %s503
      %s518 = sphi 0, %s504
      %s522 = sphi 0, %s522
      %s524 = sphi 0, %s522
      %s525 = sphi 0, %s524
      %s539 = sphi 0, %s525
      %s545 = sphi 0, %s547
      %s548 = sphi 0, %s545
      %s549 = sphi 0, %s548
      %s565 = sphi 0, %s549
    $region4: #{tpu_custom_call.1} parent=1 // loop_header_branch
      %35 = sbr.rel (%p33) target = $region8
    $region5: #{tpu_custom_call.1} parent=1 // loop_body
      %s37 = ssub.s32 %s32, 1
      %s38 = ssub.s32 %s32, 2
      %s39 = sadd.s32 %s32, 1
      %s40 = ssub.s32 %s32, %s39
      %p41 = scmp.eq.s32.totalorder %s40, 0
      %s43 = sadd.s32 %s42, 1
      %s44 = scalar_select %p41, %s42, %s43
      %p47 = pneg %p41
      %p48 = scmp.eq.s32.totalorder %s32, 1
      %p49 = por %p47, %p48
      %p50 = scmp.ne.s32.totalorder %s42, %s45
      %p51 = scmp.eq.s32.totalorder %s32, 0
      %p52 = por %p50, %p51
      %p53 = scmp.ne.s32.totalorder %s42, %s45
      %p54 = scmp.eq.s32.totalorder %s37, 1
      %p55 = por %p53, %p54
      %p56 = scmp.ne.s32.totalorder %s45, %s46
      %p57 = scmp.eq.s32.totalorder %s37, 0
      %p58 = por %p56, %p57
      %p59 = scmp.ne.s32.totalorder %s45, %s46
      %p60 = scmp.eq.s32.totalorder %s38, 1
      %p61 = por %p59, %p60
      %p63 = scmp.ne.s32.totalorder %s46, %s62
      %p64 = scmp.eq.s32.totalorder %s38, 0
      %p65 = por %p63, %p64
      %s66 = ssub.s32 %s32, %s39
      %p67 = scmp.eq.s32.totalorder %s66, 0
      %s69 = sadd.s32 %s68, 1
      %s70 = scalar_select %p67, %s68, %s69
      %p73 = pneg %p67
      %p74 = scmp.eq.s32.totalorder %s32, 1
      %p75 = por %p73, %p74
      %p76 = scmp.ne.s32.totalorder %s68, %s71
      %p77 = scmp.eq.s32.totalorder %s32, 0
      %p78 = por %p76, %p77
      %p79 = scmp.ne.s32.totalorder %s68, %s71
      %p80 = scmp.eq.s32.totalorder %s37, 1
      %p81 = por %p79, %p80
      %p82 = scmp.ne.s32.totalorder %s71, %s72
      %p83 = scmp.eq.s32.totalorder %s37, 0
      %p84 = por %p82, %p83
      %p85 = scmp.ne.s32.totalorder %s71, %s72
      %p86 = scmp.eq.s32.totalorder %s38, 1
      %p87 = por %p85, %p86
      %p89 = scmp.ne.s32.totalorder %s72, %s88
      %p90 = scmp.eq.s32.totalorder %s38, 0
      %p91 = por %p89, %p90
      %s92 = ssub.s32 %s32, %s39
      %p93 = scmp.eq.s32.totalorder %s92, 0
      %s95 = sadd.s32 %s94, 1
      %s96 = scalar_select %p93, %s94, %s95
      %p99 = pneg %p93
      %p100 = scmp.eq.s32.totalorder %s32, 1
      %p101 = por %p99, %p100
      %p102 = scmp.ne.s32.totalorder %s94, %s97
      %p103 = scmp.eq.s32.totalorder %s32, 0
      %p104 = por %p102, %p103
      %p105 = scmp.ne.s32.totalorder %s94, %s97
      %p106 = scmp.eq.s32.totalorder %s37, 1
      %p107 = por %p105, %p106
      %p108 = scmp.ne.s32.totalorder %s97, %s98
      %p109 = scmp.eq.s32.totalorder %s37, 0
      %p110 = por %p108, %p109
      %p111 = scmp.ne.s32.totalorder %s97, %s98
      %p112 = scmp.eq.s32.totalorder %s38, 1
      %p113 = por %p111, %p112
      %p115 = scmp.ne.s32.totalorder %s98, %s114
      %p116 = scmp.eq.s32.totalorder %s38, 0
      %p117 = por %p115, %p116
      %s118 = ssub.s32 %s32, %s39
      %p119 = scmp.eq.s32.totalorder %s118, 0
      %s121 = sadd.s32 %s120, 1
      %s122 = scalar_select %p119, %s120, %s121
      %p125 = pneg %p119
      %p126 = scmp.eq.s32.totalorder %s32, 1
      %p127 = por %p125, %p126
      %p128 = scmp.ne.s32.totalorder %s120, %s123
      %p129 = scmp.eq.s32.totalorder %s32, 0
      %p130 = por %p128, %p129
      %p131 = scmp.ne.s32.totalorder %s120, %s123
      %p132 = scmp.eq.s32.totalorder %s37, 1
      %p133 = por %p131, %p132
      %p134 = scmp.ne.s32.totalorder %s123, %s124
      %p135 = scmp.eq.s32.totalorder %s37, 0
      %p136 = por %p134, %p135
      %p137 = scmp.ne.s32.totalorder %s123, %s124
      %p138 = scmp.eq.s32.totalorder %s38, 1
      %p139 = por %p137, %p138
      %p141 = scmp.ne.s32.totalorder %s124, %s140
      %p142 = scmp.eq.s32.totalorder %s38, 0
      %p143 = por %p141, %p142
      %s145 = sadd.s32 %s144, 1
      %p148 = scmp.eq.s32.totalorder %s32, 1
      %p149 = scmp.ne.s32.totalorder %s144, %s146
      %p150 = scmp.eq.s32.totalorder %s32, 0
      %p151 = por %p149, %p150
      %p152 = scmp.ne.s32.totalorder %s144, %s146
      %p153 = scmp.eq.s32.totalorder %s37, 1
      %p154 = por %p152, %p153
      %p155 = scmp.ne.s32.totalorder %s146, %s147
      %p156 = scmp.eq.s32.totalorder %s37, 0
      %p157 = por %p155, %p156
      %p158 = scmp.ne.s32.totalorder %s146, %s147
      %p159 = scmp.eq.s32.totalorder %s38, 1
      %p160 = por %p158, %p159
      %p162 = scmp.ne.s32.totalorder %s147, %s161
      %p163 = scmp.eq.s32.totalorder %s38, 0
      %p164 = por %p162, %p163
      %s166 = sadd.s32 %s165, 1
      %p169 = scmp.eq.s32.totalorder %s32, 1
      %p170 = scmp.ne.s32.totalorder %s165, %s167
      %p171 = scmp.eq.s32.totalorder %s32, 0
      %p172 = por %p170, %p171
      %p173 = scmp.ne.s32.totalorder %s165, %s167
      %p174 = scmp.eq.s32.totalorder %s37, 1
      %p175 = por %p173, %p174
      %p176 = scmp.ne.s32.totalorder %s167, %s168
      %p177 = scmp.eq.s32.totalorder %s37, 0
      %p178 = por %p176, %p177
      %p179 = scmp.ne.s32.totalorder %s167, %s168
      %p180 = scmp.eq.s32.totalorder %s38, 1
      %p181 = por %p179, %p180
      %p183 = scmp.ne.s32.totalorder %s168, %s182
      %p184 = scmp.eq.s32.totalorder %s38, 0
      %p185 = por %p183, %p184
      %s187 = sadd.s32 %s186, 1
      %p190 = scmp.eq.s32.totalorder %s32, 1
      %p191 = scmp.ne.s32.totalorder %s186, %s188
      %p192 = scmp.eq.s32.totalorder %s32, 0
      %p193 = por %p191, %p192
      %p194 = scmp.ne.s32.totalorder %s186, %s188
      %p195 = scmp.eq.s32.totalorder %s37, 1
      %p196 = por %p194, %p195
      %p197 = scmp.ne.s32.totalorder %s188, %s189
      %p198 = scmp.eq.s32.totalorder %s37, 0
      %p199 = por %p197, %p198
      %p200 = scmp.ne.s32.totalorder %s188, %s189
      %p201 = scmp.eq.s32.totalorder %s38, 1
      %p202 = por %p200, %p201
      %p204 = scmp.ne.s32.totalorder %s189, %s203
      %p205 = scmp.eq.s32.totalorder %s38, 0
      %p206 = por %p204, %p205
      %s208 = sadd.s32 %s207, 1
      %p211 = scmp.eq.s32.totalorder %s32, 1
      %p212 = scmp.ne.s32.totalorder %s207, %s209
      %p213 = scmp.eq.s32.totalorder %s32, 0
      %p214 = por %p212, %p213
      %p215 = scmp.ne.s32.totalorder %s207, %s209
      %p216 = scmp.eq.s32.totalorder %s37, 1
      %p217 = por %p215, %p216
      %p218 = scmp.ne.s32.totalorder %s209, %s210
      %p219 = scmp.eq.s32.totalorder %s37, 0
      %p220 = por %p218, %p219
      %p221 = scmp.ne.s32.totalorder %s209, %s210
      %p222 = scmp.eq.s32.totalorder %s38, 1
      %p223 = por %p221, %p222
      %p225 = scmp.ne.s32.totalorder %s210, %s224
      %p226 = scmp.eq.s32.totalorder %s38, 0
      %p227 = por %p225, %p226
      %s229 = sadd.s32 %s228, 1
      %p232 = scmp.eq.s32.totalorder %s32, 1
      %p233 = scmp.ne.s32.totalorder %s228, %s230
      %p234 = scmp.eq.s32.totalorder %s32, 0
      %p235 = por %p233, %p234
      %p236 = scmp.ne.s32.totalorder %s228, %s230
      %p237 = scmp.eq.s32.totalorder %s37, 1
      %p238 = por %p236, %p237
      %p239 = scmp.ne.s32.totalorder %s230, %s231
      %p240 = scmp.eq.s32.totalorder %s37, 0
      %p241 = por %p239, %p240
      %p242 = scmp.ne.s32.totalorder %s230, %s231
      %p243 = scmp.eq.s32.totalorder %s38, 1
      %p244 = por %p242, %p243
      %p246 = scmp.ne.s32.totalorder %s231, %s245
      %p247 = scmp.eq.s32.totalorder %s38, 0
      %p248 = por %p246, %p247
      %s250 = sadd.s32 %s249, 1
      %p253 = scmp.eq.s32.totalorder %s32, 1
      %p254 = scmp.ne.s32.totalorder %s249, %s251
      %p255 = scmp.eq.s32.totalorder %s32, 0
      %p256 = por %p254, %p255
      %p257 = scmp.ne.s32.totalorder %s249, %s251
      %p258 = scmp.eq.s32.totalorder %s37, 1
      %p259 = por %p257, %p258
      %p260 = scmp.ne.s32.totalorder %s251, %s252
      %p261 = scmp.eq.s32.totalorder %s37, 0
      %p262 = por %p260, %p261
      %p263 = scmp.ne.s32.totalorder %s251, %s252
      %p264 = scmp.eq.s32.totalorder %s38, 1
      %p265 = por %p263, %p264
      %p267 = scmp.ne.s32.totalorder %s252, %s266
      %p268 = scmp.eq.s32.totalorder %s38, 0
      %p269 = por %p267, %p268
      %s271 = sadd.s32 %s270, 1
      %p274 = scmp.eq.s32.totalorder %s32, 1
      %p275 = scmp.ne.s32.totalorder %s270, %s272
      %p276 = scmp.eq.s32.totalorder %s32, 0
      %p277 = por %p275, %p276
      %p278 = scmp.ne.s32.totalorder %s270, %s272
      %p279 = scmp.eq.s32.totalorder %s37, 1
      %p280 = por %p278, %p279
      %p281 = scmp.ne.s32.totalorder %s272, %s273
      %p282 = scmp.eq.s32.totalorder %s37, 0
      %p283 = por %p281, %p282
      %p284 = scmp.ne.s32.totalorder %s272, %s273
      %p285 = scmp.eq.s32.totalorder %s38, 1
      %p286 = por %p284, %p285
      %p288 = scmp.ne.s32.totalorder %s273, %s287
      %p289 = scmp.eq.s32.totalorder %s38, 0
      %p290 = por %p288, %p289
      %s292 = sadd.s32 %s291, 1
      %p295 = scmp.eq.s32.totalorder %s32, 1
      %p296 = scmp.ne.s32.totalorder %s291, %s293
      %p297 = scmp.eq.s32.totalorder %s32, 0
      %p298 = por %p296, %p297
      %p299 = scmp.ne.s32.totalorder %s291, %s293
      %p300 = scmp.eq.s32.totalorder %s37, 1
      %p301 = por %p299, %p300
      %p302 = scmp.ne.s32.totalorder %s293, %s294
      %p303 = scmp.eq.s32.totalorder %s37, 0
      %p304 = por %p302, %p303
      %p305 = scmp.ne.s32.totalorder %s293, %s294
      %p306 = scmp.eq.s32.totalorder %s38, 1
      %p307 = por %p305, %p306
      %p309 = scmp.ne.s32.totalorder %s294, %s308
      %p310 = scmp.eq.s32.totalorder %s38, 0
      %p311 = por %p309, %p310
      %s313 = sadd.s32 %s312, 1
      %p316 = scmp.eq.s32.totalorder %s32, 1
      %p317 = scmp.ne.s32.totalorder %s312, %s314
      %p318 = scmp.eq.s32.totalorder %s32, 0
      %p319 = por %p317, %p318
      %p320 = scmp.ne.s32.totalorder %s312, %s314
      %p321 = scmp.eq.s32.totalorder %s37, 1
      %p322 = por %p320, %p321
      %p323 = scmp.ne.s32.totalorder %s314, %s315
      %p324 = scmp.eq.s32.totalorder %s37, 0
      %p325 = por %p323, %p324
      %p326 = scmp.ne.s32.totalorder %s314, %s315
      %p327 = scmp.eq.s32.totalorder %s38, 1
      %p328 = por %p326, %p327
      %p330 = scmp.ne.s32.totalorder %s315, %s329
      %p331 = scmp.eq.s32.totalorder %s38, 0
      %p332 = por %p330, %p331
      %s334 = sadd.s32 %s333, 1
      %p337 = scmp.eq.s32.totalorder %s32, 1
      %p338 = scmp.ne.s32.totalorder %s333, %s335
      %p339 = scmp.eq.s32.totalorder %s32, 0
      %p340 = por %p338, %p339
      %p341 = scmp.ne.s32.totalorder %s333, %s335
      %p342 = scmp.eq.s32.totalorder %s37, 1
      %p343 = por %p341, %p342
      %p344 = scmp.ne.s32.totalorder %s335, %s336
      %p345 = scmp.eq.s32.totalorder %s37, 0
      %p346 = por %p344, %p345
      %p347 = scmp.ne.s32.totalorder %s335, %s336
      %p348 = scmp.eq.s32.totalorder %s38, 1
      %p349 = por %p347, %p348
      %p351 = scmp.ne.s32.totalorder %s336, %s350
      %p352 = scmp.eq.s32.totalorder %s38, 0
      %p353 = por %p351, %p352
      %s355 = sadd.s32 %s354, 1
      %p358 = scmp.eq.s32.totalorder %s32, 1
      %p359 = scmp.ne.s32.totalorder %s354, %s356
      %p360 = scmp.eq.s32.totalorder %s32, 0
      %p361 = por %p359, %p360
      %p362 = scmp.ne.s32.totalorder %s354, %s356
      %p363 = scmp.eq.s32.totalorder %s37, 1
      %p364 = por %p362, %p363
      %p365 = scmp.ne.s32.totalorder %s356, %s357
      %p366 = scmp.eq.s32.totalorder %s37, 0
      %p367 = por %p365, %p366
      %p368 = scmp.ne.s32.totalorder %s356, %s357
      %p369 = scmp.eq.s32.totalorder %s38, 1
      %p370 = por %p368, %p369
      %p372 = scmp.ne.s32.totalorder %s357, %s371
      %p373 = scmp.eq.s32.totalorder %s38, 0
      %p374 = por %p372, %p373
      %s376 = sadd.s32 %s375, 1
      %p379 = scmp.eq.s32.totalorder %s32, 1
      %p380 = scmp.ne.s32.totalorder %s375, %s377
      %p381 = scmp.eq.s32.totalorder %s32, 0
      %p382 = por %p380, %p381
      %p383 = scmp.ne.s32.totalorder %s375, %s377
      %p384 = scmp.eq.s32.totalorder %s37, 1
      %p385 = por %p383, %p384
      %p386 = scmp.ne.s32.totalorder %s377, %s378
      %p387 = scmp.eq.s32.totalorder %s37, 0
      %p388 = por %p386, %p387
      %p389 = scmp.ne.s32.totalorder %s377, %s378
      %p390 = scmp.eq.s32.totalorder %s38, 1
      %p391 = por %p389, %p390
      %p393 = scmp.ne.s32.totalorder %s378, %s392
      %p394 = scmp.eq.s32.totalorder %s38, 0
      %p395 = por %p393, %p394
      %s397 = sadd.s32 %s396, 1
      %p400 = scmp.eq.s32.totalorder %s32, 1
      %p401 = scmp.ne.s32.totalorder %s396, %s398
      %p402 = scmp.eq.s32.totalorder %s32, 0
      %p403 = por %p401, %p402
      %p404 = scmp.ne.s32.totalorder %s396, %s398
      %p405 = scmp.eq.s32.totalorder %s37, 1
      %p406 = por %p404, %p405
      %p407 = scmp.ne.s32.totalorder %s398, %s399
      %p408 = scmp.eq.s32.totalorder %s37, 0
      %p409 = por %p407, %p408
      %p410 = scmp.ne.s32.totalorder %s398, %s399
      %p411 = scmp.eq.s32.totalorder %s38, 1
      %p412 = por %p410, %p411
      %p414 = scmp.ne.s32.totalorder %s399, %s413
      %p415 = scmp.eq.s32.totalorder %s38, 0
      %p416 = por %p414, %p415
      %s418 = sadd.s32 %s417, 1
      %p421 = scmp.eq.s32.totalorder %s32, 1
      %p422 = scmp.ne.s32.totalorder %s417, %s419
      %p423 = scmp.eq.s32.totalorder %s32, 0
      %p424 = por %p422, %p423
      %p425 = scmp.ne.s32.totalorder %s417, %s419
      %p426 = scmp.eq.s32.totalorder %s37, 1
      %p427 = por %p425, %p426
      %p428 = scmp.ne.s32.totalorder %s419, %s420
      %p429 = scmp.eq.s32.totalorder %s37, 0
      %p430 = por %p428, %p429
      %p431 = scmp.ne.s32.totalorder %s419, %s420
      %p432 = scmp.eq.s32.totalorder %s38, 1
      %p433 = por %p431, %p432
      %p435 = scmp.ne.s32.totalorder %s420, %s434
      %p436 = scmp.eq.s32.totalorder %s38, 0
      %p437 = por %p435, %p436
      %s439 = sadd.s32 %s438, 1
      %p442 = scmp.eq.s32.totalorder %s32, 1
      %p443 = scmp.ne.s32.totalorder %s438, %s440
      %p444 = scmp.eq.s32.totalorder %s32, 0
      %p445 = por %p443, %p444
      %p446 = scmp.ne.s32.totalorder %s438, %s440
      %p447 = scmp.eq.s32.totalorder %s37, 1
      %p448 = por %p446, %p447
      %p449 = scmp.ne.s32.totalorder %s440, %s441
      %p450 = scmp.eq.s32.totalorder %s37, 0
      %p451 = por %p449, %p450
      %p452 = scmp.ne.s32.totalorder %s440, %s441
      %p453 = scmp.eq.s32.totalorder %s38, 1
      %p454 = por %p452, %p453
      %p456 = scmp.ne.s32.totalorder %s441, %s455
      %p457 = scmp.eq.s32.totalorder %s38, 0
      %p458 = por %p456, %p457
      %s460 = sadd.s32 %s459, 1
      %p463 = scmp.eq.s32.totalorder %s32, 1
      %p464 = scmp.ne.s32.totalorder %s459, %s461
      %p465 = scmp.eq.s32.totalorder %s32, 0
      %p466 = por %p464, %p465
      %p467 = scmp.ne.s32.totalorder %s459, %s461
      %p468 = scmp.eq.s32.totalorder %s37, 1
      %p469 = por %p467, %p468
      %p470 = scmp.ne.s32.totalorder %s461, %s462
      %p471 = scmp.eq.s32.totalorder %s37, 0
      %p472 = por %p470, %p471
      %p473 = scmp.ne.s32.totalorder %s461, %s462
      %p474 = scmp.eq.s32.totalorder %s38, 1
      %p475 = por %p473, %p474
      %p477 = scmp.ne.s32.totalorder %s462, %s476
      %p478 = scmp.eq.s32.totalorder %s38, 0
      %p479 = por %p477, %p478
      %s481 = sadd.s32 %s480, 1
      %p484 = scmp.eq.s32.totalorder %s32, 1
      %p485 = scmp.ne.s32.totalorder %s480, %s482
      %p486 = scmp.eq.s32.totalorder %s32, 0
      %p487 = por %p485, %p486
      %p488 = scmp.ne.s32.totalorder %s480, %s482
      %p489 = scmp.eq.s32.totalorder %s37, 1
      %p490 = por %p488, %p489
      %p491 = scmp.ne.s32.totalorder %s482, %s483
      %p492 = scmp.eq.s32.totalorder %s37, 0
      %p493 = por %p491, %p492
      %p494 = scmp.ne.s32.totalorder %s482, %s483
      %p495 = scmp.eq.s32.totalorder %s38, 1
      %p496 = por %p494, %p495
      %p498 = scmp.ne.s32.totalorder %s483, %s497
      %p499 = scmp.eq.s32.totalorder %s38, 0
      %p500 = por %p498, %p499
      %s502 = sadd.s32 %s501, 1
      %p505 = scmp.eq.s32.totalorder %s32, 1
      %p506 = scmp.ne.s32.totalorder %s501, %s503
      %p507 = scmp.eq.s32.totalorder %s32, 0
      %p508 = por %p506, %p507
      %p509 = scmp.ne.s32.totalorder %s501, %s503
      %p510 = scmp.eq.s32.totalorder %s37, 1
      %p511 = por %p509, %p510
      %p512 = scmp.ne.s32.totalorder %s503, %s504
      %p513 = scmp.eq.s32.totalorder %s37, 0
      %p514 = por %p512, %p513
      %p515 = scmp.ne.s32.totalorder %s503, %s504
      %p516 = scmp.eq.s32.totalorder %s38, 1
      %p517 = por %p515, %p516
      %p519 = scmp.ne.s32.totalorder %s504, %s518
      %p520 = scmp.eq.s32.totalorder %s38, 0
      %p521 = por %p519, %p520
      %s523 = sadd.s32 %s522, 1
      %p526 = scmp.eq.s32.totalorder %s32, 1
      %p527 = scmp.ne.s32.totalorder %s522, %s524
      %p528 = scmp.eq.s32.totalorder %s32, 0
      %p529 = por %p527, %p528
      %p530 = scmp.ne.s32.totalorder %s522, %s524
      %p531 = scmp.eq.s32.totalorder %s37, 1
      %p532 = por %p530, %p531
      %p533 = scmp.ne.s32.totalorder %s524, %s525
      %p534 = scmp.eq.s32.totalorder %s37, 0
      %p535 = por %p533, %p534
      %p536 = scmp.ne.s32.totalorder %s524, %s525
      %p537 = scmp.eq.s32.totalorder %s38, 1
      %p538 = por %p536, %p537
      %p540 = scmp.ne.s32.totalorder %s525, %s539
      %p541 = scmp.eq.s32.totalorder %s38, 0
      %p542 = por %p540, %p541
      %s543 = ssub.s32 %s32, %s39
      %p544 = scmp.eq.s32.totalorder %s543, 0
      %s546 = sadd.s32 %s545, 1
      %s547 = scalar_select %p544, %s545, %s546
      %p550 = pneg %p544
      %p551 = scmp.eq.s32.totalorder %s32, 1
      %p552 = por %p550, %p551
      %p553 = scmp.ne.s32.totalorder %s545, %s548
      %p554 = scmp.eq.s32.totalorder %s32, 0
      %p555 = por %p553, %p554
      %p556 = scmp.ne.s32.totalorder %s545, %s548
      %p557 = scmp.eq.s32.totalorder %s37, 1
      %p558 = por %p556, %p557
      %p559 = scmp.ne.s32.totalorder %s548, %s549
      %p560 = scmp.eq.s32.totalorder %s37, 0
      %p561 = por %p559, %p560
      %p562 = scmp.ne.s32.totalorder %s548, %s549
      %p563 = scmp.eq.s32.totalorder %s38, 1
      %p564 = por %p562, %p563
      %p566 = scmp.ne.s32.totalorder %s549, %s565
      %p567 = scmp.eq.s32.totalorder %s38, 0
      %p568 = por %p566, %p567
      %p569 = scmp.le.s32.totalorder 1, %s32
      %p570 = scmp.lt.s32.totalorder %s32, 3
      %p571 = pnand %p569, %p570
      %p572 = pneg %p571
      // Predicated region
      $region9: #{tpu_custom_call.1} parent=5 // pred_check
        _
      $region10: #{tpu_custom_call.1} parent=5 // pred_check_branch
        %574 = sbr.rel (%p571) target = $region12
      $region11: #{tpu_custom_call.1} parent=5 // pred_region
        %s575 = ssub.s32 %s32, 1
        // Predicated region
        $region13: #{tpu_custom_call.1} parent=11 // pred_check
          %p576 = pneg %p157
        $region14: #{tpu_custom_call.1} parent=11 // pred_check_branch
          %578 = sbr.rel (%p576) target = $region16
        $region15: #{tpu_custom_call.1} parent=11 // pred_region
          _
        $region16: #{tpu_custom_call.1} parent=11 // pred_fallthru
          _
        // Predicated region
        $region17: #{tpu_custom_call.1} parent=11 // pred_check
          %p579 = pneg %p178
        $region18: #{tpu_custom_call.1} parent=11 // pred_check_branch
          %581 = sbr.rel (%p579) target = $region20
        $region19: #{tpu_custom_call.1} parent=11 // pred_region
          _
        $region20: #{tpu_custom_call.1} parent=11 // pred_fallthru
          _
        // Predicated region
        $region21: #{tpu_custom_call.1} parent=11 // pred_check
          %p582 = pneg %p199
        $region22: #{tpu_custom_call.1} parent=11 // pred_check_branch
          %584 = sbr.rel (%p582) target = $region24
        $region23: #{tpu_custom_call.1} parent=11 // pred_region
          _
        $region24: #{tpu_custom_call.1} parent=11 // pred_fallthru
          _
        // Predicated region
        $region25: #{tpu_custom_call.1} parent=11 // pred_check
          %p585 = pneg %p220
        $region26: #{tpu_custom_call.1} parent=11 // pred_check_branch
          %587 = sbr.rel (%p585) target = $region28
        $region27: #{tpu_custom_call.1} parent=11 // pred_region
          _
        $region28: #{tpu_custom_call.1} parent=11 // pred_fallthru
          _
        // Predicated region
        $region29: #{tpu_custom_call.1} parent=11 // pred_check
          %p588 = pneg %p241
        $region30: #{tpu_custom_call.1} parent=11 // pred_check_branch
          %590 = sbr.rel (%p588) target = $region32
        $region31: #{tpu_custom_call.1} parent=11 // pred_region
          _
        $region32: #{tpu_custom_call.1} parent=11 // pred_fallthru
          _
        // Predicated region
        $region33: #{tpu_custom_call.1} parent=11 // pred_check
          %p591 = pneg %p262
        $region34: #{tpu_custom_call.1} parent=11 // pred_check_branch
          %593 = sbr.rel (%p591) target = $region36
        $region35: #{tpu_custom_call.1} parent=11 // pred_region
          _
        $region36: #{tpu_custom_call.1} parent=11 // pred_fallthru
          _
        // Predicated region
        $region37: #{tpu_custom_call.1} parent=11 // pred_check
          %p594 = pneg %p283
        $region38: #{tpu_custom_call.1} parent=11 // pred_check_branch
          %596 = sbr.rel (%p594) target = $region40
        $region39: #{tpu_custom_call.1} parent=11 // pred_region
          _
        $region40: #{tpu_custom_call.1} parent=11 // pred_fallthru
          _
        // Predicated region
        $region41: #{tpu_custom_call.1} parent=11 // pred_check
          %p597 = pneg %p304
        $region42: #{tpu_custom_call.1} parent=11 // pred_check_branch
          %599 = sbr.rel (%p597) target = $region44
        $region43: #{tpu_custom_call.1} parent=11 // pred_region
          _
        $region44: #{tpu_custom_call.1} parent=11 // pred_fallthru
          _
        // Predicated region
        $region45: #{tpu_custom_call.1} parent=11 // pred_check
          %p600 = pneg %p325
        $region46: #{tpu_custom_call.1} parent=11 // pred_check_branch
          %602 = sbr.rel (%p600) target = $region48
        $region47: #{tpu_custom_call.1} parent=11 // pred_region
          _
        $region48: #{tpu_custom_call.1} parent=11 // pred_fallthru
          _
        // Predicated region
        $region49: #{tpu_custom_call.1} parent=11 // pred_check
          %p603 = pneg %p346
        $region50: #{tpu_custom_call.1} parent=11 // pred_check_branch
          %605 = sbr.rel (%p603) target = $region52
        $region51: #{tpu_custom_call.1} parent=11 // pred_region
          _
        $region52: #{tpu_custom_call.1} parent=11 // pred_fallthru
          _
        // Predicated region
        $region53: #{tpu_custom_call.1} parent=11 // pred_check
          %p606 = pneg %p367
        $region54: #{tpu_custom_call.1} parent=11 // pred_check_branch
          %608 = sbr.rel (%p606) target = $region56
        $region55: #{tpu_custom_call.1} parent=11 // pred_region
          _
        $region56: #{tpu_custom_call.1} parent=11 // pred_fallthru
          _
        // Predicated region
        $region57: #{tpu_custom_call.1} parent=11 // pred_check
          %p609 = pneg %p388
        $region58: #{tpu_custom_call.1} parent=11 // pred_check_branch
          %611 = sbr.rel (%p609) target = $region60
        $region59: #{tpu_custom_call.1} parent=11 // pred_region
          _
        $region60: #{tpu_custom_call.1} parent=11 // pred_fallthru
          _
        // Predicated region
        $region61: #{tpu_custom_call.1} parent=11 // pred_check
          %p612 = pneg %p409
        $region62: #{tpu_custom_call.1} parent=11 // pred_check_branch
          %614 = sbr.rel (%p612) target = $region64
        $region63: #{tpu_custom_call.1} parent=11 // pred_region
          _
        $region64: #{tpu_custom_call.1} parent=11 // pred_fallthru
          _
        // Predicated region
        $region65: #{tpu_custom_call.1} parent=11 // pred_check
          %p615 = pneg %p430
        $region66: #{tpu_custom_call.1} parent=11 // pred_check_branch
          %617 = sbr.rel (%p615) target = $region68
        $region67: #{tpu_custom_call.1} parent=11 // pred_region
          _
        $region68: #{tpu_custom_call.1} parent=11 // pred_fallthru
          _
        // Predicated region
        $region69: #{tpu_custom_call.1} parent=11 // pred_check
          %p618 = pneg %p451
        $region70: #{tpu_custom_call.1} parent=11 // pred_check_branch
          %620 = sbr.rel (%p618) target = $region72
        $region71: #{tpu_custom_call.1} parent=11 // pred_region
          _
        $region72: #{tpu_custom_call.1} parent=11 // pred_fallthru
          _
        // Predicated region
        $region73: #{tpu_custom_call.1} parent=11 // pred_check
          %p621 = pneg %p472
        $region74: #{tpu_custom_call.1} parent=11 // pred_check_branch
          %623 = sbr.rel (%p621) target = $region76
        $region75: #{tpu_custom_call.1} parent=11 // pred_region
          _
        $region76: #{tpu_custom_call.1} parent=11 // pred_fallthru
          _
        // Predicated region
        $region77: #{tpu_custom_call.1} parent=11 // pred_check
          %p624 = pneg %p493
        $region78: #{tpu_custom_call.1} parent=11 // pred_check_branch
          %626 = sbr.rel (%p624) target = $region80
        $region79: #{tpu_custom_call.1} parent=11 // pred_region
          _
        $region80: #{tpu_custom_call.1} parent=11 // pred_fallthru
          _
        // Predicated region
        $region81: #{tpu_custom_call.1} parent=11 // pred_check
          %p627 = pneg %p514
        $region82: #{tpu_custom_call.1} parent=11 // pred_check_branch
          %629 = sbr.rel (%p627) target = $region84
        $region83: #{tpu_custom_call.1} parent=11 // pred_region
          _
        $region84: #{tpu_custom_call.1} parent=11 // pred_fallthru
          _
        // Predicated region
        $region85: #{tpu_custom_call.1} parent=11 // pred_check
          %p630 = pneg %p535
        $region86: #{tpu_custom_call.1} parent=11 // pred_check_branch
          %632 = sbr.rel (%p630) target = $region88
        $region87: #{tpu_custom_call.1} parent=11 // pred_region
          _
        $region88: #{tpu_custom_call.1} parent=11 // pred_fallthru
          _
      $region12: #{tpu_custom_call.1} parent=5 // pred_fallthru
        _
      %p633 = scmp.lt.s32.totalorder %s32, 2
      // Predicated region
      $region89: #{tpu_custom_call.1} parent=5 // pred_check
        %p634 = pneg %p633
      $region90: #{tpu_custom_call.1} parent=5 // pred_check_branch
        %636 = sbr.rel (%p634) target = $region92
      $region91: #{tpu_custom_call.1} parent=5 // pred_region
        // Predicated region
        $region93: #{tpu_custom_call.1} parent=91 // pred_check
          %p637 = pneg %p52
        $region94: #{tpu_custom_call.1} parent=91 // pred_check_branch
          %639 = sbr.rel (%p637) target = $region96
        $region95: #{tpu_custom_call.1} parent=91 // pred_region
          %s640 = smul.u32 2, %s32
          %p641 = scmp.lt.s32.totalorder %s640, 3
          %s642 = scalar_select %p641, %s640, 3
          %s643 = smul.addr %s642, 8
          %s644 = scalar_lea.vmem %s0, %s643
          %s645 = smul.u32 2, %s32
        $region96: #{tpu_custom_call.1} parent=91 // pred_fallthru
          _
        // Predicated region
        $region97: #{tpu_custom_call.1} parent=91 // pred_check
          %p646 = pneg %p78
        $region98: #{tpu_custom_call.1} parent=91 // pred_check_branch
          %648 = sbr.rel (%p646) target = $region100
        $region99: #{tpu_custom_call.1} parent=91 // pred_region
          %s649 = smul.u32 2, %s32
          %p650 = scmp.lt.s32.totalorder %s649, 3
          %s651 = scalar_select %p650, %s649, 3
          %s652 = smul.addr %s651, 8
          %s653 = scalar_lea.vmem %s1, %s652
          %s654 = smul.u32 2, %s32
        $region100: #{tpu_custom_call.1} parent=91 // pred_fallthru
          _
        // Predicated region
        $region101: #{tpu_custom_call.1} parent=91 // pred_check
          %p655 = pneg %p104
        $region102: #{tpu_custom_call.1} parent=91 // pred_check_branch
          %657 = sbr.rel (%p655) target = $region104
        $region103: #{tpu_custom_call.1} parent=91 // pred_region
          %s658 = smul.u32 2, %s32
          %p659 = scmp.lt.s32.totalorder %s658, 3
          %s660 = scalar_select %p659, %s658, 3
          %s661 = smul.addr %s660, 8
          %s662 = scalar_lea.vmem %s2, %s661
          %s663 = smul.u32 2, %s32
        $region104: #{tpu_custom_call.1} parent=91 // pred_fallthru
          _
        // Predicated region
        $region105: #{tpu_custom_call.1} parent=91 // pred_check
          %p664 = pneg %p130
        $region106: #{tpu_custom_call.1} parent=91 // pred_check_branch
          %666 = sbr.rel (%p664) target = $region108
        $region107: #{tpu_custom_call.1} parent=91 // pred_region
          %p667 = scmp.lt.s32.totalorder %s32, 1
          %s668 = scalar_select %p667, %s32, 1
          %s669 = smul.addr %s668, 2
          %s670 = smul.addr %s669, 8
          %s671 = scalar_lea.vmem %s3, %s670
        $region108: #{tpu_custom_call.1} parent=91 // pred_fallthru
          _
      $region92: #{tpu_custom_call.1} parent=5 // pred_fallthru
        _
      %p672 = scmp.le.s32.totalorder 1, %s32
      %p673 = scmp.lt.s32.totalorder %s32, 3
      %p674 = pnand %p672, %p673
      %p675 = pneg %p674
      // Predicated region
      $region109: #{tpu_custom_call.1} parent=5 // pred_check
        _
      $region110: #{tpu_custom_call.1} parent=5 // pred_check_branch
        %677 = sbr.rel (%p674) target = $region112
      $region111: #{tpu_custom_call.1} parent=5 // pred_region
        %s678 = ssub.s32 %s32, 1
        %s679 = smul.u32 2, %s37
        %p680 = scmp.lt.s32.totalorder %s679, 3
        %s681 = scalar_select %p680, %s679, 3
        %s682 = smul.addr %s681, 8
        %s683 = scalar_lea.vmem %s0, %s682
        %p684 = pneg %p58
        %p685 = pneg %p55
        %s686 = smul.u32 2, %s37
        %p687 = scmp.lt.s32.totalorder %s686, 3
        %s688 = scalar_select %p687, %s686, 3
        %s689 = smul.addr %s688, 8
        %s690 = scalar_lea.vmem %s1, %s689
        %p691 = pneg %p84
        %p692 = pneg %p81
        %s693 = smul.u32 2, %s37
        %p694 = scmp.lt.s32.totalorder %s693, 3
        %s695 = scalar_select %p694, %s693, 3
        %s696 = smul.addr %s695, 8
        %s697 = scalar_lea.vmem %s2, %s696
        %p698 = pneg %p110
        %p699 = pneg %p107
        %p700 = scmp.lt.s32.totalorder %s37, 1
        %s701 = scalar_select %p700, %s37, 1
        %s702 = smul.addr %s701, 2
        %s703 = smul.addr %s702, 8
        %s704 = scalar_lea.vmem %s3, %s703
        %p705 = pneg %p136
        %p706 = pneg %p133
        %p707 = pneg %p157
        %p708 = pneg %p154
        %p709 = pneg %p178
        %p710 = pneg %p175
        %p711 = pneg %p199
        %p712 = pneg %p196
        %p713 = pneg %p220
        %p714 = pneg %p217
        %p715 = pneg %p241
        %p716 = pneg %p238
        %p717 = pneg %p262
        %p718 = pneg %p259
        %p719 = pneg %p283
        %p720 = pneg %p280
        %p721 = pneg %p304
        %p722 = pneg %p301
        %p723 = pneg %p325
        %p724 = pneg %p322
        %p725 = pneg %p346
        %p726 = pneg %p343
        %p727 = pneg %p367
        %p728 = pneg %p364
        %p729 = pneg %p388
        %p730 = pneg %p385
        %p731 = pneg %p409
        %p732 = pneg %p406
        %p733 = pneg %p430
        %p734 = pneg %p427
        %p735 = pneg %p451
        %p736 = pneg %p448
        %p737 = pneg %p472
        %p738 = pneg %p469
        %p739 = pneg %p493
        %p740 = pneg %p490
        %p741 = pneg %p514
        %p742 = pneg %p511
        %p743 = pneg %p535
        %p744 = pneg %p532
        %p745 = pneg %p561
        %p746 = pneg %p558
        %s747 = sand.u32 %s548, 1
        %s748 = scalar_lea.sflag [#allocation3], %s747
        %s749 = sand.u32 %s548, 1
        %s750 = smul.addr %s749, 16
        %s751 = scalar_lea.vmem [#allocation2], %s750
        %s752 = smul.u32 2, %s37
        %p753 = scmp.lt.s32.totalorder %s752, 3
        %s754 = scalar_select %p753, %s752, 3
        %s755 = smul.addr %s754, 8
        %s756 = scalar_lea.vmem %s0, %s755
        %s757 = smul.u32 2, %s37
        %s758 = smul.u32 2, %s37
        %p759 = scmp.lt.s32.totalorder %s758, 3
        %s760 = scalar_select %p759, %s758, 3
        %s761 = smul.addr %s760, 8
        %s762 = scalar_lea.vmem %s1, %s761
        %s763 = smul.u32 2, %s37
        %s764 = smul.u32 2, %s37
        %p765 = scmp.lt.s32.totalorder %s764, 3
        %s766 = scalar_select %p765, %s764, 3
        %s767 = smul.addr %s766, 8
        %s768 = scalar_lea.vmem %s2, %s767
        %s769 = smul.u32 2, %s37
        %p770 = scmp.lt.s32.totalorder %s37, 1
        %s771 = scalar_select %p770, %s37, 1
        %s772 = smul.addr %s771, 2
        %s773 = smul.addr %s772, 8
        %s774 = scalar_lea.vmem %s3, %s773
        %s775 = smul.u32 2, %s37
        %v776 = vld [vmem:[%s768] sm:$0xff]
        %v777 = vld [vmem:[%s768 + $0x8] sm:$0xff]
        %v778 = vld [vmem:[%s774] sm:$0xff]
        %v779 = vld [vmem:[%s774 + $0x8] sm:$0xff]
        %v780 = vld [vmem:[%s4] sm:$0xff]
        %v781 = vld [vmem:[%s4 + $0x8] sm:$0xff]
        %s782 = scalar_lea.vmem %s4, 16
        %v783 = vld [vmem:[%s782] sm:$0xff]
        %v784 = vld [vmem:[%s782 + $0x8] sm:$0xff]
        %s785 = scalar_lea.vmem %s4, 48
        %v786 = vld [vmem:[%s785] sm:$0xff]
        %v787 = vld [vmem:[%s785 + $0x8] sm:$0xff]
        %s788 = scalar_lea.vmem %s4, 64
        %v789 = vld [vmem:[%s788] sm:$0xff]
        %v790 = vld [vmem:[%s788 + $0x8] sm:$0xff]
        %v791 = vld [vmem:[%s5] sm:$0xff]
        %v792 = vld [vmem:[%s5 + $0x8] sm:$0xff]
        %s793 = scalar_lea.vmem %s5, 32
        %v794 = vld [vmem:[%s793] sm:$0xff]
        %v795 = vld [vmem:[%s793 + $0x8] sm:$0xff]
        %v796 = vld [vmem:[%s756] sm:$0xff]
        %v797 = vld [vmem:[%s756 + $0x8] sm:$0xff]
        %vm800 = vcmask 1041408
        %v801 = vrot.slane %v796, 6
        %v802 = vrot.slane %v797, 6
        %v803 = vsel %vm800, %v801, %v802
        %v806 = vsel %vm800, 0.0, %v801
        %808 = vset.pattern.permute.xlu0 0
        %809 = vperm.xlu0 %808, %v780
        %v810 = vpop.permute.xlu0 %809
        %813 = vset.pattern.permute.xlu0 0
        %814 = vperm.xlu0 %813, %v781
        %v815 = vpop.permute.xlu0 %814
        %v817 = vmul.f32 %v806, %v810
        %v818 = vmul.f32 %v803, %v815
        %v819 = vld [vmem:[%s6] sm:$0xff]
        %v820 = vld [vmem:[%s6 + $0x8] sm:$0xff]
        %v821 = vld [vmem:[%s6 + $0x10] sm:$0xff]
        %v822 = vld [vmem:[%s6 + $0x18] sm:$0xff]
        %vm823 = vcmask 1040384
        %v824 = vrot.slane %v796, 7
        %v825 = vrot.slane %v797, 7
        %v826 = vsel %vm823, %v824, %v825
        %v829 = vsel %vm823, 0.0, %v824
        %831 = vset.pattern.permute.xlu0 0
        %832 = vperm.xlu0 %831, %v783
        %v833 = vpop.permute.xlu0 %832
        %836 = vset.pattern.permute.xlu0 0
        %837 = vperm.xlu0 %836, %v784
        %v838 = vpop.permute.xlu0 %837
        %v840 = vmul.f32 %v829, %v833
        %v841 = vmul.f32 %v826, %v838
        %s842 = scalar_lea.vmem %s6, 32
        %v843 = vld [vmem:[%s842] sm:$0xff]
        %v844 = vld [vmem:[%s842 + $0x8] sm:$0xff]
        %v845 = vld [vmem:[%s842 + $0x10] sm:$0xff]
        %v846 = vld [vmem:[%s842 + $0x18] sm:$0xff]
        %vm847 = vcmask 261120
        %v849 = vsel %vm847, %v840, 0
        %v852 = vsel %vm847, %v841, 0
        %854 = vmatprep.subr.mxu0 0.0
        %855 = vmatpush1.msra.mxu0 %v843
        %856 = vmatprep.subr.mxu0 0.0
        %857 = vmatpush1.msra.mxu0 %v844
        %858 = vmatprep.subr.mxu0 0.0
        %859 = vmatpush1.msra.mxu0 %v845
        %860 = vmatprep.subr.mxu0 0.0
        %861 = vmatpush1.msra.mxu0 %v846
        %862 = vmatprep.subr.mxu0 0.0
        %863 = vmatpush1.msra.mxu0 0.0
        %864 = vmatprep.subr.mxu0 0.0
        %865 = vmatpush1.msra.mxu0 0.0
        %866 = vmatprep.subr.mxu0 0.0
        %867 = vmatpush1.msra.mxu0 0.0
        %868 = vmatprep.subr.mxu0 0.0
        %869 = vmatpush1.msra.mxu0 0.0
        %870 = vmatprep.subr.mxu0 0.0
        %871 = vmatpush1.msra.mxu0 0.0
        %872 = vmatprep.subr.mxu0 0.0
        %873 = vmatpush1.msra.mxu0 0.0
        %874 = vmatprep.subr.mxu0 0.0
        %875 = vmatpush1.msra.mxu0 0.0
        %876 = vmatprep.subr.mxu0 0.0
        %877 = vmatpush1.msra.mxu0 0.0
        %878 = vmatprep.subr.mxu0 0.0
        %879 = vmatpush1.msra.mxu0 0.0
        %880 = vmatprep.subr.mxu0 0.0
        %881 = vmatpush1.msra.mxu0 0.0
        %882 = vmatprep.subr.mxu0 0.0
        %883 = vmatpush1.msra.mxu0 0.0
        %884 = vmatprep.subr.mxu0 0.0
        %885 = vmatpush1.msra.mxu0 0.0
        %886 = vmatprep.subr.mxu0 0.0
        %887 = vmatpush1.msra.mxu0 0.0
        %888 = vmatprep.subr.mxu0 0.0
        %889 = vmatpush1.msra.mxu0 0.0
        %890 = vmatprep.subr.mxu0 0.0
        %891 = vmatpush1.msra.mxu0 0.0
        %892 = vmatprep.subr.mxu0 0.0
        %893 = vmatpush1.msra.mxu0 0.0
        %894 = vmatprep.subr.mxu0 0.0
        %895 = vmatpush1.msra.mxu0 0.0
        %896 = vmatprep.subr.mxu0 0.0
        %897 = vmatpush1.msra.mxu0 0.0
        %898 = vmatprep.subr.mxu0 0.0
        %899 = vmatpush1.msra.mxu0 0.0
        %900 = vmatprep.subr.mxu0 0.0
        %901 = vmatpush1.msra.mxu0 0.0
        %902 = vmatprep.subr.mxu0 0.0
        %903 = vmatpush1.msra.mxu0 0.0
        %904 = vmatprep.subr.mxu0 0.0
        %905 = vmatpush1.msra.mxu0 0.0
        %906 = vmatprep.subr.mxu0 0.0
        %907 = vmatpush1.msra.mxu0 0.0
        %908 = vmatprep.subr.mxu0 0.0
        %909 = vmatpush1.msra.mxu0 0.0
        %910 = vmatprep.subr.mxu0 0.0
        %911 = vmatpush1.msra.mxu0 0.0
        %912 = vmatprep.subr.mxu0 0.0
        %913 = vmatpush1.msra.mxu0 0.0
        %914 = vmatprep.subr.mxu0 0.0
        %915 = vmatpush1.msra.mxu0 0.0
        %916 = vmatprep.subr.mxu0 0.0
        %917 = vmatpush1.msra.mxu0 0.0
        %918 = vmatprep.mubr.f32.mxu0 0.0
        %919 = vmatmul.mubr.f32.gmra.mrb[0].mxu0 %v849
        %v920 = vpop.f32.mrb[0].mxu0
        %v921 = vadd.f32 0.0, %v920
        %v922 = vpop.f32.mrb[0].mxu0
        %923 = vmatprep.mubr.f32.mxu0 0.0
        %924 = vmatmul.mubr.f32.gmra.mrb[0].mxu0 %v852
        %v925 = vpop.f32.mrb[0].mxu0
        %v926 = vadd.f32 0.0, %v925
        %v927 = vpop.f32.mrb[0].mxu0
        %928 = vdwg.mxu0
        %v930 = vsel %vm847, %v817, 0
        %v933 = vsel %vm847, %v818, 0
        %935 = vmatprep.subr.mxu0 0.0
        %936 = vmatpush1.msra.mxu0 %v819
        %937 = vmatprep.subr.mxu0 0.0
        %938 = vmatpush1.msra.mxu0 %v820
        %939 = vmatprep.subr.mxu0 0.0
        %940 = vmatpush1.msra.mxu0 %v821
        %941 = vmatprep.subr.mxu0 0.0
        %942 = vmatpush1.msra.mxu0 %v822
        %943 = vmatprep.subr.mxu0 0.0
        %944 = vmatpush1.msra.mxu0 0.0
        %945 = vmatprep.subr.mxu0 0.0
        %946 = vmatpush1.msra.mxu0 0.0
        %947 = vmatprep.subr.mxu0 0.0
        %948 = vmatpush1.msra.mxu0 0.0
        %949 = vmatprep.subr.mxu0 0.0
        %950 = vmatpush1.msra.mxu0 0.0
        %951 = vmatprep.subr.mxu0 0.0
        %952 = vmatpush1.msra.mxu0 0.0
        %953 = vmatprep.subr.mxu0 0.0
        %954 = vmatpush1.msra.mxu0 0.0
        %955 = vmatprep.subr.mxu0 0.0
        %956 = vmatpush1.msra.mxu0 0.0
        %957 = vmatprep.subr.mxu0 0.0
        %958 = vmatpush1.msra.mxu0 0.0
        %959 = vmatprep.subr.mxu0 0.0
        %960 = vmatpush1.msra.mxu0 0.0
        %961 = vmatprep.subr.mxu0 0.0
        %962 = vmatpush1.msra.mxu0 0.0
        %963 = vmatprep.subr.mxu0 0.0
        %964 = vmatpush1.msra.mxu0 0.0
        %965 = vmatprep.subr.mxu0 0.0
        %966 = vmatpush1.msra.mxu0 0.0
        %967 = vmatprep.subr.mxu0 0.0
        %968 = vmatpush1.msra.mxu0 0.0
        %969 = vmatprep.subr.mxu0 0.0
        %970 = vmatpush1.msra.mxu0 0.0
        %971 = vmatprep.subr.mxu0 0.0
        %972 = vmatpush1.msra.mxu0 0.0
        %973 = vmatprep.subr.mxu0 0.0
        %974 = vmatpush1.msra.mxu0 0.0
        %975 = vmatprep.subr.mxu0 0.0
        %976 = vmatpush1.msra.mxu0 0.0
        %977 = vmatprep.subr.mxu0 0.0
        %978 = vmatpush1.msra.mxu0 0.0
        %979 = vmatprep.subr.mxu0 0.0
        %980 = vmatpush1.msra.mxu0 0.0
        %981 = vmatprep.subr.mxu0 0.0
        %982 = vmatpush1.msra.mxu0 0.0
        %983 = vmatprep.subr.mxu0 0.0
        %984 = vmatpush1.msra.mxu0 0.0
        %985 = vmatprep.subr.mxu0 0.0
        %986 = vmatpush1.msra.mxu0 0.0
        %987 = vmatprep.subr.mxu0 0.0
        %988 = vmatpush1.msra.mxu0 0.0
        %989 = vmatprep.subr.mxu0 0.0
        %990 = vmatpush1.msra.mxu0 0.0
        %991 = vmatprep.subr.mxu0 0.0
        %992 = vmatpush1.msra.mxu0 0.0
        %993 = vmatprep.subr.mxu0 0.0
        %994 = vmatpush1.msra.mxu0 0.0
        %995 = vmatprep.subr.mxu0 0.0
        %996 = vmatpush1.msra.mxu0 0.0
        %997 = vmatprep.subr.mxu0 0.0
        %998 = vmatpush1.msra.mxu0 0.0
        %999 = vmatprep.mubr.f32.mxu0 0.0
        %1000 = vmatmul.mubr.f32.gmra.mrb[0].mxu0 %v930
        %v1001 = vpop.f32.mrb[0].mxu0
        %v1002 = vadd.f32 %v921, %v1001
        %v1003 = vpop.f32.mrb[0].mxu0
        %1004 = vmatprep.mubr.f32.mxu0 0.0
        %1005 = vmatmul.mubr.f32.gmra.mrb[0].mxu0 %v933
        %v1006 = vpop.f32.mrb[0].mxu0
        %v1007 = vadd.f32 %v926, %v1006
        %v1008 = vpop.f32.mrb[0].mxu0
        %1009 = vdwg.mxu0
        %s1010 = scalar_lea.vmem %s6, 64
        %v1011 = vld [vmem:[%s1010] sm:$0xff]
        %v1012 = vld [vmem:[%s1010 + $0x8] sm:$0xff]
        %v1013 = vld [vmem:[%s1010 + $0x10] sm:$0xff]
        %v1014 = vld [vmem:[%s1010 + $0x18] sm:$0xff]
        %v1015 = vsel %vm847, %v796, 0
        %v1017 = vsel %vm847, %v797, 0
        %1019 = vmatprep.subr.mxu0 0.0
        %1020 = vmatpush1.msra.mxu0 %v1011
        %1021 = vmatprep.subr.mxu0 0.0
        %1022 = vmatpush1.msra.mxu0 %v1012
        %1023 = vmatprep.subr.mxu0 0.0
        %1024 = vmatpush1.msra.mxu0 %v1013
        %1025 = vmatprep.subr.mxu0 0.0
        %1026 = vmatpush1.msra.mxu0 %v1014
        %1027 = vmatprep.subr.mxu0 0.0
        %1028 = vmatpush1.msra.mxu0 0.0
        %1029 = vmatprep.subr.mxu0 0.0
        %1030 = vmatpush1.msra.mxu0 0.0
        %1031 = vmatprep.subr.mxu0 0.0
        %1032 = vmatpush1.msra.mxu0 0.0
        %1033 = vmatprep.subr.mxu0 0.0
        %1034 = vmatpush1.msra.mxu0 0.0
        %1035 = vmatprep.subr.mxu0 0.0
        %1036 = vmatpush1.msra.mxu0 0.0
        %1037 = vmatprep.subr.mxu0 0.0
        %1038 = vmatpush1.msra.mxu0 0.0
        %1039 = vmatprep.subr.mxu0 0.0
        %1040 = vmatpush1.msra.mxu0 0.0
        %1041 = vmatprep.subr.mxu0 0.0
        %1042 = vmatpush1.msra.mxu0 0.0
        %1043 = vmatprep.subr.mxu0 0.0
        %1044 = vmatpush1.msra.mxu0 0.0
        %1045 = vmatprep.subr.mxu0 0.0
        %1046 = vmatpush1.msra.mxu0 0.0
        %1047 = vmatprep.subr.mxu0 0.0
        %1048 = vmatpush1.msra.mxu0 0.0
        %1049 = vmatprep.subr.mxu0 0.0
        %1050 = vmatpush1.msra.mxu0 0.0
        %1051 = vmatprep.subr.mxu0 0.0
        %1052 = vmatpush1.msra.mxu0 0.0
        %1053 = vmatprep.subr.mxu0 0.0
        %1054 = vmatpush1.msra.mxu0 0.0
        %1055 = vmatprep.subr.mxu0 0.0
        %1056 = vmatpush1.msra.mxu0 0.0
        %1057 = vmatprep.subr.mxu0 0.0
        %1058 = vmatpush1.msra.mxu0 0.0
        %1059 = vmatprep.subr.mxu0 0.0
        %1060 = vmatpush1.msra.mxu0 0.0
        %1061 = vmatprep.subr.mxu0 0.0
        %1062 = vmatpush1.msra.mxu0 0.0
        %1063 = vmatprep.subr.mxu0 0.0
        %1064 = vmatpush1.msra.mxu0 0.0
        %1065 = vmatprep.subr.mxu0 0.0
        %1066 = vmatpush1.msra.mxu0 0.0
        %1067 = vmatprep.subr.mxu0 0.0
        %1068 = vmatpush1.msra.mxu0 0.0
        %1069 = vmatprep.subr.mxu0 0.0
        %1070 = vmatpush1.msra.mxu0 0.0
        %1071 = vmatprep.subr.mxu0 0.0
        %1072 = vmatpush1.msra.mxu0 0.0
        %1073 = vmatprep.subr.mxu0 0.0
        %1074 = vmatpush1.msra.mxu0 0.0
        %1075 = vmatprep.subr.mxu0 0.0
        %1076 = vmatpush1.msra.mxu0 0.0
        %1077 = vmatprep.subr.mxu0 0.0
        %1078 = vmatpush1.msra.mxu0 0.0
        %1079 = vmatprep.subr.mxu0 0.0
        %1080 = vmatpush1.msra.mxu0 0.0
        %1081 = vmatprep.subr.mxu0 0.0
        %1082 = vmatpush1.msra.mxu0 0.0
        %1083 = vmatprep.mubr.f32.mxu0 0.0
        %1084 = vmatmul.mubr.f32.gmra.mrb[0].mxu0 %v1015
        %v1085 = vpop.f32.mrb[0].mxu0
        %v1086 = vadd.f32 0.0, %v1085
        %v1087 = vpop.f32.mrb[0].mxu0
        %1088 = vmatprep.mubr.f32.mxu0 0.0
        %1089 = vmatmul.mubr.f32.gmra.mrb[0].mxu0 %v1017
        %v1090 = vpop.f32.mrb[0].mxu0
        %v1091 = vadd.f32 0.0, %v1090
        %v1092 = vpop.f32.mrb[0].mxu0
        %1093 = vdwg.mxu0
        %v1094 = vadd.f32 %v1002, %v1086
        %v1095 = vadd.f32 %v1007, %v1091
        %vm1096 = vcmask 1046528
        %v1097 = vrot.slane %v796, 1
        %v1098 = vrot.slane %v797, 1
        %v1099 = vsel %vm1096, %v1097, %v1098
        %v1102 = vsel %vm1096, %v1098, 0.0
        %1104 = vset.pattern.permute.xlu0 0
        %1105 = vperm.xlu0 %1104, %v786
        %v1106 = vpop.permute.xlu0 %1105
        %1109 = vset.pattern.permute.xlu0 0
        %1110 = vperm.xlu0 %1109, %v787
        %v1111 = vpop.permute.xlu0 %1110
        %v1113 = vmul.f32 %v1099, %v1106
        %v1114 = vmul.f32 %v1102, %v1111
        %s1115 = scalar_lea.vmem %s6, 96
        %v1116 = vld [vmem:[%s1115] sm:$0xff]
        %v1117 = vld [vmem:[%s1115 + $0x8] sm:$0xff]
        %v1118 = vld [vmem:[%s1115 + $0x10] sm:$0xff]
        %v1119 = vld [vmem:[%s1115 + $0x18] sm:$0xff]
        %v1121 = vsel %vm847, %v1113, 0
        %v1124 = vsel %vm847, %v1114, 0
        %1126 = vmatprep.subr.mxu0 0.0
        %1127 = vmatpush1.msra.mxu0 %v1116
        %1128 = vmatprep.subr.mxu0 0.0
        %1129 = vmatpush1.msra.mxu0 %v1117
        %1130 = vmatprep.subr.mxu0 0.0
        %1131 = vmatpush1.msra.mxu0 %v1118
        %1132 = vmatprep.subr.mxu0 0.0
        %1133 = vmatpush1.msra.mxu0 %v1119
        %1134 = vmatprep.subr.mxu0 0.0
        %1135 = vmatpush1.msra.mxu0 0.0
        %1136 = vmatprep.subr.mxu0 0.0
        %1137 = vmatpush1.msra.mxu0 0.0
        %1138 = vmatprep.subr.mxu0 0.0
        %1139 = vmatpush1.msra.mxu0 0.0
        %1140 = vmatprep.subr.mxu0 0.0
        %1141 = vmatpush1.msra.mxu0 0.0
        %1142 = vmatprep.subr.mxu0 0.0
        %1143 = vmatpush1.msra.mxu0 0.0
        %1144 = vmatprep.subr.mxu0 0.0
        %1145 = vmatpush1.msra.mxu0 0.0
        %1146 = vmatprep.subr.mxu0 0.0
        %1147 = vmatpush1.msra.mxu0 0.0
        %1148 = vmatprep.subr.mxu0 0.0
        %1149 = vmatpush1.msra.mxu0 0.0
        %1150 = vmatprep.subr.mxu0 0.0
        %1151 = vmatpush1.msra.mxu0 0.0
        %1152 = vmatprep.subr.mxu0 0.0
        %1153 = vmatpush1.msra.mxu0 0.0
        %1154 = vmatprep.subr.mxu0 0.0
        %1155 = vmatpush1.msra.mxu0 0.0
        %1156 = vmatprep.subr.mxu0 0.0
        %1157 = vmatpush1.msra.mxu0 0.0
        %1158 = vmatprep.subr.mxu0 0.0
        %1159 = vmatpush1.msra.mxu0 0.0
        %1160 = vmatprep.subr.mxu0 0.0
        %1161 = vmatpush1.msra.mxu0 0.0
        %1162 = vmatprep.subr.mxu0 0.0
        %1163 = vmatpush1.msra.mxu0 0.0
        %1164 = vmatprep.subr.mxu0 0.0
        %1165 = vmatpush1.msra.mxu0 0.0
        %1166 = vmatprep.subr.mxu0 0.0
        %1167 = vmatpush1.msra.mxu0 0.0
        %1168 = vmatprep.subr.mxu0 0.0
        %1169 = vmatpush1.msra.mxu0 0.0
        %1170 = vmatprep.subr.mxu0 0.0
        %1171 = vmatpush1.msra.mxu0 0.0
        %1172 = vmatprep.subr.mxu0 0.0
        %1173 = vmatpush1.msra.mxu0 0.0
        %1174 = vmatprep.subr.mxu0 0.0
        %1175 = vmatpush1.msra.mxu0 0.0
        %1176 = vmatprep.subr.mxu0 0.0
        %1177 = vmatpush1.msra.mxu0 0.0
        %1178 = vmatprep.subr.mxu0 0.0
        %1179 = vmatpush1.msra.mxu0 0.0
        %1180 = vmatprep.subr.mxu0 0.0
        %1181 = vmatpush1.msra.mxu0 0.0
        %1182 = vmatprep.subr.mxu0 0.0
        %1183 = vmatpush1.msra.mxu0 0.0
        %1184 = vmatprep.subr.mxu0 0.0
        %1185 = vmatpush1.msra.mxu0 0.0
        %1186 = vmatprep.subr.mxu0 0.0
        %1187 = vmatpush1.msra.mxu0 0.0
        %1188 = vmatprep.subr.mxu0 0.0
        %1189 = vmatpush1.msra.mxu0 0.0
        %1190 = vmatprep.mubr.f32.mxu0 0.0
        %1191 = vmatmul.mubr.f32.gmra.mrb[0].mxu0 %v1121
        %v1192 = vpop.f32.mrb[0].mxu0
        %v1193 = vadd.f32 0.0, %v1192
        %v1194 = vpop.f32.mrb[0].mxu0
        %1195 = vmatprep.mubr.f32.mxu0 0.0
        %1196 = vmatmul.mubr.f32.gmra.mrb[0].mxu0 %v1124
        %v1197 = vpop.f32.mrb[0].mxu0
        %v1198 = vadd.f32 0.0, %v1197
        %v1199 = vpop.f32.mrb[0].mxu0
        %1200 = vdwg.mxu0
        %v1201 = vadd.f32 %v1094, %v1193
        %v1202 = vadd.f32 %v1095, %v1198
        %vm1203 = vcmask 1045504
        %v1204 = vrot.slane %v796, 2
        %v1205 = vrot.slane %v797, 2
        %v1206 = vsel %vm1203, %v1204, %v1205
        %v1209 = vsel %vm1203, %v1205, 0.0
        %1211 = vset.pattern.permute.xlu0 0
        %1212 = vperm.xlu0 %1211, %v789
        %v1213 = vpop.permute.xlu0 %1212
        %1216 = vset.pattern.permute.xlu0 0
        %1217 = vperm.xlu0 %1216, %v790
        %v1218 = vpop.permute.xlu0 %1217
        %v1220 = vmul.f32 %v1206, %v1213
        %v1221 = vmul.f32 %v1209, %v1218
        %s1222 = scalar_lea.vmem %s6, 128
        %v1223 = vld [vmem:[%s1222] sm:$0xff]
        %v1224 = vld [vmem:[%s1222 + $0x8] sm:$0xff]
        %v1225 = vld [vmem:[%s1222 + $0x10] sm:$0xff]
        %v1226 = vld [vmem:[%s1222 + $0x18] sm:$0xff]
        %v1228 = vsel %vm847, %v1220, 0
        %v1231 = vsel %vm847, %v1221, 0
        %1233 = vmatprep.subr.mxu0 0.0
        %1234 = vmatpush1.msra.mxu0 %v1223
        %1235 = vmatprep.subr.mxu0 0.0
        %1236 = vmatpush1.msra.mxu0 %v1224
        %1237 = vmatprep.subr.mxu0 0.0
        %1238 = vmatpush1.msra.mxu0 %v1225
        %1239 = vmatprep.subr.mxu0 0.0
        %1240 = vmatpush1.msra.mxu0 %v1226
        %1241 = vmatprep.subr.mxu0 0.0
        %1242 = vmatpush1.msra.mxu0 0.0
        %1243 = vmatprep.subr.mxu0 0.0
        %1244 = vmatpush1.msra.mxu0 0.0
        %1245 = vmatprep.subr.mxu0 0.0
        %1246 = vmatpush1.msra.mxu0 0.0
        %1247 = vmatprep.subr.mxu0 0.0
        %1248 = vmatpush1.msra.mxu0 0.0
        %1249 = vmatprep.subr.mxu0 0.0
        %1250 = vmatpush1.msra.mxu0 0.0
        %1251 = vmatprep.subr.mxu0 0.0
        %1252 = vmatpush1.msra.mxu0 0.0
        %1253 = vmatprep.subr.mxu0 0.0
        %1254 = vmatpush1.msra.mxu0 0.0
        %1255 = vmatprep.subr.mxu0 0.0
        %1256 = vmatpush1.msra.mxu0 0.0
        %1257 = vmatprep.subr.mxu0 0.0
        %1258 = vmatpush1.msra.mxu0 0.0
        %1259 = vmatprep.subr.mxu0 0.0
        %1260 = vmatpush1.msra.mxu0 0.0
        %1261 = vmatprep.subr.mxu0 0.0
        %1262 = vmatpush1.msra.mxu0 0.0
        %1263 = vmatprep.subr.mxu0 0.0
        %1264 = vmatpush1.msra.mxu0 0.0
        %1265 = vmatprep.subr.mxu0 0.0
        %1266 = vmatpush1.msra.mxu0 0.0
        %1267 = vmatprep.subr.mxu0 0.0
        %1268 = vmatpush1.msra.mxu0 0.0
        %1269 = vmatprep.subr.mxu0 0.0
        %1270 = vmatpush1.msra.mxu0 0.0
        %1271 = vmatprep.subr.mxu0 0.0
        %1272 = vmatpush1.msra.mxu0 0.0
        %1273 = vmatprep.subr.mxu0 0.0
        %1274 = vmatpush1.msra.mxu0 0.0
        %1275 = vmatprep.subr.mxu0 0.0
        %1276 = vmatpush1.msra.mxu0 0.0
        %1277 = vmatprep.subr.mxu0 0.0
        %1278 = vmatpush1.msra.mxu0 0.0
        %1279 = vmatprep.subr.mxu0 0.0
        %1280 = vmatpush1.msra.mxu0 0.0
        %1281 = vmatprep.subr.mxu0 0.0
        %1282 = vmatpush1.msra.mxu0 0.0
        %1283 = vmatprep.subr.mxu0 0.0
        %1284 = vmatpush1.msra.mxu0 0.0
        %1285 = vmatprep.subr.mxu0 0.0
        %1286 = vmatpush1.msra.mxu0 0.0
        %1287 = vmatprep.subr.mxu0 0.0
        %1288 = vmatpush1.msra.mxu0 0.0
        %1289 = vmatprep.subr.mxu0 0.0
        %1290 = vmatpush1.msra.mxu0 0.0
        %1291 = vmatprep.subr.mxu0 0.0
        %1292 = vmatpush1.msra.mxu0 0.0
        %1293 = vmatprep.subr.mxu0 0.0
        %1294 = vmatpush1.msra.mxu0 0.0
        %1295 = vmatprep.subr.mxu0 0.0
        %1296 = vmatpush1.msra.mxu0 0.0
        %1297 = vmatprep.mubr.f32.mxu0 0.0
        %1298 = vmatmul.mubr.f32.gmra.mrb[0].mxu0 %v1228
        %v1299 = vpop.f32.mrb[0].mxu0
        %v1300 = vadd.f32 0.0, %v1299
        %v1301 = vpop.f32.mrb[0].mxu0
        %1302 = vmatprep.mubr.f32.mxu0 0.0
        %1303 = vmatmul.mubr.f32.gmra.mrb[0].mxu0 %v1231
        %v1304 = vpop.f32.mrb[0].mxu0
        %v1305 = vadd.f32 0.0, %v1304
        %v1306 = vpop.f32.mrb[0].mxu0
        %1307 = vdwg.mxu0
        %v1308 = vadd.f32 %v1201, %v1300
        %v1309 = vadd.f32 %v1202, %v1305
        %v1310 = vld [vmem:[%s7] sm:$0x1]
        %v1312 = vlaneseq
        %v1313 = vshrl.u32 %v1312, 7
        %v1314 = vsub.s32 0, %v1313
        %v1315 = vrot.slane %v1310, %v1314
        %v1317 = vadd.f32 %v1308, %v1315
        %v1318 = vadd.f32 %v1309, %v1315
        %v1319 = vld [vmem:[%s762] sm:$0xff]
        %v1320 = vld [vmem:[%s762 + $0x8] sm:$0xff]
        %v1321 = vld [vmem:[%s8] sm:$0xff]
        %v1322 = vld [vmem:[%s8 + $0x8] sm:$0xff]
        %vm1323 = vcmask 130048
        %v1325 = vsel %vm1323, %v1319, 0
        %v1328 = vsel %vm1323, %v1320, 0
        %1330 = vmatprep.subr.mxu0 0.0
        %1331 = vmatpush1.msra.mxu0 %v1321
        %1332 = vmatprep.subr.mxu0 0.0
        %1333 = vmatpush1.msra.mxu0 %v1322
        %1334 = vmatprep.subr.mxu0 0.0
        %1335 = vmatpush1.msra.mxu0 0.0
        %1336 = vmatprep.subr.mxu0 0.0
        %1337 = vmatpush1.msra.mxu0 0.0
        %1338 = vmatprep.subr.mxu0 0.0
        %1339 = vmatpush1.msra.mxu0 0.0
        %1340 = vmatprep.subr.mxu0 0.0
        %1341 = vmatpush1.msra.mxu0 0.0
        %1342 = vmatprep.subr.mxu0 0.0
        %1343 = vmatpush1.msra.mxu0 0.0
        %1344 = vmatprep.subr.mxu0 0.0
        %1345 = vmatpush1.msra.mxu0 0.0
        %1346 = vmatprep.subr.mxu0 0.0
        %1347 = vmatpush1.msra.mxu0 0.0
        %1348 = vmatprep.subr.mxu0 0.0
        %1349 = vmatpush1.msra.mxu0 0.0
        %1350 = vmatprep.subr.mxu0 0.0
        %1351 = vmatpush1.msra.mxu0 0.0
        %1352 = vmatprep.subr.mxu0 0.0
        %1353 = vmatpush1.msra.mxu0 0.0
        %1354 = vmatprep.subr.mxu0 0.0
        %1355 = vmatpush1.msra.mxu0 0.0
        %1356 = vmatprep.subr.mxu0 0.0
        %1357 = vmatpush1.msra.mxu0 0.0
        %1358 = vmatprep.subr.mxu0 0.0
        %1359 = vmatpush1.msra.mxu0 0.0
        %1360 = vmatprep.subr.mxu0 0.0
        %1361 = vmatpush1.msra.mxu0 0.0
        %1362 = vmatprep.subr.mxu0 0.0
        %1363 = vmatpush1.msra.mxu0 0.0
        %1364 = vmatprep.subr.mxu0 0.0
        %1365 = vmatpush1.msra.mxu0 0.0
        %1366 = vmatprep.subr.mxu0 0.0
        %1367 = vmatpush1.msra.mxu0 0.0
        %1368 = vmatprep.subr.mxu0 0.0
        %1369 = vmatpush1.msra.mxu0 0.0
        %1370 = vmatprep.subr.mxu0 0.0
        %1371 = vmatpush1.msra.mxu0 0.0
        %1372 = vmatprep.subr.mxu0 0.0
        %1373 = vmatpush1.msra.mxu0 0.0
        %1374 = vmatprep.subr.mxu0 0.0
        %1375 = vmatpush1.msra.mxu0 0.0
        %1376 = vmatprep.subr.mxu0 0.0
        %1377 = vmatpush1.msra.mxu0 0.0
        %1378 = vmatprep.subr.mxu0 0.0
        %1379 = vmatpush1.msra.mxu0 0.0
        %1380 = vmatprep.subr.mxu0 0.0
        %1381 = vmatpush1.msra.mxu0 0.0
        %1382 = vmatprep.subr.mxu0 0.0
        %1383 = vmatpush1.msra.mxu0 0.0
        %1384 = vmatprep.subr.mxu0 0.0
        %1385 = vmatpush1.msra.mxu0 0.0
        %1386 = vmatprep.subr.mxu0 0.0
        %1387 = vmatpush1.msra.mxu0 0.0
        %1388 = vmatprep.subr.mxu0 0.0
        %1389 = vmatpush1.msra.mxu0 0.0
        %1390 = vmatprep.subr.mxu0 0.0
        %1391 = vmatpush1.msra.mxu0 0.0
        %1392 = vmatprep.subr.mxu0 0.0
        %1393 = vmatpush1.msra.mxu0 0.0
        %1394 = vmatprep.mubr.f32.mxu0 0.0
        %1395 = vmatmul.mubr.f32.gmra.mrb[0].mxu0 %v1325
        %v1396 = vpop.f32.mrb[0].mxu0
        %v1397 = vadd.f32 0.0, %v1396
        %v1398 = vpop.f32.mrb[0].mxu0
        %1399 = vmatprep.mubr.f32.mxu0 0.0
        %1400 = vmatmul.mubr.f32.gmra.mrb[0].mxu0 %v1328
        %v1401 = vpop.f32.mrb[0].mxu0
        %v1402 = vadd.f32 0.0, %v1401
        %v1403 = vpop.f32.mrb[0].mxu0
        %1404 = vdwg.mxu0
        %v1405 = vadd.f32 %v1317, %v1397
        %v1406 = vadd.f32 %v1318, %v1402
        %v1407 = vld [vmem:[%s9] sm:$0x1]
        %v1409 = vlaneseq
        %v1410 = vshrl.u32 %v1409, 7
        %v1411 = vsub.s32 0, %v1410
        %v1412 = vrot.slane %v1407, %v1411
        %v1414 = vadd.f32 %v1405, %v1412
        %v1415 = vadd.f32 %v1406, %v1412
        %1417 = vset.pattern.permute.xlu0 0
        %1418 = vperm.xlu0 %1417, %v776
        %v1419 = vpop.permute.xlu0 %1418
        %1422 = vset.pattern.permute.xlu0 0
        %1423 = vperm.xlu0 %1422, %v777
        %v1424 = vpop.permute.xlu0 %1423
        %v1426 = vmul.f32 %v1414, %v1419
        %v1427 = vmul.f32 %v1415, %v1424
        %v1428 = vld [vmem:[%s10] sm:$0xff]
        %v1429 = vld [vmem:[%s10 + $0x8] sm:$0xff]
        %v1430 = vld [vmem:[%s10 + $0x10] sm:$0xff]
        %v1431 = vld [vmem:[%s10 + $0x18] sm:$0xff]
        %v1432 = vld [vmem:[%s11] sm:$0x1]
        %v1434 = vlaneseq
        %v1435 = vshrl.u32 %v1434, 7
        %v1436 = vsub.s32 0, %v1435
        %v1437 = vrot.slane %v1432, %v1436
        %v1440 = vsel %vm847, %v1426, 0
        %v1443 = vsel %vm847, %v1427, 0
        %1445 = vmatprep.subr.mxu0 0.0
        %1446 = vmatpush1.msra.mxu0 %v1428
        %1447 = vmatprep.subr.mxu0 0.0
        %1448 = vmatpush1.msra.mxu0 %v1429
        %1449 = vmatprep.subr.mxu0 0.0
        %1450 = vmatpush1.msra.mxu0 %v1430
        %1451 = vmatprep.subr.mxu0 0.0
        %1452 = vmatpush1.msra.mxu0 %v1431
        %1453 = vmatprep.subr.mxu0 0.0
        %1454 = vmatpush1.msra.mxu0 0.0
        %1455 = vmatprep.subr.mxu0 0.0
        %1456 = vmatpush1.msra.mxu0 0.0
        %1457 = vmatprep.subr.mxu0 0.0
        %1458 = vmatpush1.msra.mxu0 0.0
        %1459 = vmatprep.subr.mxu0 0.0
        %1460 = vmatpush1.msra.mxu0 0.0
        %1461 = vmatprep.subr.mxu0 0.0
        %1462 = vmatpush1.msra.mxu0 0.0
        %1463 = vmatprep.subr.mxu0 0.0
        %1464 = vmatpush1.msra.mxu0 0.0
        %1465 = vmatprep.subr.mxu0 0.0
        %1466 = vmatpush1.msra.mxu0 0.0
        %1467 = vmatprep.subr.mxu0 0.0
        %1468 = vmatpush1.msra.mxu0 0.0
        %1469 = vmatprep.subr.mxu0 0.0
        %1470 = vmatpush1.msra.mxu0 0.0
        %1471 = vmatprep.subr.mxu0 0.0
        %1472 = vmatpush1.msra.mxu0 0.0
        %1473 = vmatprep.subr.mxu0 0.0
        %1474 = vmatpush1.msra.mxu0 0.0
        %1475 = vmatprep.subr.mxu0 0.0
        %1476 = vmatpush1.msra.mxu0 0.0
        %1477 = vmatprep.subr.mxu0 0.0
        %1478 = vmatpush1.msra.mxu0 0.0
        %1479 = vmatprep.subr.mxu0 0.0
        %1480 = vmatpush1.msra.mxu0 0.0
        %1481 = vmatprep.subr.mxu0 0.0
        %1482 = vmatpush1.msra.mxu0 0.0
        %1483 = vmatprep.subr.mxu0 0.0
        %1484 = vmatpush1.msra.mxu0 0.0
        %1485 = vmatprep.subr.mxu0 0.0
        %1486 = vmatpush1.msra.mxu0 0.0
        %1487 = vmatprep.subr.mxu0 0.0
        %1488 = vmatpush1.msra.mxu0 0.0
        %1489 = vmatprep.subr.mxu0 0.0
        %1490 = vmatpush1.msra.mxu0 0.0
        %1491 = vmatprep.subr.mxu0 0.0
        %1492 = vmatpush1.msra.mxu0 0.0
        %1493 = vmatprep.subr.mxu0 0.0
        %1494 = vmatpush1.msra.mxu0 0.0
        %1495 = vmatprep.subr.mxu0 0.0
        %1496 = vmatpush1.msra.mxu0 0.0
        %1497 = vmatprep.subr.mxu0 0.0
        %1498 = vmatpush1.msra.mxu0 0.0
        %1499 = vmatprep.subr.mxu0 0.0
        %1500 = vmatpush1.msra.mxu0 0.0
        %1501 = vmatprep.subr.mxu0 0.0
        %1502 = vmatpush1.msra.mxu0 0.0
        %1503 = vmatprep.subr.mxu0 0.0
        %1504 = vmatpush1.msra.mxu0 0.0
        %1505 = vmatprep.subr.mxu0 0.0
        %1506 = vmatpush1.msra.mxu0 0.0
        %1507 = vmatprep.subr.mxu0 0.0
        %1508 = vmatpush1.msra.mxu0 0.0
        %1509 = vmatprep.mubr.f32.mxu0 0.0
        %1510 = vmatmul.mubr.f32.gmra.mrb[0].mxu0 %v1440
        %v1511 = vpop.f32.mrb[0].mxu0
        %v1512 = vadd.f32 %v1437, %v1511
        %v1513 = vpop.f32.mrb[0].mxu0
        %1514 = vmatprep.mubr.f32.mxu0 0.0
        %1515 = vmatmul.mubr.f32.gmra.mrb[0].mxu0 %v1443
        %v1516 = vpop.f32.mrb[0].mxu0
        %v1517 = vadd.f32 %v1437, %v1516
        %v1518 = vpop.f32.mrb[0].mxu0
        %1519 = vdwg.mxu0
        %1522 = vrot.lane.b32.xlu0 %v1512, 96
        %v1523 = vpop.permute.xlu0 %1522
        %1524 = vrot.lane.b32.xlu0 %v1517, 96
        %v1525 = vpop.permute.xlu0 %1524
        %v1526 = vsel %vm1323, %v1512, 0
        %v1528 = vsel %vm1323, %v1517, 0
        %v1530 = vsel %vm1323, %v1523, 0
        %v1532 = vsel %vm1323, %v1525, 0
        %1534 = vmatprep.subr.mxu0 0.0
        %1535 = vmatpush1.xpose.msra.mxu0 %v1530
        %1536 = vmatprep.subr.mxu0 0.0
        %1537 = vmatpush1.xpose.msra.mxu0 %v1532
        %1538 = vmatprep.subr.mxu0 0.0
        %1539 = vmatpush1.xpose.msra.mxu0 0.0
        %1540 = vmatprep.subr.mxu0 0.0
        %1541 = vmatpush1.xpose.msra.mxu0 0.0
        %1542 = vmatprep.subr.mxu0 0.0
        %1543 = vmatpush1.xpose.msra.mxu0 0.0
        %1544 = vmatprep.subr.mxu0 0.0
        %1545 = vmatpush1.xpose.msra.mxu0 0.0
        %1546 = vmatprep.subr.mxu0 0.0
        %1547 = vmatpush1.xpose.msra.mxu0 0.0
        %1548 = vmatprep.subr.mxu0 0.0
        %1549 = vmatpush1.xpose.msra.mxu0 0.0
        %1550 = vmatprep.subr.mxu0 0.0
        %1551 = vmatpush1.xpose.msra.mxu0 0.0
        %1552 = vmatprep.subr.mxu0 0.0
        %1553 = vmatpush1.xpose.msra.mxu0 0.0
        %1554 = vmatprep.subr.mxu0 0.0
        %1555 = vmatpush1.xpose.msra.mxu0 0.0
        %1556 = vmatprep.subr.mxu0 0.0
        %1557 = vmatpush1.xpose.msra.mxu0 0.0
        %1558 = vmatprep.subr.mxu0 0.0
        %1559 = vmatpush1.xpose.msra.mxu0 0.0
        %1560 = vmatprep.subr.mxu0 0.0
        %1561 = vmatpush1.xpose.msra.mxu0 0.0
        %1562 = vmatprep.subr.mxu0 0.0
        %1563 = vmatpush1.xpose.msra.mxu0 0.0
        %1564 = vmatprep.subr.mxu0 0.0
        %1565 = vmatpush1.xpose.msra.mxu0 0.0
        %1566 = vmatprep.subr.mxu0 0.0
        %1567 = vmatpush1.xpose.msra.mxu0 0.0
        %1568 = vmatprep.subr.mxu0 0.0
        %1569 = vmatpush1.xpose.msra.mxu0 0.0
        %1570 = vmatprep.subr.mxu0 0.0
        %1571 = vmatpush1.xpose.msra.mxu0 0.0
        %1572 = vmatprep.subr.mxu0 0.0
        %1573 = vmatpush1.xpose.msra.mxu0 0.0
        %1574 = vmatprep.subr.mxu0 0.0
        %1575 = vmatpush1.xpose.msra.mxu0 0.0
        %1576 = vmatprep.subr.mxu0 0.0
        %1577 = vmatpush1.xpose.msra.mxu0 0.0
        %1578 = vmatprep.subr.mxu0 0.0
        %1579 = vmatpush1.xpose.msra.mxu0 0.0
        %1580 = vmatprep.subr.mxu0 0.0
        %1581 = vmatpush1.xpose.msra.mxu0 0.0
        %1582 = vmatprep.subr.mxu0 0.0
        %1583 = vmatpush1.xpose.msra.mxu0 0.0
        %1584 = vmatprep.subr.mxu0 0.0
        %1585 = vmatpush1.xpose.msra.mxu0 0.0
        %1586 = vmatprep.subr.mxu0 0.0
        %1587 = vmatpush1.xpose.msra.mxu0 0.0
        %1588 = vmatprep.subr.mxu0 0.0
        %1589 = vmatpush1.xpose.msra.mxu0 0.0
        %1590 = vmatprep.subr.mxu0 0.0
        %1591 = vmatpush1.xpose.msra.mxu0 0.0
        %1592 = vmatprep.subr.mxu0 0.0
        %1593 = vmatpush1.xpose.msra.mxu0 0.0
        %1594 = vmatprep.subr.mxu0 0.0
        %1595 = vmatpush1.xpose.msra.mxu0 0.0
        %1596 = vmatprep.subr.mxu0 0.0
        %1597 = vmatpush1.xpose.msra.mxu0 0.0
        %1598 = vmatprep.mubr.f32.mxu0 0.0
        %1599 = vmatmul.mubr.f32.gmra.mrb[0].mxu0 %v1526
        %v1600 = vpop.f32.mrb[0].mxu0
        %v1601 = vadd.f32 0.0, %v1600
        %v1602 = vpop.f32.mrb[0].mxu0
        %1603 = vmatprep.mubr.f32.mxu0 0.0
        %1604 = vmatmul.mubr.f32.gmra.mrb[0].mxu0 %v1528
        %v1605 = vpop.f32.mrb[0].mxu0
        %v1606 = vadd.f32 0.0, %v1605
        %v1607 = vpop.f32.mrb[0].mxu0
        %1608 = vdwg.mxu0
        %v1609 = vmul.f32 %v1601, 0.25
        %v1610 = vmul.f32 %v1606, 0.25
        %v1611 = vadd.f32 %v1609, %v778
        %v1612 = vadd.f32 %v1610, %v779
        %v1613 = vsel %vm1323, %v1611, -inf
        %1614 = vmax.xlane.f32.xlu0 %v1613
        %v1615 = vpop.xlane.xlu0 %1614
        %v1616 = vsel %vm1323, %v1612, -inf
        %1617 = vmax.xlane.f32.xlu0 %v1616
        %v1618 = vpop.xlane.xlu0 %1617
        %v1619 = vsub.f32 %v1611, %v1615
        %v1620 = vsub.f32 %v1612, %v1618
        %v1621 = vmul.f32 %v1619, 1.442695
        %v1622 = vpow.pop %v1621
        %v1623 = vmul.f32 %v1620, 1.442695
        %v1624 = vpow.pop %v1623
        %v1625 = vsel %vm1323, %v1622, 0.0
        %1626 = vadd.xlane.f32.xlu0 %v1625
        %v1627 = vpop.xlane.xlu0 %1626
        %v1628 = vsel %vm1323, %v1624, 0.0
        %1629 = vadd.xlane.f32.xlu0 %v1628
        %v1630 = vpop.xlane.xlu0 %1629
        %v1631 = vrcp.pop %v1627
        %v1632 = vrcp.pop %v1630
        %v1633 = vmul.f32 %v1622, %v1631
        %v1634 = vmul.f32 %v1624, %v1632
        %1635 = vrot.lane.b32.xlu0 %v1512, 64
        %v1636 = vpop.permute.xlu0 %1635
        %1637 = vrot.lane.b32.xlu0 %v1517, 64
        %v1638 = vpop.permute.xlu0 %1637
        %v1642 = vsel %vm1323, %v1633, 0
        %v1645 = vsel %vm1323, %v1634, 0
        %1647 = vmatprep.subr.mxu0 0.0
        %1648 = vmatpush1.msra.mxu0 %v1636
        %1649 = vmatprep.subr.mxu0 0.0
        %1650 = vmatpush1.msra.mxu0 %v1638
        %1651 = vmatprep.subr.mxu0 0.0
        %1652 = vmatpush1.msra.mxu0 0.0
        %1653 = vmatprep.subr.mxu0 0.0
        %1654 = vmatpush1.msra.mxu0 0.0
        %1655 = vmatprep.subr.mxu0 0.0
        %1656 = vmatpush1.msra.mxu0 0.0
        %1657 = vmatprep.subr.mxu0 0.0
        %1658 = vmatpush1.msra.mxu0 0.0
        %1659 = vmatprep.subr.mxu0 0.0
        %1660 = vmatpush1.msra.mxu0 0.0
        %1661 = vmatprep.subr.mxu0 0.0
        %1662 = vmatpush1.msra.mxu0 0.0
        %1663 = vmatprep.subr.mxu0 0.0
        %1664 = vmatpush1.msra.mxu0 0.0
        %1665 = vmatprep.subr.mxu0 0.0
        %1666 = vmatpush1.msra.mxu0 0.0
        %1667 = vmatprep.subr.mxu0 0.0
        %1668 = vmatpush1.msra.mxu0 0.0
        %1669 = vmatprep.subr.mxu0 0.0
        %1670 = vmatpush1.msra.mxu0 0.0
        %1671 = vmatprep.subr.mxu0 0.0
        %1672 = vmatpush1.msra.mxu0 0.0
        %1673 = vmatprep.subr.mxu0 0.0
        %1674 = vmatpush1.msra.mxu0 0.0
        %1675 = vmatprep.subr.mxu0 0.0
        %1676 = vmatpush1.msra.mxu0 0.0
        %1677 = vmatprep.subr.mxu0 0.0
        %1678 = vmatpush1.msra.mxu0 0.0
        %1679 = vmatprep.subr.mxu0 0.0
        %1680 = vmatpush1.msra.mxu0 0.0
        %1681 = vmatprep.subr.mxu0 0.0
        %1682 = vmatpush1.msra.mxu0 0.0
        %1683 = vmatprep.subr.mxu0 0.0
        %1684 = vmatpush1.msra.mxu0 0.0
        %1685 = vmatprep.subr.mxu0 0.0
        %1686 = vmatpush1.msra.mxu0 0.0
        %1687 = vmatprep.subr.mxu0 0.0
        %1688 = vmatpush1.msra.mxu0 0.0
        %1689 = vmatprep.subr.mxu0 0.0
        %1690 = vmatpush1.msra.mxu0 0.0
        %1691 = vmatprep.subr.mxu0 0.0
        %1692 = vmatpush1.msra.mxu0 0.0
        %1693 = vmatprep.subr.mxu0 0.0
        %1694 = vmatpush1.msra.mxu0 0.0
        %1695 = vmatprep.subr.mxu0 0.0
        %1696 = vmatpush1.msra.mxu0 0.0
        %1697 = vmatprep.subr.mxu0 0.0
        %1698 = vmatpush1.msra.mxu0 0.0
        %1699 = vmatprep.subr.mxu0 0.0
        %1700 = vmatpush1.msra.mxu0 0.0
        %1701 = vmatprep.subr.mxu0 0.0
        %1702 = vmatpush1.msra.mxu0 0.0
        %1703 = vmatprep.subr.mxu0 0.0
        %1704 = vmatpush1.msra.mxu0 0.0
        %1705 = vmatprep.subr.mxu0 0.0
        %1706 = vmatpush1.msra.mxu0 0.0
        %1707 = vmatprep.subr.mxu0 0.0
        %1708 = vmatpush1.msra.mxu0 0.0
        %1709 = vmatprep.subr.mxu0 0.0
        %1710 = vmatpush1.msra.mxu0 0.0
        %1711 = vmatprep.mubr.f32.mxu0 0.0
        %1712 = vmatmul.mubr.f32.gmra.mrb[0].mxu0 %v1642
        %v1713 = vpop.f32.mrb[0].mxu0
        %v1714 = vadd.f32 0.0, %v1713
        %v1715 = vpop.f32.mrb[0].mxu0
        %1716 = vmatprep.mubr.f32.mxu0 0.0
        %1717 = vmatmul.mubr.f32.gmra.mrb[0].mxu0 %v1645
        %v1718 = vpop.f32.mrb[0].mxu0
        %v1719 = vadd.f32 0.0, %v1718
        %v1720 = vpop.f32.mrb[0].mxu0
        %1721 = vdwg.mxu0
        %1722 = vrot.lane.b32.xlu0 %v1512, 112
        %v1723 = vpop.permute.xlu0 %1722
        %1724 = vrot.lane.b32.xlu0 %v1517, 112
        %v1725 = vpop.permute.xlu0 %1724
        %1726 = vrot.lane.b32.xlu0 %v1512, 80
        %v1727 = vpop.permute.xlu0 %1726
        %1728 = vrot.lane.b32.xlu0 %v1517, 80
        %v1729 = vpop.permute.xlu0 %1728
        %v1730 = vsel %vm1323, %v1723, 0
        %v1732 = vsel %vm1323, %v1725, 0
        %v1734 = vsel %vm1323, %v1727, 0
        %v1736 = vsel %vm1323, %v1729, 0
        %1738 = vmatprep.subr.mxu0 0.0
        %1739 = vmatpush1.xpose.msra.mxu0 %v1734
        %1740 = vmatprep.subr.mxu0 0.0
        %1741 = vmatpush1.xpose.msra.mxu0 %v1736
        %1742 = vmatprep.subr.mxu0 0.0
        %1743 = vmatpush1.xpose.msra.mxu0 0.0
        %1744 = vmatprep.subr.mxu0 0.0
        %1745 = vmatpush1.xpose.msra.mxu0 0.0
        %1746 = vmatprep.subr.mxu0 0.0
        %1747 = vmatpush1.xpose.msra.mxu0 0.0
        %1748 = vmatprep.subr.mxu0 0.0
        %1749 = vmatpush1.xpose.msra.mxu0 0.0
        %1750 = vmatprep.subr.mxu0 0.0
        %1751 = vmatpush1.xpose.msra.mxu0 0.0
        %1752 = vmatprep.subr.mxu0 0.0
        %1753 = vmatpush1.xpose.msra.mxu0 0.0
        %1754 = vmatprep.subr.mxu0 0.0
        %1755 = vmatpush1.xpose.msra.mxu0 0.0
        %1756 = vmatprep.subr.mxu0 0.0
        %1757 = vmatpush1.xpose.msra.mxu0 0.0
        %1758 = vmatprep.subr.mxu0 0.0
        %1759 = vmatpush1.xpose.msra.mxu0 0.0
        %1760 = vmatprep.subr.mxu0 0.0
        %1761 = vmatpush1.xpose.msra.mxu0 0.0
        %1762 = vmatprep.subr.mxu0 0.0
        %1763 = vmatpush1.xpose.msra.mxu0 0.0
        %1764 = vmatprep.subr.mxu0 0.0
        %1765 = vmatpush1.xpose.msra.mxu0 0.0
        %1766 = vmatprep.subr.mxu0 0.0
        %1767 = vmatpush1.xpose.msra.mxu0 0.0
        %1768 = vmatprep.subr.mxu0 0.0
        %1769 = vmatpush1.xpose.msra.mxu0 0.0
        %1770 = vmatprep.subr.mxu0 0.0
        %1771 = vmatpush1.xpose.msra.mxu0 0.0
        %1772 = vmatprep.subr.mxu0 0.0
        %1773 = vmatpush1.xpose.msra.mxu0 0.0
        %1774 = vmatprep.subr.mxu0 0.0
        %1775 = vmatpush1.xpose.msra.mxu0 0.0
        %1776 = vmatprep.subr.mxu0 0.0
        %1777 = vmatpush1.xpose.msra.mxu0 0.0
        %1778 = vmatprep.subr.mxu0 0.0
        %1779 = vmatpush1.xpose.msra.mxu0 0.0
        %1780 = vmatprep.subr.mxu0 0.0
        %1781 = vmatpush1.xpose.msra.mxu0 0.0
        %1782 = vmatprep.subr.mxu0 0.0
        %1783 = vmatpush1.xpose.msra.mxu0 0.0
        %1784 = vmatprep.subr.mxu0 0.0
        %1785 = vmatpush1.xpose.msra.mxu0 0.0
        %1786 = vmatprep.subr.mxu0 0.0
        %1787 = vmatpush1.xpose.msra.mxu0 0.0
        %1788 = vmatprep.subr.mxu0 0.0
        %1789 = vmatpush1.xpose.msra.mxu0 0.0
        %1790 = vmatprep.subr.mxu0 0.0
        %1791 = vmatpush1.xpose.msra.mxu0 0.0
        %1792 = vmatprep.subr.mxu0 0.0
        %1793 = vmatpush1.xpose.msra.mxu0 0.0
        %1794 = vmatprep.subr.mxu0 0.0
        %1795 = vmatpush1.xpose.msra.mxu0 0.0
        %1796 = vmatprep.subr.mxu0 0.0
        %1797 = vmatpush1.xpose.msra.mxu0 0.0
        %1798 = vmatprep.subr.mxu0 0.0
        %1799 = vmatpush1.xpose.msra.mxu0 0.0
        %1800 = vmatprep.subr.mxu0 0.0
        %1801 = vmatpush1.xpose.msra.mxu0 0.0
        %1802 = vmatprep.mubr.f32.mxu0 0.0
        %1803 = vmatmul.mubr.f32.gmra.mrb[0].mxu0 %v1730
        %v1804 = vpop.f32.mrb[0].mxu0
        %v1805 = vadd.f32 0.0, %v1804
        %v1806 = vpop.f32.mrb[0].mxu0
        %1807 = vmatprep.mubr.f32.mxu0 0.0
        %1808 = vmatmul.mubr.f32.gmra.mrb[0].mxu0 %v1732
        %v1809 = vpop.f32.mrb[0].mxu0
        %v1810 = vadd.f32 0.0, %v1809
        %v1811 = vpop.f32.mrb[0].mxu0
        %1812 = vdwg.mxu0
        %v1813 = vmul.f32 %v1805, 0.25
        %v1814 = vmul.f32 %v1810, 0.25
        %v1815 = vadd.f32 %v1813, %v778
        %v1816 = vadd.f32 %v1814, %v779
        %v1817 = vsel %vm1323, %v1815, -inf
        %1818 = vmax.xlane.f32.xlu0 %v1817
        %v1819 = vpop.xlane.xlu0 %1818
        %v1820 = vsel %vm1323, %v1816, -inf
        %1821 = vmax.xlane.f32.xlu0 %v1820
        %v1822 = vpop.xlane.xlu0 %1821
        %v1823 = vsub.f32 %v1815, %v1819
        %v1824 = vsub.f32 %v1816, %v1822
        %v1825 = vmul.f32 %v1823, 1.442695
        %v1826 = vpow.pop %v1825
        %v1827 = vmul.f32 %v1824, 1.442695
        %v1828 = vpow.pop %v1827
        %v1829 = vsel %vm1323, %v1826, 0.0
        %1830 = vadd.xlane.f32.xlu0 %v1829
        %v1831 = vpop.xlane.xlu0 %1830
        %v1832 = vsel %vm1323, %v1828, 0.0
        %1833 = vadd.xlane.f32.xlu0 %v1832
        %v1834 = vpop.xlane.xlu0 %1833
        %v1835 = vrcp.pop %v1831
        %v1836 = vrcp.pop %v1834
        %v1837 = vmul.f32 %v1826, %v1835
        %v1838 = vmul.f32 %v1828, %v1836
        %1839 = vrot.lane.b32.xlu0 %v1512, 48
        %v1840 = vpop.permute.xlu0 %1839
        %1841 = vrot.lane.b32.xlu0 %v1517, 48
        %v1842 = vpop.permute.xlu0 %1841
        %v1846 = vsel %vm1323, %v1837, 0
        %v1849 = vsel %vm1323, %v1838, 0
        %1851 = vmatprep.subr.mxu0 0.0
        %1852 = vmatpush1.msra.mxu0 %v1840
        %1853 = vmatprep.subr.mxu0 0.0
        %1854 = vmatpush1.msra.mxu0 %v1842
        %1855 = vmatprep.subr.mxu0 0.0
        %1856 = vmatpush1.msra.mxu0 0.0
        %1857 = vmatprep.subr.mxu0 0.0
        %1858 = vmatpush1.msra.mxu0 0.0
        %1859 = vmatprep.subr.mxu0 0.0
        %1860 = vmatpush1.msra.mxu0 0.0
        %1861 = vmatprep.subr.mxu0 0.0
        %1862 = vmatpush1.msra.mxu0 0.0
        %1863 = vmatprep.subr.mxu0 0.0
        %1864 = vmatpush1.msra.mxu0 0.0
        %1865 = vmatprep.subr.mxu0 0.0
        %1866 = vmatpush1.msra.mxu0 0.0
        %1867 = vmatprep.subr.mxu0 0.0
        %1868 = vmatpush1.msra.mxu0 0.0
        %1869 = vmatprep.subr.mxu0 0.0
        %1870 = vmatpush1.msra.mxu0 0.0
        %1871 = vmatprep.subr.mxu0 0.0
        %1872 = vmatpush1.msra.mxu0 0.0
        %1873 = vmatprep.subr.mxu0 0.0
        %1874 = vmatpush1.msra.mxu0 0.0
        %1875 = vmatprep.subr.mxu0 0.0
        %1876 = vmatpush1.msra.mxu0 0.0
        %1877 = vmatprep.subr.mxu0 0.0
        %1878 = vmatpush1.msra.mxu0 0.0
        %1879 = vmatprep.subr.mxu0 0.0
        %1880 = vmatpush1.msra.mxu0 0.0
        %1881 = vmatprep.subr.mxu0 0.0
        %1882 = vmatpush1.msra.mxu0 0.0
        %1883 = vmatprep.subr.mxu0 0.0
        %1884 = vmatpush1.msra.mxu0 0.0
        %1885 = vmatprep.subr.mxu0 0.0
        %1886 = vmatpush1.msra.mxu0 0.0
        %1887 = vmatprep.subr.mxu0 0.0
        %1888 = vmatpush1.msra.mxu0 0.0
        %1889 = vmatprep.subr.mxu0 0.0
        %1890 = vmatpush1.msra.mxu0 0.0
        %1891 = vmatprep.subr.mxu0 0.0
        %1892 = vmatpush1.msra.mxu0 0.0
        %1893 = vmatprep.subr.mxu0 0.0
        %1894 = vmatpush1.msra.mxu0 0.0
        %1895 = vmatprep.subr.mxu0 0.0
        %1896 = vmatpush1.msra.mxu0 0.0
        %1897 = vmatprep.subr.mxu0 0.0
        %1898 = vmatpush1.msra.mxu0 0.0
        %1899 = vmatprep.subr.mxu0 0.0
        %1900 = vmatpush1.msra.mxu0 0.0
        %1901 = vmatprep.subr.mxu0 0.0
        %1902 = vmatpush1.msra.mxu0 0.0
        %1903 = vmatprep.subr.mxu0 0.0
        %1904 = vmatpush1.msra.mxu0 0.0
        %1905 = vmatprep.subr.mxu0 0.0
        %1906 = vmatpush1.msra.mxu0 0.0
        %1907 = vmatprep.subr.mxu0 0.0
        %1908 = vmatpush1.msra.mxu0 0.0
        %1909 = vmatprep.subr.mxu0 0.0
        %1910 = vmatpush1.msra.mxu0 0.0
        %1911 = vmatprep.subr.mxu0 0.0
        %1912 = vmatpush1.msra.mxu0 0.0
        %1913 = vmatprep.subr.mxu0 0.0
        %1914 = vmatpush1.msra.mxu0 0.0
        %1915 = vmatprep.mubr.f32.mxu0 0.0
        %1916 = vmatmul.mubr.f32.gmra.mrb[0].mxu0 %v1846
        %v1917 = vpop.f32.mrb[0].mxu0
        %v1918 = vadd.f32 0.0, %v1917
        %v1919 = vpop.f32.mrb[0].mxu0
        %1920 = vmatprep.mubr.f32.mxu0 0.0
        %1921 = vmatmul.mubr.f32.gmra.mrb[0].mxu0 %v1849
        %v1922 = vpop.f32.mrb[0].mxu0
        %v1923 = vadd.f32 0.0, %v1922
        %v1924 = vpop.f32.mrb[0].mxu0
        %1925 = vdwg.mxu0
        %1928 = vrot.lane.b32.xlu0 %v1918, 16
        %v1929 = vpop.permute.xlu0 %1928
        %1930 = vrot.lane.b32.xlu0 %v1923, 16
        %v1931 = vpop.permute.xlu0 %1930
        %v1934 = vsel %vm1323, %v1714, %v1929
        %v1935 = vsel %vm1323, %v1719, %v1931
        %v1936 = vld [vmem:[%s12] sm:$0xff]
        %v1937 = vld [vmem:[%s12 + $0x8] sm:$0xff]
        %v1938 = vld [vmem:[%s12 + $0x10] sm:$0xff]
        %v1939 = vld [vmem:[%s12 + $0x18] sm:$0xff]
        %v1940 = vld [vmem:[%s13] sm:$0x1]
        %v1942 = vlaneseq
        %v1943 = vshrl.u32 %v1942, 7
        %v1944 = vsub.s32 0, %v1943
        %v1945 = vrot.slane %v1940, %v1944
        %v1948 = vsel %vm847, %v1934, 0
        %v1951 = vsel %vm847, %v1935, 0
        %1953 = vmatprep.subr.mxu0 0.0
        %1954 = vmatpush1.msra.mxu0 %v1936
        %1955 = vmatprep.subr.mxu0 0.0
        %1956 = vmatpush1.msra.mxu0 %v1937
        %1957 = vmatprep.subr.mxu0 0.0
        %1958 = vmatpush1.msra.mxu0 %v1938
        %1959 = vmatprep.subr.mxu0 0.0
        %1960 = vmatpush1.msra.mxu0 %v1939
        %1961 = vmatprep.subr.mxu0 0.0
        %1962 = vmatpush1.msra.mxu0 0.0
        %1963 = vmatprep.subr.mxu0 0.0
        %1964 = vmatpush1.msra.mxu0 0.0
        %1965 = vmatprep.subr.mxu0 0.0
        %1966 = vmatpush1.msra.mxu0 0.0
        %1967 = vmatprep.subr.mxu0 0.0
        %1968 = vmatpush1.msra.mxu0 0.0
        %1969 = vmatprep.subr.mxu0 0.0
        %1970 = vmatpush1.msra.mxu0 0.0
        %1971 = vmatprep.subr.mxu0 0.0
        %1972 = vmatpush1.msra.mxu0 0.0
        %1973 = vmatprep.subr.mxu0 0.0
        %1974 = vmatpush1.msra.mxu0 0.0
        %1975 = vmatprep.subr.mxu0 0.0
        %1976 = vmatpush1.msra.mxu0 0.0
        %1977 = vmatprep.subr.mxu0 0.0
        %1978 = vmatpush1.msra.mxu0 0.0
        %1979 = vmatprep.subr.mxu0 0.0
        %1980 = vmatpush1.msra.mxu0 0.0
        %1981 = vmatprep.subr.mxu0 0.0
        %1982 = vmatpush1.msra.mxu0 0.0
        %1983 = vmatprep.subr.mxu0 0.0
        %1984 = vmatpush1.msra.mxu0 0.0
        %1985 = vmatprep.subr.mxu0 0.0
        %1986 = vmatpush1.msra.mxu0 0.0
        %1987 = vmatprep.subr.mxu0 0.0
        %1988 = vmatpush1.msra.mxu0 0.0
        %1989 = vmatprep.subr.mxu0 0.0
        %1990 = vmatpush1.msra.mxu0 0.0
        %1991 = vmatprep.subr.mxu0 0.0
        %1992 = vmatpush1.msra.mxu0 0.0
        %1993 = vmatprep.subr.mxu0 0.0
        %1994 = vmatpush1.msra.mxu0 0.0
        %1995 = vmatprep.subr.mxu0 0.0
        %1996 = vmatpush1.msra.mxu0 0.0
        %1997 = vmatprep.subr.mxu0 0.0
        %1998 = vmatpush1.msra.mxu0 0.0
        %1999 = vmatprep.subr.mxu0 0.0
        %2000 = vmatpush1.msra.mxu0 0.0
        %2001 = vmatprep.subr.mxu0 0.0
        %2002 = vmatpush1.msra.mxu0 0.0
        %2003 = vmatprep.subr.mxu0 0.0
        %2004 = vmatpush1.msra.mxu0 0.0
        %2005 = vmatprep.subr.mxu0 0.0
        %2006 = vmatpush1.msra.mxu0 0.0
        %2007 = vmatprep.subr.mxu0 0.0
        %2008 = vmatpush1.msra.mxu0 0.0
        %2009 = vmatprep.subr.mxu0 0.0
        %2010 = vmatpush1.msra.mxu0 0.0
        %2011 = vmatprep.subr.mxu0 0.0
        %2012 = vmatpush1.msra.mxu0 0.0
        %2013 = vmatprep.subr.mxu0 0.0
        %2014 = vmatpush1.msra.mxu0 0.0
        %2015 = vmatprep.subr.mxu0 0.0
        %2016 = vmatpush1.msra.mxu0 0.0
        %2017 = vmatprep.mubr.f32.mxu0 0.0
        %2018 = vmatmul.mubr.f32.gmra.mrb[0].mxu0 %v1948
        %v2019 = vpop.f32.mrb[0].mxu0
        %v2020 = vadd.f32 %v1945, %v2019
        %v2021 = vpop.f32.mrb[0].mxu0
        %2022 = vmatprep.mubr.f32.mxu0 0.0
        %2023 = vmatmul.mubr.f32.gmra.mrb[0].mxu0 %v1951
        %v2024 = vpop.f32.mrb[0].mxu0
        %v2025 = vadd.f32 %v1945, %v2024
        %v2026 = vpop.f32.mrb[0].mxu0
        %2027 = vdwg.mxu0
        %v2028 = vadd.f32 %v2020, %v1426
        %v2029 = vadd.f32 %v2025, %v1427
        %v2030 = vld [vmem:[%s14] sm:$0x1]
        %v2031 = vld [vmem:[%s15] sm:$0x1]
        %v2032 = vsel %vm847, %v2028, 0.0
        %2033 = vadd.xlane.f32.xlu0 %v2032
        %v2034 = vpop.xlane.xlu0 %2033
        %v2035 = vsel %vm847, %v2029, 0.0
        %2036 = vadd.xlane.f32.xlu0 %v2035
        %v2037 = vpop.xlane.xlu0 %2036
        %v2038 = vrcp.pop 32.0
        %v2039 = vmul.f32 %v2034, %v2038
        %v2040 = vmul.f32 %v2037, %v2038
        %v2041 = vsub.f32 %v2028, %v2039
        %v2042 = vsub.f32 %v2029, %v2040
        %v2043 = vmul.f32 %v2041, %v2041
        %v2044 = vmul.f32 %v2042, %v2042
        %v2045 = vsel %vm847, %v2043, 0.0
        %2046 = vadd.xlane.f32.xlu0 %v2045
        %v2047 = vpop.xlane.xlu0 %2046
        %v2048 = vsel %vm847, %v2044, 0.0
        %2049 = vadd.xlane.f32.xlu0 %v2048
        %v2050 = vpop.xlane.xlu0 %2049
        %v2051 = vmul.f32 %v2047, %v2038
        %v2052 = vmul.f32 %v2050, %v2038
        %v2053 = vadd.f32 %v2051, 1e-05
        %v2054 = vadd.f32 %v2052, 1e-05
        %v2055 = vrsqrt.pop %v2053
        %v2056 = vrsqrt.pop %v2054
        %v2057 = vmul.f32 %v2041, %v2055
        %v2058 = vmul.f32 %v2042, %v2056
        %v2060 = vlaneseq
        %v2061 = vshrl.u32 %v2060, 7
        %v2062 = vsub.s32 0, %v2061
        %v2063 = vrot.slane %v2030, %v2062
        %v2065 = vmul.f32 %v2057, %v2063
        %v2066 = vmul.f32 %v2058, %v2063
        %v2068 = vlaneseq
        %v2069 = vshrl.u32 %v2068, 7
        %v2070 = vsub.s32 0, %v2069
        %v2071 = vrot.slane %v2031, %v2070
        %v2073 = vadd.f32 %v2065, %v2071
        %v2074 = vadd.f32 %v2066, %v2071
        %v2075 = vmul.f32 %v2073, %v1419
        %v2076 = vmul.f32 %v2074, %v1424
        %v2079 = vrot.slane %v2075, 7
        %v2080 = vrot.slane %v2076, 7
        %v2081 = vsel %vm823, %v2079, %v2080
        %v2084 = vsel %vm823, 0.0, %v2079
        %2086 = vset.pattern.permute.xlu0 0
        %2087 = vperm.xlu0 %2086, %v791
        %v2088 = vpop.permute.xlu0 %2087
        %2091 = vset.pattern.permute.xlu0 0
        %2092 = vperm.xlu0 %2091, %v792
        %v2093 = vpop.permute.xlu0 %2092
        %v2095 = vmul.f32 %v2084, %v2088
        %v2096 = vmul.f32 %v2081, %v2093
        %v2097 = vld [vmem:[%s16] sm:$0xff]
        %v2098 = vld [vmem:[%s16 + $0x8] sm:$0xff]
        %v2099 = vld [vmem:[%s16 + $0x10] sm:$0xff]
        %v2100 = vld [vmem:[%s16 + $0x18] sm:$0xff]
        %s2101 = scalar_lea.vmem %s16, 32
        %v2102 = vld [vmem:[%s2101] sm:$0xff]
        %v2103 = vld [vmem:[%s2101 + $0x8] sm:$0xff]
        %v2104 = vld [vmem:[%s2101 + $0x10] sm:$0xff]
        %v2105 = vld [vmem:[%s2101 + $0x18] sm:$0xff]
        %v2106 = vsel %vm847, %v2075, 0
        %v2108 = vsel %vm847, %v2076, 0
        %2110 = vmatprep.subr.mxu0 0.0
        %2111 = vmatpush1.msra.mxu0 %v2102
        %2112 = vmatprep.subr.mxu0 0.0
        %2113 = vmatpush1.msra.mxu0 %v2103
        %2114 = vmatprep.subr.mxu0 0.0
        %2115 = vmatpush1.msra.mxu0 %v2104
        %2116 = vmatprep.subr.mxu0 0.0
        %2117 = vmatpush1.msra.mxu0 %v2105
        %2118 = vmatprep.subr.mxu0 0.0
        %2119 = vmatpush1.msra.mxu0 0.0
        %2120 = vmatprep.subr.mxu0 0.0
        %2121 = vmatpush1.msra.mxu0 0.0
        %2122 = vmatprep.subr.mxu0 0.0
        %2123 = vmatpush1.msra.mxu0 0.0
        %2124 = vmatprep.subr.mxu0 0.0
        %2125 = vmatpush1.msra.mxu0 0.0
        %2126 = vmatprep.subr.mxu0 0.0
        %2127 = vmatpush1.msra.mxu0 0.0
        %2128 = vmatprep.subr.mxu0 0.0
        %2129 = vmatpush1.msra.mxu0 0.0
        %2130 = vmatprep.subr.mxu0 0.0
        %2131 = vmatpush1.msra.mxu0 0.0
        %2132 = vmatprep.subr.mxu0 0.0
        %2133 = vmatpush1.msra.mxu0 0.0
        %2134 = vmatprep.subr.mxu0 0.0
        %2135 = vmatpush1.msra.mxu0 0.0
        %2136 = vmatprep.subr.mxu0 0.0
        %2137 = vmatpush1.msra.mxu0 0.0
        %2138 = vmatprep.subr.mxu0 0.0
        %2139 = vmatpush1.msra.mxu0 0.0
        %2140 = vmatprep.subr.mxu0 0.0
        %2141 = vmatpush1.msra.mxu0 0.0
        %2142 = vmatprep.subr.mxu0 0.0
        %2143 = vmatpush1.msra.mxu0 0.0
        %2144 = vmatprep.subr.mxu0 0.0
        %2145 = vmatpush1.msra.mxu0 0.0
        %2146 = vmatprep.subr.mxu0 0.0
        %2147 = vmatpush1.msra.mxu0 0.0
        %2148 = vmatprep.subr.mxu0 0.0
        %2149 = vmatpush1.msra.mxu0 0.0
        %2150 = vmatprep.subr.mxu0 0.0
        %2151 = vmatpush1.msra.mxu0 0.0
        %2152 = vmatprep.subr.mxu0 0.0
        %2153 = vmatpush1.msra.mxu0 0.0
        %2154 = vmatprep.subr.mxu0 0.0
        %2155 = vmatpush1.msra.mxu0 0.0
        %2156 = vmatprep.subr.mxu0 0.0
        %2157 = vmatpush1.msra.mxu0 0.0
        %2158 = vmatprep.subr.mxu0 0.0
        %2159 = vmatpush1.msra.mxu0 0.0
        %2160 = vmatprep.subr.mxu0 0.0
        %2161 = vmatpush1.msra.mxu0 0.0
        %2162 = vmatprep.subr.mxu0 0.0
        %2163 = vmatpush1.msra.mxu0 0.0
        %2164 = vmatprep.subr.mxu0 0.0
        %2165 = vmatpush1.msra.mxu0 0.0
        %2166 = vmatprep.subr.mxu0 0.0
        %2167 = vmatpush1.msra.mxu0 0.0
        %2168 = vmatprep.subr.mxu0 0.0
        %2169 = vmatpush1.msra.mxu0 0.0
        %2170 = vmatprep.subr.mxu0 0.0
        %2171 = vmatpush1.msra.mxu0 0.0
        %2172 = vmatprep.subr.mxu0 0.0
        %2173 = vmatpush1.msra.mxu0 0.0
        %2174 = vmatprep.mubr.f32.mxu0 0.0
        %2175 = vmatmul.mubr.f32.gmra.mrb[0].mxu0 %v2106
        %v2176 = vpop.f32.mrb[0].mxu0
        %v2177 = vadd.f32 0.0, %v2176
        %v2178 = vpop.f32.mrb[0].mxu0
        %2179 = vmatprep.mubr.f32.mxu0 0.0
        %2180 = vmatmul.mubr.f32.gmra.mrb[0].mxu0 %v2108
        %v2181 = vpop.f32.mrb[0].mxu0
        %v2182 = vadd.f32 0.0, %v2181
        %v2183 = vpop.f32.mrb[0].mxu0
        %2184 = vdwg.mxu0
        %v2186 = vsel %vm847, %v2095, 0
        %v2189 = vsel %vm847, %v2096, 0
        %2191 = vmatprep.subr.mxu0 0.0
        %2192 = vmatpush1.msra.mxu0 %v2097
        %2193 = vmatprep.subr.mxu0 0.0
        %2194 = vmatpush1.msra.mxu0 %v2098
        %2195 = vmatprep.subr.mxu0 0.0
        %2196 = vmatpush1.msra.mxu0 %v2099
        %2197 = vmatprep.subr.mxu0 0.0
        %2198 = vmatpush1.msra.mxu0 %v2100
        %2199 = vmatprep.subr.mxu0 0.0
        %2200 = vmatpush1.msra.mxu0 0.0
        %2201 = vmatprep.subr.mxu0 0.0
        %2202 = vmatpush1.msra.mxu0 0.0
        %2203 = vmatprep.subr.mxu0 0.0
        %2204 = vmatpush1.msra.mxu0 0.0
        %2205 = vmatprep.subr.mxu0 0.0
        %2206 = vmatpush1.msra.mxu0 0.0
        %2207 = vmatprep.subr.mxu0 0.0
        %2208 = vmatpush1.msra.mxu0 0.0
        %2209 = vmatprep.subr.mxu0 0.0
        %2210 = vmatpush1.msra.mxu0 0.0
        %2211 = vmatprep.subr.mxu0 0.0
        %2212 = vmatpush1.msra.mxu0 0.0
        %2213 = vmatprep.subr.mxu0 0.0
        %2214 = vmatpush1.msra.mxu0 0.0
        %2215 = vmatprep.subr.mxu0 0.0
        %2216 = vmatpush1.msra.mxu0 0.0
        %2217 = vmatprep.subr.mxu0 0.0
        %2218 = vmatpush1.msra.mxu0 0.0
        %2219 = vmatprep.subr.mxu0 0.0
        %2220 = vmatpush1.msra.mxu0 0.0
        %2221 = vmatprep.subr.mxu0 0.0
        %2222 = vmatpush1.msra.mxu0 0.0
        %2223 = vmatprep.subr.mxu0 0.0
        %2224 = vmatpush1.msra.mxu0 0.0
        %2225 = vmatprep.subr.mxu0 0.0
        %2226 = vmatpush1.msra.mxu0 0.0
        %2227 = vmatprep.subr.mxu0 0.0
        %2228 = vmatpush1.msra.mxu0 0.0
        %2229 = vmatprep.subr.mxu0 0.0
        %2230 = vmatpush1.msra.mxu0 0.0
        %2231 = vmatprep.subr.mxu0 0.0
        %2232 = vmatpush1.msra.mxu0 0.0
        %2233 = vmatprep.subr.mxu0 0.0
        %2234 = vmatpush1.msra.mxu0 0.0
        %2235 = vmatprep.subr.mxu0 0.0
        %2236 = vmatpush1.msra.mxu0 0.0
        %2237 = vmatprep.subr.mxu0 0.0
        %2238 = vmatpush1.msra.mxu0 0.0
        %2239 = vmatprep.subr.mxu0 0.0
        %2240 = vmatpush1.msra.mxu0 0.0
        %2241 = vmatprep.subr.mxu0 0.0
        %2242 = vmatpush1.msra.mxu0 0.0
        %2243 = vmatprep.subr.mxu0 0.0
        %2244 = vmatpush1.msra.mxu0 0.0
        %2245 = vmatprep.subr.mxu0 0.0
        %2246 = vmatpush1.msra.mxu0 0.0
        %2247 = vmatprep.subr.mxu0 0.0
        %2248 = vmatpush1.msra.mxu0 0.0
        %2249 = vmatprep.subr.mxu0 0.0
        %2250 = vmatpush1.msra.mxu0 0.0
        %2251 = vmatprep.subr.mxu0 0.0
        %2252 = vmatpush1.msra.mxu0 0.0
        %2253 = vmatprep.subr.mxu0 0.0
        %2254 = vmatpush1.msra.mxu0 0.0
        %2255 = vmatprep.mubr.f32.mxu0 0.0
        %2256 = vmatmul.mubr.f32.gmra.mrb[0].mxu0 %v2186
        %v2257 = vpop.f32.mrb[0].mxu0
        %v2258 = vadd.f32 %v2177, %v2257
        %v2259 = vpop.f32.mrb[0].mxu0
        %2260 = vmatprep.mubr.f32.mxu0 0.0
        %2261 = vmatmul.mubr.f32.gmra.mrb[0].mxu0 %v2189
        %v2262 = vpop.f32.mrb[0].mxu0
        %v2263 = vadd.f32 %v2182, %v2262
        %v2264 = vpop.f32.mrb[0].mxu0
        %2265 = vdwg.mxu0
        %v2266 = vrot.slane %v2075, 1
        %v2267 = vrot.slane %v2076, 1
        %v2268 = vsel %vm1096, %v2266, %v2267
        %v2271 = vsel %vm1096, %v2267, 0.0
        %2273 = vset.pattern.permute.xlu0 0
        %2274 = vperm.xlu0 %2273, %v794
        %v2275 = vpop.permute.xlu0 %2274
        %2278 = vset.pattern.permute.xlu0 0
        %2279 = vperm.xlu0 %2278, %v795
        %v2280 = vpop.permute.xlu0 %2279
        %v2282 = vmul.f32 %v2268, %v2275
        %v2283 = vmul.f32 %v2271, %v2280
        %s2284 = scalar_lea.vmem %s16, 64
        %v2285 = vld [vmem:[%s2284] sm:$0xff]
        %v2286 = vld [vmem:[%s2284 + $0x8] sm:$0xff]
        %v2287 = vld [vmem:[%s2284 + $0x10] sm:$0xff]
        %v2288 = vld [vmem:[%s2284 + $0x18] sm:$0xff]
        %v2290 = vsel %vm847, %v2282, 0
        %v2293 = vsel %vm847, %v2283, 0
        %2295 = vmatprep.subr.mxu0 0.0
        %2296 = vmatpush1.msra.mxu0 %v2285
        %2297 = vmatprep.subr.mxu0 0.0
        %2298 = vmatpush1.msra.mxu0 %v2286
        %2299 = vmatprep.subr.mxu0 0.0
        %2300 = vmatpush1.msra.mxu0 %v2287
        %2301 = vmatprep.subr.mxu0 0.0
        %2302 = vmatpush1.msra.mxu0 %v2288
        %2303 = vmatprep.subr.mxu0 0.0
        %2304 = vmatpush1.msra.mxu0 0.0
        %2305 = vmatprep.subr.mxu0 0.0
        %2306 = vmatpush1.msra.mxu0 0.0
        %2307 = vmatprep.subr.mxu0 0.0
        %2308 = vmatpush1.msra.mxu0 0.0
        %2309 = vmatprep.subr.mxu0 0.0
        %2310 = vmatpush1.msra.mxu0 0.0
        %2311 = vmatprep.subr.mxu0 0.0
        %2312 = vmatpush1.msra.mxu0 0.0
        %2313 = vmatprep.subr.mxu0 0.0
        %2314 = vmatpush1.msra.mxu0 0.0
        %2315 = vmatprep.subr.mxu0 0.0
        %2316 = vmatpush1.msra.mxu0 0.0
        %2317 = vmatprep.subr.mxu0 0.0
        %2318 = vmatpush1.msra.mxu0 0.0
        %2319 = vmatprep.subr.mxu0 0.0
        %2320 = vmatpush1.msra.mxu0 0.0
        %2321 = vmatprep.subr.mxu0 0.0
        %2322 = vmatpush1.msra.mxu0 0.0
        %2323 = vmatprep.subr.mxu0 0.0
        %2324 = vmatpush1.msra.mxu0 0.0
        %2325 = vmatprep.subr.mxu0 0.0
        %2326 = vmatpush1.msra.mxu0 0.0
        %2327 = vmatprep.subr.mxu0 0.0
        %2328 = vmatpush1.msra.mxu0 0.0
        %2329 = vmatprep.subr.mxu0 0.0
        %2330 = vmatpush1.msra.mxu0 0.0
        %2331 = vmatprep.subr.mxu0 0.0
        %2332 = vmatpush1.msra.mxu0 0.0
        %2333 = vmatprep.subr.mxu0 0.0
        %2334 = vmatpush1.msra.mxu0 0.0
        %2335 = vmatprep.subr.mxu0 0.0
        %2336 = vmatpush1.msra.mxu0 0.0
        %2337 = vmatprep.subr.mxu0 0.0
        %2338 = vmatpush1.msra.mxu0 0.0
        %2339 = vmatprep.subr.mxu0 0.0
        %2340 = vmatpush1.msra.mxu0 0.0
        %2341 = vmatprep.subr.mxu0 0.0
        %2342 = vmatpush1.msra.mxu0 0.0
        %2343 = vmatprep.subr.mxu0 0.0
        %2344 = vmatpush1.msra.mxu0 0.0
        %2345 = vmatprep.subr.mxu0 0.0
        %2346 = vmatpush1.msra.mxu0 0.0
        %2347 = vmatprep.subr.mxu0 0.0
        %2348 = vmatpush1.msra.mxu0 0.0
        %2349 = vmatprep.subr.mxu0 0.0
        %2350 = vmatpush1.msra.mxu0 0.0
        %2351 = vmatprep.subr.mxu0 0.0
        %2352 = vmatpush1.msra.mxu0 0.0
        %2353 = vmatprep.subr.mxu0 0.0
        %2354 = vmatpush1.msra.mxu0 0.0
        %2355 = vmatprep.subr.mxu0 0.0
        %2356 = vmatpush1.msra.mxu0 0.0
        %2357 = vmatprep.subr.mxu0 0.0
        %2358 = vmatpush1.msra.mxu0 0.0
        %2359 = vmatprep.mubr.f32.mxu0 0.0
        %2360 = vmatmul.mubr.f32.gmra.mrb[0].mxu0 %v2290
        %v2361 = vpop.f32.mrb[0].mxu0
        %v2362 = vadd.f32 0.0, %v2361
        %v2363 = vpop.f32.mrb[0].mxu0
        %2364 = vmatprep.mubr.f32.mxu0 0.0
        %2365 = vmatmul.mubr.f32.gmra.mrb[0].mxu0 %v2293
        %v2366 = vpop.f32.mrb[0].mxu0
        %v2367 = vadd.f32 0.0, %v2366
        %v2368 = vpop.f32.mrb[0].mxu0
        %2369 = vdwg.mxu0
        %v2370 = vadd.f32 %v2258, %v2362
        %v2371 = vadd.f32 %v2263, %v2367
        %v2372 = vld [vmem:[%s17] sm:$0x1]
        %v2374 = vlaneseq
        %v2375 = vshrl.u32 %v2374, 7
        %v2376 = vsub.s32 0, %v2375
        %v2377 = vrot.slane %v2372, %v2376
        %v2379 = vadd.f32 %v2370, %v2377
        %v2380 = vadd.f32 %v2371, %v2377
        %v2381 = vmax.f32 %v2379, 0.0
        %v2382 = vmax.f32 %v2380, 0.0
        %v2385 = vrot.slane %v2381, 7
        %v2386 = vrot.slane %v2382, 7
        %v2387 = vsel %vm823, %v2385, %v2386
        %v2390 = vsel %vm823, 0.0, %v2385
        %v2391 = vmul.f32 %v2390, %v2088
        %v2392 = vmul.f32 %v2387, %v2093
        %v2393 = vld [vmem:[%s18] sm:$0xff]
        %v2394 = vld [vmem:[%s18 + $0x8] sm:$0xff]
        %v2395 = vld [vmem:[%s18 + $0x10] sm:$0xff]
        %v2396 = vld [vmem:[%s18 + $0x18] sm:$0xff]
        %v2397 = vld [vmem:[%s18 + $0x20] sm:$0xff]
        %v2398 = vld [vmem:[%s18 + $0x28] sm:$0xff]
        %v2399 = vld [vmem:[%s18 + $0x30] sm:$0xff]
        %v2400 = vld [vmem:[%s18 + $0x38] sm:$0xff]
        %v2401 = vld [vmem:[%s18 + $0x40] sm:$0xff]
        %v2402 = vld [vmem:[%s18 + $0x48] sm:$0xff]
        %v2403 = vld [vmem:[%s18 + $0x50] sm:$0xff]
        %v2404 = vld [vmem:[%s18 + $0x58] sm:$0xff]
        %v2405 = vld [vmem:[%s18 + $0x60] sm:$0xff]
        %v2406 = vld [vmem:[%s18 + $0x68] sm:$0xff]
        %v2407 = vld [vmem:[%s18 + $0x70] sm:$0xff]
        %v2408 = vld [vmem:[%s18 + $0x78] sm:$0xff]
        %s2409 = scalar_lea.vmem %s18, 128
        %v2410 = vld [vmem:[%s2409] sm:$0xff]
        %v2411 = vld [vmem:[%s2409 + $0x8] sm:$0xff]
        %v2412 = vld [vmem:[%s2409 + $0x10] sm:$0xff]
        %v2413 = vld [vmem:[%s2409 + $0x18] sm:$0xff]
        %v2414 = vld [vmem:[%s2409 + $0x20] sm:$0xff]
        %v2415 = vld [vmem:[%s2409 + $0x28] sm:$0xff]
        %v2416 = vld [vmem:[%s2409 + $0x30] sm:$0xff]
        %v2417 = vld [vmem:[%s2409 + $0x38] sm:$0xff]
        %v2418 = vld [vmem:[%s2409 + $0x40] sm:$0xff]
        %v2419 = vld [vmem:[%s2409 + $0x48] sm:$0xff]
        %v2420 = vld [vmem:[%s2409 + $0x50] sm:$0xff]
        %v2421 = vld [vmem:[%s2409 + $0x58] sm:$0xff]
        %v2422 = vld [vmem:[%s2409 + $0x60] sm:$0xff]
        %v2423 = vld [vmem:[%s2409 + $0x68] sm:$0xff]
        %v2424 = vld [vmem:[%s2409 + $0x70] sm:$0xff]
        %v2425 = vld [vmem:[%s2409 + $0x78] sm:$0xff]
        %2426 = vmatprep.subr.mxu0 0.0
        %2427 = vmatpush1.msra.mxu0 %v2410
        %2428 = vmatprep.subr.mxu0 0.0
        %2429 = vmatpush1.msra.mxu0 %v2411
        %2430 = vmatprep.subr.mxu0 0.0
        %2431 = vmatpush1.msra.mxu0 %v2412
        %2432 = vmatprep.subr.mxu0 0.0
        %2433 = vmatpush1.msra.mxu0 %v2413
        %2434 = vmatprep.subr.mxu0 0.0
        %2435 = vmatpush1.msra.mxu0 %v2414
        %2436 = vmatprep.subr.mxu0 0.0
        %2437 = vmatpush1.msra.mxu0 %v2415
        %2438 = vmatprep.subr.mxu0 0.0
        %2439 = vmatpush1.msra.mxu0 %v2416
        %2440 = vmatprep.subr.mxu0 0.0
        %2441 = vmatpush1.msra.mxu0 %v2417
        %2442 = vmatprep.subr.mxu0 0.0
        %2443 = vmatpush1.msra.mxu0 %v2418
        %2444 = vmatprep.subr.mxu0 0.0
        %2445 = vmatpush1.msra.mxu0 %v2419
        %2446 = vmatprep.subr.mxu0 0.0
        %2447 = vmatpush1.msra.mxu0 %v2420
        %2448 = vmatprep.subr.mxu0 0.0
        %2449 = vmatpush1.msra.mxu0 %v2421
        %2450 = vmatprep.subr.mxu0 0.0
        %2451 = vmatpush1.msra.mxu0 %v2422
        %2452 = vmatprep.subr.mxu0 0.0
        %2453 = vmatpush1.msra.mxu0 %v2423
        %2454 = vmatprep.subr.mxu0 0.0
        %2455 = vmatpush1.msra.mxu0 %v2424
        %2456 = vmatprep.subr.mxu0 0.0
        %2457 = vmatpush1.msra.mxu0 %v2425
        %2458 = vmatprep.subr.mxu0 0.0
        %2459 = vmatpush1.msra.mxu0 0.0
        %2460 = vmatprep.subr.mxu0 0.0
        %2461 = vmatpush1.msra.mxu0 0.0
        %2462 = vmatprep.subr.mxu0 0.0
        %2463 = vmatpush1.msra.mxu0 0.0
        %2464 = vmatprep.subr.mxu0 0.0
        %2465 = vmatpush1.msra.mxu0 0.0
        %2466 = vmatprep.subr.mxu0 0.0
        %2467 = vmatpush1.msra.mxu0 0.0
        %2468 = vmatprep.subr.mxu0 0.0
        %2469 = vmatpush1.msra.mxu0 0.0
        %2470 = vmatprep.subr.mxu0 0.0
        %2471 = vmatpush1.msra.mxu0 0.0
        %2472 = vmatprep.subr.mxu0 0.0
        %2473 = vmatpush1.msra.mxu0 0.0
        %2474 = vmatprep.subr.mxu0 0.0
        %2475 = vmatpush1.msra.mxu0 0.0
        %2476 = vmatprep.subr.mxu0 0.0
        %2477 = vmatpush1.msra.mxu0 0.0
        %2478 = vmatprep.subr.mxu0 0.0
        %2479 = vmatpush1.msra.mxu0 0.0
        %2480 = vmatprep.subr.mxu0 0.0
        %2481 = vmatpush1.msra.mxu0 0.0
        %2482 = vmatprep.subr.mxu0 0.0
        %2483 = vmatpush1.msra.mxu0 0.0
        %2484 = vmatprep.subr.mxu0 0.0
        %2485 = vmatpush1.msra.mxu0 0.0
        %2486 = vmatprep.subr.mxu0 0.0
        %2487 = vmatpush1.msra.mxu0 0.0
        %2488 = vmatprep.subr.mxu0 0.0
        %2489 = vmatpush1.msra.mxu0 0.0
        %2490 = vmatprep.mubr.f32.mxu0 0.0
        %2491 = vmatmul.mubr.f32.gmra.mrb[0].mxu0 %v2381
        %v2492 = vpop.f32.mrb[0].mxu0
        %v2493 = vadd.f32 0.0, %v2492
        %v2494 = vpop.f32.mrb[0].mxu0
        %2495 = vmatprep.mubr.f32.mxu0 0.0
        %2496 = vmatmul.mubr.f32.gmra.mrb[0].mxu0 %v2382
        %v2497 = vpop.f32.mrb[0].mxu0
        %v2498 = vadd.f32 0.0, %v2497
        %v2499 = vpop.f32.mrb[0].mxu0
        %2500 = vdwg.mxu0
        %2501 = vmatprep.subr.mxu0 0.0
        %2502 = vmatpush1.msra.mxu0 %v2393
        %2503 = vmatprep.subr.mxu0 0.0
        %2504 = vmatpush1.msra.mxu0 %v2394
        %2505 = vmatprep.subr.mxu0 0.0
        %2506 = vmatpush1.msra.mxu0 %v2395
        %2507 = vmatprep.subr.mxu0 0.0
        %2508 = vmatpush1.msra.mxu0 %v2396
        %2509 = vmatprep.subr.mxu0 0.0
        %2510 = vmatpush1.msra.mxu0 %v2397
        %2511 = vmatprep.subr.mxu0 0.0
        %2512 = vmatpush1.msra.mxu0 %v2398
        %2513 = vmatprep.subr.mxu0 0.0
        %2514 = vmatpush1.msra.mxu0 %v2399
        %2515 = vmatprep.subr.mxu0 0.0
        %2516 = vmatpush1.msra.mxu0 %v2400
        %2517 = vmatprep.subr.mxu0 0.0
        %2518 = vmatpush1.msra.mxu0 %v2401
        %2519 = vmatprep.subr.mxu0 0.0
        %2520 = vmatpush1.msra.mxu0 %v2402
        %2521 = vmatprep.subr.mxu0 0.0
        %2522 = vmatpush1.msra.mxu0 %v2403
        %2523 = vmatprep.subr.mxu0 0.0
        %2524 = vmatpush1.msra.mxu0 %v2404
        %2525 = vmatprep.subr.mxu0 0.0
        %2526 = vmatpush1.msra.mxu0 %v2405
        %2527 = vmatprep.subr.mxu0 0.0
        %2528 = vmatpush1.msra.mxu0 %v2406
        %2529 = vmatprep.subr.mxu0 0.0
        %2530 = vmatpush1.msra.mxu0 %v2407
        %2531 = vmatprep.subr.mxu0 0.0
        %2532 = vmatpush1.msra.mxu0 %v2408
        %2533 = vmatprep.subr.mxu0 0.0
        %2534 = vmatpush1.msra.mxu0 0.0
        %2535 = vmatprep.subr.mxu0 0.0
        %2536 = vmatpush1.msra.mxu0 0.0
        %2537 = vmatprep.subr.mxu0 0.0
        %2538 = vmatpush1.msra.mxu0 0.0
        %2539 = vmatprep.subr.mxu0 0.0
        %2540 = vmatpush1.msra.mxu0 0.0
        %2541 = vmatprep.subr.mxu0 0.0
        %2542 = vmatpush1.msra.mxu0 0.0
        %2543 = vmatprep.subr.mxu0 0.0
        %2544 = vmatpush1.msra.mxu0 0.0
        %2545 = vmatprep.subr.mxu0 0.0
        %2546 = vmatpush1.msra.mxu0 0.0
        %2547 = vmatprep.subr.mxu0 0.0
        %2548 = vmatpush1.msra.mxu0 0.0
        %2549 = vmatprep.subr.mxu0 0.0
        %2550 = vmatpush1.msra.mxu0 0.0
        %2551 = vmatprep.subr.mxu0 0.0
        %2552 = vmatpush1.msra.mxu0 0.0
        %2553 = vmatprep.subr.mxu0 0.0
        %2554 = vmatpush1.msra.mxu0 0.0
        %2555 = vmatprep.subr.mxu0 0.0
        %2556 = vmatpush1.msra.mxu0 0.0
        %2557 = vmatprep.subr.mxu0 0.0
        %2558 = vmatpush1.msra.mxu0 0.0
        %2559 = vmatprep.subr.mxu0 0.0
        %2560 = vmatpush1.msra.mxu0 0.0
        %2561 = vmatprep.subr.mxu0 0.0
        %2562 = vmatpush1.msra.mxu0 0.0
        %2563 = vmatprep.subr.mxu0 0.0
        %2564 = vmatpush1.msra.mxu0 0.0
        %2565 = vmatprep.mubr.f32.mxu0 0.0
        %2566 = vmatmul.mubr.f32.gmra.mrb[0].mxu0 %v2391
        %v2567 = vpop.f32.mrb[0].mxu0
        %v2568 = vadd.f32 %v2493, %v2567
        %v2569 = vpop.f32.mrb[0].mxu0
        %2570 = vmatprep.mubr.f32.mxu0 0.0
        %2571 = vmatmul.mubr.f32.gmra.mrb[0].mxu0 %v2392
        %v2572 = vpop.f32.mrb[0].mxu0
        %v2573 = vadd.f32 %v2498, %v2572
        %v2574 = vpop.f32.mrb[0].mxu0
        %2575 = vdwg.mxu0
        %v2576 = vrot.slane %v2381, 1
        %v2577 = vrot.slane %v2382, 1
        %v2578 = vsel %vm1096, %v2576, %v2577
        %v2581 = vsel %vm1096, %v2577, 0.0
        %v2582 = vmul.f32 %v2578, %v2275
        %v2583 = vmul.f32 %v2581, %v2280
        %s2584 = scalar_lea.vmem %s18, 256
        %v2585 = vld [vmem:[%s2584] sm:$0xff]
        %v2586 = vld [vmem:[%s2584 + $0x8] sm:$0xff]
        %v2587 = vld [vmem:[%s2584 + $0x10] sm:$0xff]
        %v2588 = vld [vmem:[%s2584 + $0x18] sm:$0xff]
        %v2589 = vld [vmem:[%s2584 + $0x20] sm:$0xff]
        %v2590 = vld [vmem:[%s2584 + $0x28] sm:$0xff]
        %v2591 = vld [vmem:[%s2584 + $0x30] sm:$0xff]
        %v2592 = vld [vmem:[%s2584 + $0x38] sm:$0xff]
        %v2593 = vld [vmem:[%s2584 + $0x40] sm:$0xff]
        %v2594 = vld [vmem:[%s2584 + $0x48] sm:$0xff]
        %v2595 = vld [vmem:[%s2584 + $0x50] sm:$0xff]
        %v2596 = vld [vmem:[%s2584 + $0x58] sm:$0xff]
        %v2597 = vld [vmem:[%s2584 + $0x60] sm:$0xff]
        %v2598 = vld [vmem:[%s2584 + $0x68] sm:$0xff]
        %v2599 = vld [vmem:[%s2584 + $0x70] sm:$0xff]
        %v2600 = vld [vmem:[%s2584 + $0x78] sm:$0xff]
        %2601 = vmatprep.subr.mxu0 0.0
        %2602 = vmatpush1.msra.mxu0 %v2585
        %2603 = vmatprep.subr.mxu0 0.0
        %2604 = vmatpush1.msra.mxu0 %v2586
        %2605 = vmatprep.subr.mxu0 0.0
        %2606 = vmatpush1.msra.mxu0 %v2587
        %2607 = vmatprep.subr.mxu0 0.0
        %2608 = vmatpush1.msra.mxu0 %v2588
        %2609 = vmatprep.subr.mxu0 0.0
        %2610 = vmatpush1.msra.mxu0 %v2589
        %2611 = vmatprep.subr.mxu0 0.0
        %2612 = vmatpush1.msra.mxu0 %v2590
        %2613 = vmatprep.subr.mxu0 0.0
        %2614 = vmatpush1.msra.mxu0 %v2591
        %2615 = vmatprep.subr.mxu0 0.0
        %2616 = vmatpush1.msra.mxu0 %v2592
        %2617 = vmatprep.subr.mxu0 0.0
        %2618 = vmatpush1.msra.mxu0 %v2593
        %2619 = vmatprep.subr.mxu0 0.0
        %2620 = vmatpush1.msra.mxu0 %v2594
        %2621 = vmatprep.subr.mxu0 0.0
        %2622 = vmatpush1.msra.mxu0 %v2595
        %2623 = vmatprep.subr.mxu0 0.0
        %2624 = vmatpush1.msra.mxu0 %v2596
        %2625 = vmatprep.subr.mxu0 0.0
        %2626 = vmatpush1.msra.mxu0 %v2597
        %2627 = vmatprep.subr.mxu0 0.0
        %2628 = vmatpush1.msra.mxu0 %v2598
        %2629 = vmatprep.subr.mxu0 0.0
        %2630 = vmatpush1.msra.mxu0 %v2599
        %2631 = vmatprep.subr.mxu0 0.0
        %2632 = vmatpush1.msra.mxu0 %v2600
        %2633 = vmatprep.subr.mxu0 0.0
        %2634 = vmatpush1.msra.mxu0 0.0
        %2635 = vmatprep.subr.mxu0 0.0
        %2636 = vmatpush1.msra.mxu0 0.0
        %2637 = vmatprep.subr.mxu0 0.0
        %2638 = vmatpush1.msra.mxu0 0.0
        %2639 = vmatprep.subr.mxu0 0.0
        %2640 = vmatpush1.msra.mxu0 0.0
        %2641 = vmatprep.subr.mxu0 0.0
        %2642 = vmatpush1.msra.mxu0 0.0
        %2643 = vmatprep.subr.mxu0 0.0
        %2644 = vmatpush1.msra.mxu0 0.0
        %2645 = vmatprep.subr.mxu0 0.0
        %2646 = vmatpush1.msra.mxu0 0.0
        %2647 = vmatprep.subr.mxu0 0.0
        %2648 = vmatpush1.msra.mxu0 0.0
        %2649 = vmatprep.subr.mxu0 0.0
        %2650 = vmatpush1.msra.mxu0 0.0
        %2651 = vmatprep.subr.mxu0 0.0
        %2652 = vmatpush1.msra.mxu0 0.0
        %2653 = vmatprep.subr.mxu0 0.0
        %2654 = vmatpush1.msra.mxu0 0.0
        %2655 = vmatprep.subr.mxu0 0.0
        %2656 = vmatpush1.msra.mxu0 0.0
        %2657 = vmatprep.subr.mxu0 0.0
        %2658 = vmatpush1.msra.mxu0 0.0
        %2659 = vmatprep.subr.mxu0 0.0
        %2660 = vmatpush1.msra.mxu0 0.0
        %2661 = vmatprep.subr.mxu0 0.0
        %2662 = vmatpush1.msra.mxu0 0.0
        %2663 = vmatprep.subr.mxu0 0.0
        %2664 = vmatpush1.msra.mxu0 0.0
        %2665 = vmatprep.mubr.f32.mxu0 0.0
        %2666 = vmatmul.mubr.f32.gmra.mrb[0].mxu0 %v2582
        %v2667 = vpop.f32.mrb[0].mxu0
        %v2668 = vadd.f32 0.0, %v2667
        %v2669 = vpop.f32.mrb[0].mxu0
        %2670 = vmatprep.mubr.f32.mxu0 0.0
        %2671 = vmatmul.mubr.f32.gmra.mrb[0].mxu0 %v2583
        %v2672 = vpop.f32.mrb[0].mxu0
        %v2673 = vadd.f32 0.0, %v2672
        %v2674 = vpop.f32.mrb[0].mxu0
        %2675 = vdwg.mxu0
        %v2676 = vadd.f32 %v2568, %v2668
        %v2677 = vadd.f32 %v2573, %v2673
        %v2678 = vld [vmem:[%s19] sm:$0x1]
        %v2680 = vlaneseq
        %v2681 = vshrl.u32 %v2680, 7
        %v2682 = vsub.s32 0, %v2681
        %v2683 = vrot.slane %v2678, %v2682
        %v2685 = vadd.f32 %v2676, %v2683
        %v2686 = vadd.f32 %v2677, %v2683
        %v2687 = vadd.f32 %v2685, %v2075
        %v2688 = vadd.f32 %v2686, %v2076
        %v2689 = vld [vmem:[%s20] sm:$0x1]
        %v2690 = vld [vmem:[%s21] sm:$0x1]
        %v2691 = vsel %vm847, %v2687, 0.0
        %2692 = vadd.xlane.f32.xlu0 %v2691
        %v2693 = vpop.xlane.xlu0 %2692
        %v2694 = vsel %vm847, %v2688, 0.0
        %2695 = vadd.xlane.f32.xlu0 %v2694
        %v2696 = vpop.xlane.xlu0 %2695
        %v2697 = vmul.f32 %v2693, %v2038
        %v2698 = vmul.f32 %v2696, %v2038
        %v2699 = vsub.f32 %v2687, %v2697
        %v2700 = vsub.f32 %v2688, %v2698
        %v2701 = vmul.f32 %v2699, %v2699
        %v2702 = vmul.f32 %v2700, %v2700
        %v2703 = vsel %vm847, %v2701, 0.0
        %2704 = vadd.xlane.f32.xlu0 %v2703
        %v2705 = vpop.xlane.xlu0 %2704
        %v2706 = vsel %vm847, %v2702, 0.0
        %2707 = vadd.xlane.f32.xlu0 %v2706
        %v2708 = vpop.xlane.xlu0 %2707
        %v2709 = vmul.f32 %v2705, %v2038
        %v2710 = vmul.f32 %v2708, %v2038
        %v2711 = vadd.f32 %v2709, 1e-05
        %v2712 = vadd.f32 %v2710, 1e-05
        %v2713 = vrsqrt.pop %v2711
        %v2714 = vrsqrt.pop %v2712
        %v2715 = vmul.f32 %v2699, %v2713
        %v2716 = vmul.f32 %v2700, %v2714
        %v2718 = vlaneseq
        %v2719 = vshrl.u32 %v2718, 7
        %v2720 = vsub.s32 0, %v2719
        %v2721 = vrot.slane %v2689, %v2720
        %v2723 = vmul.f32 %v2715, %v2721
        %v2724 = vmul.f32 %v2716, %v2721
        %v2726 = vlaneseq
        %v2727 = vshrl.u32 %v2726, 7
        %v2728 = vsub.s32 0, %v2727
        %v2729 = vrot.slane %v2690, %v2728
        %v2731 = vadd.f32 %v2723, %v2729
        %v2732 = vadd.f32 %v2724, %v2729
        %v2733 = vmul.f32 %v2731, %v1419
        %v2734 = vmul.f32 %v2732, %v1424
        %s2735 = scalar_lea.vmem %s10, 32
        %v2736 = vld [vmem:[%s2735] sm:$0xff]
        %v2737 = vld [vmem:[%s2735 + $0x8] sm:$0xff]
        %v2738 = vld [vmem:[%s2735 + $0x10] sm:$0xff]
        %v2739 = vld [vmem:[%s2735 + $0x18] sm:$0xff]
        %s2740 = scalar_lea.vmem %s11, 1
        %v2741 = vld [vmem:[%s2740] sm:$0x1]
        %v2743 = vlaneseq
        %v2744 = vshrl.u32 %v2743, 7
        %v2745 = vsub.s32 0, %v2744
        %v2746 = vrot.slane %v2741, %v2745
        %v2749 = vsel %vm847, %v2733, 0
        %v2752 = vsel %vm847, %v2734, 0
        %2754 = vmatprep.subr.mxu0 0.0
        %2755 = vmatpush1.msra.mxu0 %v2736
        %2756 = vmatprep.subr.mxu0 0.0
        %2757 = vmatpush1.msra.mxu0 %v2737
        %2758 = vmatprep.subr.mxu0 0.0
        %2759 = vmatpush1.msra.mxu0 %v2738
        %2760 = vmatprep.subr.mxu0 0.0
        %2761 = vmatpush1.msra.mxu0 %v2739
        %2762 = vmatprep.subr.mxu0 0.0
        %2763 = vmatpush1.msra.mxu0 0.0
        %2764 = vmatprep.subr.mxu0 0.0
        %2765 = vmatpush1.msra.mxu0 0.0
        %2766 = vmatprep.subr.mxu0 0.0
        %2767 = vmatpush1.msra.mxu0 0.0
        %2768 = vmatprep.subr.mxu0 0.0
        %2769 = vmatpush1.msra.mxu0 0.0
        %2770 = vmatprep.subr.mxu0 0.0
        %2771 = vmatpush1.msra.mxu0 0.0
        %2772 = vmatprep.subr.mxu0 0.0
        %2773 = vmatpush1.msra.mxu0 0.0
        %2774 = vmatprep.subr.mxu0 0.0
        %2775 = vmatpush1.msra.mxu0 0.0
        %2776 = vmatprep.subr.mxu0 0.0
        %2777 = vmatpush1.msra.mxu0 0.0
        %2778 = vmatprep.subr.mxu0 0.0
        %2779 = vmatpush1.msra.mxu0 0.0
        %2780 = vmatprep.subr.mxu0 0.0
        %2781 = vmatpush1.msra.mxu0 0.0
        %2782 = vmatprep.subr.mxu0 0.0
        %2783 = vmatpush1.msra.mxu0 0.0
        %2784 = vmatprep.subr.mxu0 0.0
        %2785 = vmatpush1.msra.mxu0 0.0
        %2786 = vmatprep.subr.mxu0 0.0
        %2787 = vmatpush1.msra.mxu0 0.0
        %2788 = vmatprep.subr.mxu0 0.0
        %2789 = vmatpush1.msra.mxu0 0.0
        %2790 = vmatprep.subr.mxu0 0.0
        %2791 = vmatpush1.msra.mxu0 0.0
        %2792 = vmatprep.subr.mxu0 0.0
        %2793 = vmatpush1.msra.mxu0 0.0
        %2794 = vmatprep.subr.mxu0 0.0
        %2795 = vmatpush1.msra.mxu0 0.0
        %2796 = vmatprep.subr.mxu0 0.0
        %2797 = vmatpush1.msra.mxu0 0.0
        %2798 = vmatprep.subr.mxu0 0.0
        %2799 = vmatpush1.msra.mxu0 0.0
        %2800 = vmatprep.subr.mxu0 0.0
        %2801 = vmatpush1.msra.mxu0 0.0
        %2802 = vmatprep.subr.mxu0 0.0
        %2803 = vmatpush1.msra.mxu0 0.0
        %2804 = vmatprep.subr.mxu0 0.0
        %2805 = vmatpush1.msra.mxu0 0.0
        %2806 = vmatprep.subr.mxu0 0.0
        %2807 = vmatpush1.msra.mxu0 0.0
        %2808 = vmatprep.subr.mxu0 0.0
        %2809 = vmatpush1.msra.mxu0 0.0
        %2810 = vmatprep.subr.mxu0 0.0
        %2811 = vmatpush1.msra.mxu0 0.0
        %2812 = vmatprep.subr.mxu0 0.0
        %2813 = vmatpush1.msra.mxu0 0.0
        %2814 = vmatprep.subr.mxu0 0.0
        %2815 = vmatpush1.msra.mxu0 0.0
        %2816 = vmatprep.subr.mxu0 0.0
        %2817 = vmatpush1.msra.mxu0 0.0
        %2818 = vmatprep.mubr.f32.mxu0 0.0
        %2819 = vmatmul.mubr.f32.gmra.mrb[0].mxu0 %v2749
        %v2820 = vpop.f32.mrb[0].mxu0
        %v2821 = vadd.f32 %v2746, %v2820
        %v2822 = vpop.f32.mrb[0].mxu0
        %2823 = vmatprep.mubr.f32.mxu0 0.0
        %2824 = vmatmul.mubr.f32.gmra.mrb[0].mxu0 %v2752
        %v2825 = vpop.f32.mrb[0].mxu0
        %v2826 = vadd.f32 %v2746, %v2825
        %v2827 = vpop.f32.mrb[0].mxu0
        %2828 = vdwg.mxu0
        %2831 = vrot.lane.b32.xlu0 %v2821, 96
        %v2832 = vpop.permute.xlu0 %2831
        %2833 = vrot.lane.b32.xlu0 %v2826, 96
        %v2834 = vpop.permute.xlu0 %2833
        %v2835 = vsel %vm1323, %v2821, 0
        %v2837 = vsel %vm1323, %v2826, 0
        %v2839 = vsel %vm1323, %v2832, 0
        %v2841 = vsel %vm1323, %v2834, 0
        %2843 = vmatprep.subr.mxu0 0.0
        %2844 = vmatpush1.xpose.msra.mxu0 %v2839
        %2845 = vmatprep.subr.mxu0 0.0
        %2846 = vmatpush1.xpose.msra.mxu0 %v2841
        %2847 = vmatprep.subr.mxu0 0.0
        %2848 = vmatpush1.xpose.msra.mxu0 0.0
        %2849 = vmatprep.subr.mxu0 0.0
        %2850 = vmatpush1.xpose.msra.mxu0 0.0
        %2851 = vmatprep.subr.mxu0 0.0
        %2852 = vmatpush1.xpose.msra.mxu0 0.0
        %2853 = vmatprep.subr.mxu0 0.0
        %2854 = vmatpush1.xpose.msra.mxu0 0.0
        %2855 = vmatprep.subr.mxu0 0.0
        %2856 = vmatpush1.xpose.msra.mxu0 0.0
        %2857 = vmatprep.subr.mxu0 0.0
        %2858 = vmatpush1.xpose.msra.mxu0 0.0
        %2859 = vmatprep.subr.mxu0 0.0
        %2860 = vmatpush1.xpose.msra.mxu0 0.0
        %2861 = vmatprep.subr.mxu0 0.0
        %2862 = vmatpush1.xpose.msra.mxu0 0.0
        %2863 = vmatprep.subr.mxu0 0.0
        %2864 = vmatpush1.xpose.msra.mxu0 0.0
        %2865 = vmatprep.subr.mxu0 0.0
        %2866 = vmatpush1.xpose.msra.mxu0 0.0
        %2867 = vmatprep.subr.mxu0 0.0
        %2868 = vmatpush1.xpose.msra.mxu0 0.0
        %2869 = vmatprep.subr.mxu0 0.0
        %2870 = vmatpush1.xpose.msra.mxu0 0.0
        %2871 = vmatprep.subr.mxu0 0.0
        %2872 = vmatpush1.xpose.msra.mxu0 0.0
        %2873 = vmatprep.subr.mxu0 0.0
        %2874 = vmatpush1.xpose.msra.mxu0 0.0
        %2875 = vmatprep.subr.mxu0 0.0
        %2876 = vmatpush1.xpose.msra.mxu0 0.0
        %2877 = vmatprep.subr.mxu0 0.0
        %2878 = vmatpush1.xpose.msra.mxu0 0.0
        %2879 = vmatprep.subr.mxu0 0.0
        %2880 = vmatpush1.xpose.msra.mxu0 0.0
        %2881 = vmatprep.subr.mxu0 0.0
        %2882 = vmatpush1.xpose.msra.mxu0 0.0
        %2883 = vmatprep.subr.mxu0 0.0
        %2884 = vmatpush1.xpose.msra.mxu0 0.0
        %2885 = vmatprep.subr.mxu0 0.0
        %2886 = vmatpush1.xpose.msra.mxu0 0.0
        %2887 = vmatprep.subr.mxu0 0.0
        %2888 = vmatpush1.xpose.msra.mxu0 0.0
        %2889 = vmatprep.subr.mxu0 0.0
        %2890 = vmatpush1.xpose.msra.mxu0 0.0
        %2891 = vmatprep.subr.mxu0 0.0
        %2892 = vmatpush1.xpose.msra.mxu0 0.0
        %2893 = vmatprep.subr.mxu0 0.0
        %2894 = vmatpush1.xpose.msra.mxu0 0.0
        %2895 = vmatprep.subr.mxu0 0.0
        %2896 = vmatpush1.xpose.msra.mxu0 0.0
        %2897 = vmatprep.subr.mxu0 0.0
        %2898 = vmatpush1.xpose.msra.mxu0 0.0
        %2899 = vmatprep.subr.mxu0 0.0
        %2900 = vmatpush1.xpose.msra.mxu0 0.0
        %2901 = vmatprep.subr.mxu0 0.0
        %2902 = vmatpush1.xpose.msra.mxu0 0.0
        %2903 = vmatprep.subr.mxu0 0.0
        %2904 = vmatpush1.xpose.msra.mxu0 0.0
        %2905 = vmatprep.subr.mxu0 0.0
        %2906 = vmatpush1.xpose.msra.mxu0 0.0
        %2907 = vmatprep.mubr.f32.mxu0 0.0
        %2908 = vmatmul.mubr.f32.gmra.mrb[0].mxu0 %v2835
        %v2909 = vpop.f32.mrb[0].mxu0
        %v2910 = vadd.f32 0.0, %v2909
        %v2911 = vpop.f32.mrb[0].mxu0
        %2912 = vmatprep.mubr.f32.mxu0 0.0
        %2913 = vmatmul.mubr.f32.gmra.mrb[0].mxu0 %v2837
        %v2914 = vpop.f32.mrb[0].mxu0
        %v2915 = vadd.f32 0.0, %v2914
        %v2916 = vpop.f32.mrb[0].mxu0
        %2917 = vdwg.mxu0
        %v2918 = vmul.f32 %v2910, 0.25
        %v2919 = vmul.f32 %v2915, 0.25
        %v2920 = vadd.f32 %v2918, %v778
        %v2921 = vadd.f32 %v2919, %v779
        %v2922 = vsel %vm1323, %v2920, -inf
        %2923 = vmax.xlane.f32.xlu0 %v2922
        %v2924 = vpop.xlane.xlu0 %2923
        %v2925 = vsel %vm1323, %v2921, -inf
        %2926 = vmax.xlane.f32.xlu0 %v2925
        %v2927 = vpop.xlane.xlu0 %2926
        %v2928 = vsub.f32 %v2920, %v2924
        %v2929 = vsub.f32 %v2921, %v2927
        %v2930 = vmul.f32 %v2928, 1.442695
        %v2931 = vpow.pop %v2930
        %v2932 = vmul.f32 %v2929, 1.442695
        %v2933 = vpow.pop %v2932
        %v2934 = vsel %vm1323, %v2931, 0.0
        %2935 = vadd.xlane.f32.xlu0 %v2934
        %v2936 = vpop.xlane.xlu0 %2935
        %v2937 = vsel %vm1323, %v2933, 0.0
        %2938 = vadd.xlane.f32.xlu0 %v2937
        %v2939 = vpop.xlane.xlu0 %2938
        %v2940 = vrcp.pop %v2936
        %v2941 = vrcp.pop %v2939
        %v2942 = vmul.f32 %v2931, %v2940
        %v2943 = vmul.f32 %v2933, %v2941
        %2944 = vrot.lane.b32.xlu0 %v2821, 64
        %v2945 = vpop.permute.xlu0 %2944
        %2946 = vrot.lane.b32.xlu0 %v2826, 64
        %v2947 = vpop.permute.xlu0 %2946
        %v2951 = vsel %vm1323, %v2942, 0
        %v2954 = vsel %vm1323, %v2943, 0
        %2956 = vmatprep.subr.mxu0 0.0
        %2957 = vmatpush1.msra.mxu0 %v2945
        %2958 = vmatprep.subr.mxu0 0.0
        %2959 = vmatpush1.msra.mxu0 %v2947
        %2960 = vmatprep.subr.mxu0 0.0
        %2961 = vmatpush1.msra.mxu0 0.0
        %2962 = vmatprep.subr.mxu0 0.0
        %2963 = vmatpush1.msra.mxu0 0.0
        %2964 = vmatprep.subr.mxu0 0.0
        %2965 = vmatpush1.msra.mxu0 0.0
        %2966 = vmatprep.subr.mxu0 0.0
        %2967 = vmatpush1.msra.mxu0 0.0
        %2968 = vmatprep.subr.mxu0 0.0
        %2969 = vmatpush1.msra.mxu0 0.0
        %2970 = vmatprep.subr.mxu0 0.0
        %2971 = vmatpush1.msra.mxu0 0.0
        %2972 = vmatprep.subr.mxu0 0.0
        %2973 = vmatpush1.msra.mxu0 0.0
        %2974 = vmatprep.subr.mxu0 0.0
        %2975 = vmatpush1.msra.mxu0 0.0
        %2976 = vmatprep.subr.mxu0 0.0
        %2977 = vmatpush1.msra.mxu0 0.0
        %2978 = vmatprep.subr.mxu0 0.0
        %2979 = vmatpush1.msra.mxu0 0.0
        %2980 = vmatprep.subr.mxu0 0.0
        %2981 = vmatpush1.msra.mxu0 0.0
        %2982 = vmatprep.subr.mxu0 0.0
        %2983 = vmatpush1.msra.mxu0 0.0
        %2984 = vmatprep.subr.mxu0 0.0
        %2985 = vmatpush1.msra.mxu0 0.0
        %2986 = vmatprep.subr.mxu0 0.0
        %2987 = vmatpush1.msra.mxu0 0.0
        %2988 = vmatprep.subr.mxu0 0.0
        %2989 = vmatpush1.msra.mxu0 0.0
        %2990 = vmatprep.subr.mxu0 0.0
        %2991 = vmatpush1.msra.mxu0 0.0
        %2992 = vmatprep.subr.mxu0 0.0
        %2993 = vmatpush1.msra.mxu0 0.0
        %2994 = vmatprep.subr.mxu0 0.0
        %2995 = vmatpush1.msra.mxu0 0.0
        %2996 = vmatprep.subr.mxu0 0.0
        %2997 = vmatpush1.msra.mxu0 0.0
        %2998 = vmatprep.subr.mxu0 0.0
        %2999 = vmatpush1.msra.mxu0 0.0
        %3000 = vmatprep.subr.mxu0 0.0
        %3001 = vmatpush1.msra.mxu0 0.0
        %3002 = vmatprep.subr.mxu0 0.0
        %3003 = vmatpush1.msra.mxu0 0.0
        %3004 = vmatprep.subr.mxu0 0.0
        %3005 = vmatpush1.msra.mxu0 0.0
        %3006 = vmatprep.subr.mxu0 0.0
        %3007 = vmatpush1.msra.mxu0 0.0
        %3008 = vmatprep.subr.mxu0 0.0
        %3009 = vmatpush1.msra.mxu0 0.0
        %3010 = vmatprep.subr.mxu0 0.0
        %3011 = vmatpush1.msra.mxu0 0.0
        %3012 = vmatprep.subr.mxu0 0.0
        %3013 = vmatpush1.msra.mxu0 0.0
        %3014 = vmatprep.subr.mxu0 0.0
        %3015 = vmatpush1.msra.mxu0 0.0
        %3016 = vmatprep.subr.mxu0 0.0
        %3017 = vmatpush1.msra.mxu0 0.0
        %3018 = vmatprep.subr.mxu0 0.0
        %3019 = vmatpush1.msra.mxu0 0.0
        %3020 = vmatprep.mubr.f32.mxu0 0.0
        %3021 = vmatmul.mubr.f32.gmra.mrb[0].mxu0 %v2951
        %v3022 = vpop.f32.mrb[0].mxu0
        %v3023 = vadd.f32 0.0, %v3022
        %v3024 = vpop.f32.mrb[0].mxu0
        %3025 = vmatprep.mubr.f32.mxu0 0.0
        %3026 = vmatmul.mubr.f32.gmra.mrb[0].mxu0 %v2954
        %v3027 = vpop.f32.mrb[0].mxu0
        %v3028 = vadd.f32 0.0, %v3027
        %v3029 = vpop.f32.mrb[0].mxu0
        %3030 = vdwg.mxu0
        %3031 = vrot.lane.b32.xlu0 %v2821, 112
        %v3032 = vpop.permute.xlu0 %3031
        %3033 = vrot.lane.b32.xlu0 %v2826, 112
        %v3034 = vpop.permute.xlu0 %3033
        %3035 = vrot.lane.b32.xlu0 %v2821, 80
        %v3036 = vpop.permute.xlu0 %3035
        %3037 = vrot.lane.b32.xlu0 %v2826, 80
        %v3038 = vpop.permute.xlu0 %3037
        %v3039 = vsel %vm1323, %v3032, 0
        %v3041 = vsel %vm1323, %v3034, 0
        %v3043 = vsel %vm1323, %v3036, 0
        %v3045 = vsel %vm1323, %v3038, 0
        %3047 = vmatprep.subr.mxu0 0.0
        %3048 = vmatpush1.xpose.msra.mxu0 %v3043
        %3049 = vmatprep.subr.mxu0 0.0
        %3050 = vmatpush1.xpose.msra.mxu0 %v3045
        %3051 = vmatprep.subr.mxu0 0.0
        %3052 = vmatpush1.xpose.msra.mxu0 0.0
        %3053 = vmatprep.subr.mxu0 0.0
        %3054 = vmatpush1.xpose.msra.mxu0 0.0
        %3055 = vmatprep.subr.mxu0 0.0
        %3056 = vmatpush1.xpose.msra.mxu0 0.0
        %3057 = vmatprep.subr.mxu0 0.0
        %3058 = vmatpush1.xpose.msra.mxu0 0.0
        %3059 = vmatprep.subr.mxu0 0.0
        %3060 = vmatpush1.xpose.msra.mxu0 0.0
        %3061 = vmatprep.subr.mxu0 0.0
        %3062 = vmatpush1.xpose.msra.mxu0 0.0
        %3063 = vmatprep.subr.mxu0 0.0
        %3064 = vmatpush1.xpose.msra.mxu0 0.0
        %3065 = vmatprep.subr.mxu0 0.0
        %3066 = vmatpush1.xpose.msra.mxu0 0.0
        %3067 = vmatprep.subr.mxu0 0.0
        %3068 = vmatpush1.xpose.msra.mxu0 0.0
        %3069 = vmatprep.subr.mxu0 0.0
        %3070 = vmatpush1.xpose.msra.mxu0 0.0
        %3071 = vmatprep.subr.mxu0 0.0
        %3072 = vmatpush1.xpose.msra.mxu0 0.0
        %3073 = vmatprep.subr.mxu0 0.0
        %3074 = vmatpush1.xpose.msra.mxu0 0.0
        %3075 = vmatprep.subr.mxu0 0.0
        %3076 = vmatpush1.xpose.msra.mxu0 0.0
        %3077 = vmatprep.subr.mxu0 0.0
        %3078 = vmatpush1.xpose.msra.mxu0 0.0
        %3079 = vmatprep.subr.mxu0 0.0
        %3080 = vmatpush1.xpose.msra.mxu0 0.0
        %3081 = vmatprep.subr.mxu0 0.0
        %3082 = vmatpush1.xpose.msra.mxu0 0.0
        %3083 = vmatprep.subr.mxu0 0.0
        %3084 = vmatpush1.xpose.msra.mxu0 0.0
        %3085 = vmatprep.subr.mxu0 0.0
        %3086 = vmatpush1.xpose.msra.mxu0 0.0
        %3087 = vmatprep.subr.mxu0 0.0
        %3088 = vmatpush1.xpose.msra.mxu0 0.0
        %3089 = vmatprep.subr.mxu0 0.0
        %3090 = vmatpush1.xpose.msra.mxu0 0.0
        %3091 = vmatprep.subr.mxu0 0.0
        %3092 = vmatpush1.xpose.msra.mxu0 0.0
        %3093 = vmatprep.subr.mxu0 0.0
        %3094 = vmatpush1.xpose.msra.mxu0 0.0
        %3095 = vmatprep.subr.mxu0 0.0
        %3096 = vmatpush1.xpose.msra.mxu0 0.0
        %3097 = vmatprep.subr.mxu0 0.0
        %3098 = vmatpush1.xpose.msra.mxu0 0.0
        %3099 = vmatprep.subr.mxu0 0.0
        %3100 = vmatpush1.xpose.msra.mxu0 0.0
        %3101 = vmatprep.subr.mxu0 0.0
        %3102 = vmatpush1.xpose.msra.mxu0 0.0
        %3103 = vmatprep.subr.mxu0 0.0
        %3104 = vmatpush1.xpose.msra.mxu0 0.0
        %3105 = vmatprep.subr.mxu0 0.0
        %3106 = vmatpush1.xpose.msra.mxu0 0.0
        %3107 = vmatprep.subr.mxu0 0.0
        %3108 = vmatpush1.xpose.msra.mxu0 0.0
        %3109 = vmatprep.subr.mxu0 0.0
        %3110 = vmatpush1.xpose.msra.mxu0 0.0
        %3111 = vmatprep.mubr.f32.mxu0 0.0
        %3112 = vmatmul.mubr.f32.gmra.mrb[0].mxu0 %v3039
        %v3113 = vpop.f32.mrb[0].mxu0
        %v3114 = vadd.f32 0.0, %v3113
        %v3115 = vpop.f32.mrb[0].mxu0
        %3116 = vmatprep.mubr.f32.mxu0 0.0
        %3117 = vmatmul.mubr.f32.gmra.mrb[0].mxu0 %v3041
        %v3118 = vpop.f32.mrb[0].mxu0
        %v3119 = vadd.f32 0.0, %v3118
        %v3120 = vpop.f32.mrb[0].mxu0
        %3121 = vdwg.mxu0
        %v3122 = vmul.f32 %v3114, 0.25
        %v3123 = vmul.f32 %v3119, 0.25
        %v3124 = vadd.f32 %v3122, %v778
        %v3125 = vadd.f32 %v3123, %v779
        %v3126 = vsel %vm1323, %v3124, -inf
        %3127 = vmax.xlane.f32.xlu0 %v3126
        %v3128 = vpop.xlane.xlu0 %3127
        %v3129 = vsel %vm1323, %v3125, -inf
        %3130 = vmax.xlane.f32.xlu0 %v3129
        %v3131 = vpop.xlane.xlu0 %3130
        %v3132 = vsub.f32 %v3124, %v3128
        %v3133 = vsub.f32 %v3125, %v3131
        %v3134 = vmul.f32 %v3132, 1.442695
        %v3135 = vpow.pop %v3134
        %v3136 = vmul.f32 %v3133, 1.442695
        %v3137 = vpow.pop %v3136
        %v3138 = vsel %vm1323, %v3135, 0.0
        %3139 = vadd.xlane.f32.xlu0 %v3138
        %v3140 = vpop.xlane.xlu0 %3139
        %v3141 = vsel %vm1323, %v3137, 0.0
        %3142 = vadd.xlane.f32.xlu0 %v3141
        %v3143 = vpop.xlane.xlu0 %3142
        %v3144 = vrcp.pop %v3140
        %v3145 = vrcp.pop %v3143
        %v3146 = vmul.f32 %v3135, %v3144
        %v3147 = vmul.f32 %v3137, %v3145
        %3148 = vrot.lane.b32.xlu0 %v2821, 48
        %v3149 = vpop.permute.xlu0 %3148
        %3150 = vrot.lane.b32.xlu0 %v2826, 48
        %v3151 = vpop.permute.xlu0 %3150
        %v3155 = vsel %vm1323, %v3146, 0
        %v3158 = vsel %vm1323, %v3147, 0
        %3160 = vmatprep.subr.mxu0 0.0
        %3161 = vmatpush1.msra.mxu0 %v3149
        %3162 = vmatprep.subr.mxu0 0.0
        %3163 = vmatpush1.msra.mxu0 %v3151
        %3164 = vmatprep.subr.mxu0 0.0
        %3165 = vmatpush1.msra.mxu0 0.0
        %3166 = vmatprep.subr.mxu0 0.0
        %3167 = vmatpush1.msra.mxu0 0.0
        %3168 = vmatprep.subr.mxu0 0.0
        %3169 = vmatpush1.msra.mxu0 0.0
        %3170 = vmatprep.subr.mxu0 0.0
        %3171 = vmatpush1.msra.mxu0 0.0
        %3172 = vmatprep.subr.mxu0 0.0
        %3173 = vmatpush1.msra.mxu0 0.0
        %3174 = vmatprep.subr.mxu0 0.0
        %3175 = vmatpush1.msra.mxu0 0.0
        %3176 = vmatprep.subr.mxu0 0.0
        %3177 = vmatpush1.msra.mxu0 0.0
        %3178 = vmatprep.subr.mxu0 0.0
        %3179 = vmatpush1.msra.mxu0 0.0
        %3180 = vmatprep.subr.mxu0 0.0
        %3181 = vmatpush1.msra.mxu0 0.0
        %3182 = vmatprep.subr.mxu0 0.0
        %3183 = vmatpush1.msra.mxu0 0.0
        %3184 = vmatprep.subr.mxu0 0.0
        %3185 = vmatpush1.msra.mxu0 0.0
        %3186 = vmatprep.subr.mxu0 0.0
        %3187 = vmatpush1.msra.mxu0 0.0
        %3188 = vmatprep.subr.mxu0 0.0
        %3189 = vmatpush1.msra.mxu0 0.0
        %3190 = vmatprep.subr.mxu0 0.0
        %3191 = vmatpush1.msra.mxu0 0.0
        %3192 = vmatprep.subr.mxu0 0.0
        %3193 = vmatpush1.msra.mxu0 0.0
        %3194 = vmatprep.subr.mxu0 0.0
        %3195 = vmatpush1.msra.mxu0 0.0
        %3196 = vmatprep.subr.mxu0 0.0
        %3197 = vmatpush1.msra.mxu0 0.0
        %3198 = vmatprep.subr.mxu0 0.0
        %3199 = vmatpush1.msra.mxu0 0.0
        %3200 = vmatprep.subr.mxu0 0.0
        %3201 = vmatpush1.msra.mxu0 0.0
        %3202 = vmatprep.subr.mxu0 0.0
        %3203 = vmatpush1.msra.mxu0 0.0
        %3204 = vmatprep.subr.mxu0 0.0
        %3205 = vmatpush1.msra.mxu0 0.0
        %3206 = vmatprep.subr.mxu0 0.0
        %3207 = vmatpush1.msra.mxu0 0.0
        %3208 = vmatprep.subr.mxu0 0.0
        %3209 = vmatpush1.msra.mxu0 0.0
        %3210 = vmatprep.subr.mxu0 0.0
        %3211 = vmatpush1.msra.mxu0 0.0
        %3212 = vmatprep.subr.mxu0 0.0
        %3213 = vmatpush1.msra.mxu0 0.0
        %3214 = vmatprep.subr.mxu0 0.0
        %3215 = vmatpush1.msra.mxu0 0.0
        %3216 = vmatprep.subr.mxu0 0.0
        %3217 = vmatpush1.msra.mxu0 0.0
        %3218 = vmatprep.subr.mxu0 0.0
        %3219 = vmatpush1.msra.mxu0 0.0
        %3220 = vmatprep.subr.mxu0 0.0
        %3221 = vmatpush1.msra.mxu0 0.0
        %3222 = vmatprep.subr.mxu0 0.0
        %3223 = vmatpush1.msra.mxu0 0.0
        %3224 = vmatprep.mubr.f32.mxu0 0.0
        %3225 = vmatmul.mubr.f32.gmra.mrb[0].mxu0 %v3155
        %v3226 = vpop.f32.mrb[0].mxu0
        %v3227 = vadd.f32 0.0, %v3226
        %v3228 = vpop.f32.mrb[0].mxu0
        %3229 = vmatprep.mubr.f32.mxu0 0.0
        %3230 = vmatmul.mubr.f32.gmra.mrb[0].mxu0 %v3158
        %v3231 = vpop.f32.mrb[0].mxu0
        %v3232 = vadd.f32 0.0, %v3231
        %v3233 = vpop.f32.mrb[0].mxu0
        %3234 = vdwg.mxu0
        %3237 = vrot.lane.b32.xlu0 %v3227, 16
        %v3238 = vpop.permute.xlu0 %3237
        %3239 = vrot.lane.b32.xlu0 %v3232, 16
        %v3240 = vpop.permute.xlu0 %3239
        %v3243 = vsel %vm1323, %v3023, %v3238
        %v3244 = vsel %vm1323, %v3028, %v3240
        %s3245 = scalar_lea.vmem %s12, 32
        %v3246 = vld [vmem:[%s3245] sm:$0xff]
        %v3247 = vld [vmem:[%s3245 + $0x8] sm:$0xff]
        %v3248 = vld [vmem:[%s3245 + $0x10] sm:$0xff]
        %v3249 = vld [vmem:[%s3245 + $0x18] sm:$0xff]
        %s3250 = scalar_lea.vmem %s13, 1
        %v3251 = vld [vmem:[%s3250] sm:$0x1]
        %v3253 = vlaneseq
        %v3254 = vshrl.u32 %v3253, 7
        %v3255 = vsub.s32 0, %v3254
        %v3256 = vrot.slane %v3251, %v3255
        %v3259 = vsel %vm847, %v3243, 0
        %v3262 = vsel %vm847, %v3244, 0
        %3264 = vmatprep.subr.mxu0 0.0
        %3265 = vmatpush1.msra.mxu0 %v3246
        %3266 = vmatprep.subr.mxu0 0.0
        %3267 = vmatpush1.msra.mxu0 %v3247
        %3268 = vmatprep.subr.mxu0 0.0
        %3269 = vmatpush1.msra.mxu0 %v3248
        %3270 = vmatprep.subr.mxu0 0.0
        %3271 = vmatpush1.msra.mxu0 %v3249
        %3272 = vmatprep.subr.mxu0 0.0
        %3273 = vmatpush1.msra.mxu0 0.0
        %3274 = vmatprep.subr.mxu0 0.0
        %3275 = vmatpush1.msra.mxu0 0.0
        %3276 = vmatprep.subr.mxu0 0.0
        %3277 = vmatpush1.msra.mxu0 0.0
        %3278 = vmatprep.subr.mxu0 0.0
        %3279 = vmatpush1.msra.mxu0 0.0
        %3280 = vmatprep.subr.mxu0 0.0
        %3281 = vmatpush1.msra.mxu0 0.0
        %3282 = vmatprep.subr.mxu0 0.0
        %3283 = vmatpush1.msra.mxu0 0.0
        %3284 = vmatprep.subr.mxu0 0.0
        %3285 = vmatpush1.msra.mxu0 0.0
        %3286 = vmatprep.subr.mxu0 0.0
        %3287 = vmatpush1.msra.mxu0 0.0
        %3288 = vmatprep.subr.mxu0 0.0
        %3289 = vmatpush1.msra.mxu0 0.0
        %3290 = vmatprep.subr.mxu0 0.0
        %3291 = vmatpush1.msra.mxu0 0.0
        %3292 = vmatprep.subr.mxu0 0.0
        %3293 = vmatpush1.msra.mxu0 0.0
        %3294 = vmatprep.subr.mxu0 0.0
        %3295 = vmatpush1.msra.mxu0 0.0
        %3296 = vmatprep.subr.mxu0 0.0
        %3297 = vmatpush1.msra.mxu0 0.0
        %3298 = vmatprep.subr.mxu0 0.0
        %3299 = vmatpush1.msra.mxu0 0.0
        %3300 = vmatprep.subr.mxu0 0.0
        %3301 = vmatpush1.msra.mxu0 0.0
        %3302 = vmatprep.subr.mxu0 0.0
        %3303 = vmatpush1.msra.mxu0 0.0
        %3304 = vmatprep.subr.mxu0 0.0
        %3305 = vmatpush1.msra.mxu0 0.0
        %3306 = vmatprep.subr.mxu0 0.0
        %3307 = vmatpush1.msra.mxu0 0.0
        %3308 = vmatprep.subr.mxu0 0.0
        %3309 = vmatpush1.msra.mxu0 0.0
        %3310 = vmatprep.subr.mxu0 0.0
        %3311 = vmatpush1.msra.mxu0 0.0
        %3312 = vmatprep.subr.mxu0 0.0
        %3313 = vmatpush1.msra.mxu0 0.0
        %3314 = vmatprep.subr.mxu0 0.0
        %3315 = vmatpush1.msra.mxu0 0.0
        %3316 = vmatprep.subr.mxu0 0.0
        %3317 = vmatpush1.msra.mxu0 0.0
        %3318 = vmatprep.subr.mxu0 0.0
        %3319 = vmatpush1.msra.mxu0 0.0
        %3320 = vmatprep.subr.mxu0 0.0
        %3321 = vmatpush1.msra.mxu0 0.0
        %3322 = vmatprep.subr.mxu0 0.0
        %3323 = vmatpush1.msra.mxu0 0.0
        %3324 = vmatprep.subr.mxu0 0.0
        %3325 = vmatpush1.msra.mxu0 0.0
        %3326 = vmatprep.subr.mxu0 0.0
        %3327 = vmatpush1.msra.mxu0 0.0
        %3328 = vmatprep.mubr.f32.mxu0 0.0
        %3329 = vmatmul.mubr.f32.gmra.mrb[0].mxu0 %v3259
        %v3330 = vpop.f32.mrb[0].mxu0
        %v3331 = vadd.f32 %v3256, %v3330
        %v3332 = vpop.f32.mrb[0].mxu0
        %3333 = vmatprep.mubr.f32.mxu0 0.0
        %3334 = vmatmul.mubr.f32.gmra.mrb[0].mxu0 %v3262
        %v3335 = vpop.f32.mrb[0].mxu0
        %v3336 = vadd.f32 %v3256, %v3335
        %v3337 = vpop.f32.mrb[0].mxu0
        %3338 = vdwg.mxu0
        %v3339 = vadd.f32 %v3331, %v2733
        %v3340 = vadd.f32 %v3336, %v2734
        %s3341 = scalar_lea.vmem %s14, 1
        %v3342 = vld [vmem:[%s3341] sm:$0x1]
        %s3343 = scalar_lea.vmem %s15, 1
        %v3344 = vld [vmem:[%s3343] sm:$0x1]
        %v3345 = vsel %vm847, %v3339, 0.0
        %3346 = vadd.xlane.f32.xlu0 %v3345
        %v3347 = vpop.xlane.xlu0 %3346
        %v3348 = vsel %vm847, %v3340, 0.0
        %3349 = vadd.xlane.f32.xlu0 %v3348
        %v3350 = vpop.xlane.xlu0 %3349
        %v3351 = vmul.f32 %v3347, %v2038
        %v3352 = vmul.f32 %v3350, %v2038
        %v3353 = vsub.f32 %v3339, %v3351
        %v3354 = vsub.f32 %v3340, %v3352
        %v3355 = vmul.f32 %v3353, %v3353
        %v3356 = vmul.f32 %v3354, %v3354
        %v3357 = vsel %vm847, %v3355, 0.0
        %3358 = vadd.xlane.f32.xlu0 %v3357
        %v3359 = vpop.xlane.xlu0 %3358
        %v3360 = vsel %vm847, %v3356, 0.0
        %3361 = vadd.xlane.f32.xlu0 %v3360
        %v3362 = vpop.xlane.xlu0 %3361
        %v3363 = vmul.f32 %v3359, %v2038
        %v3364 = vmul.f32 %v3362, %v2038
        %v3365 = vadd.f32 %v3363, 1e-05
        %v3366 = vadd.f32 %v3364, 1e-05
        %v3367 = vrsqrt.pop %v3365
        %v3368 = vrsqrt.pop %v3366
        %v3369 = vmul.f32 %v3353, %v3367
        %v3370 = vmul.f32 %v3354, %v3368
        %v3372 = vlaneseq
        %v3373 = vshrl.u32 %v3372, 7
        %v3374 = vsub.s32 0, %v3373
        %v3375 = vrot.slane %v3342, %v3374
        %v3377 = vmul.f32 %v3369, %v3375
        %v3378 = vmul.f32 %v3370, %v3375
        %v3380 = vlaneseq
        %v3381 = vshrl.u32 %v3380, 7
        %v3382 = vsub.s32 0, %v3381
        %v3383 = vrot.slane %v3344, %v3382
        %v3385 = vadd.f32 %v3377, %v3383
        %v3386 = vadd.f32 %v3378, %v3383
        %v3387 = vmul.f32 %v3385, %v1419
        %v3388 = vmul.f32 %v3386, %v1424
        %v3391 = vrot.slane %v3387, 7
        %v3392 = vrot.slane %v3388, 7
        %v3393 = vsel %vm823, %v3391, %v3392
        %v3396 = vsel %vm823, 0.0, %v3391
        %v3397 = vmul.f32 %v3396, %v2088
        %v3398 = vmul.f32 %v3393, %v2093
        %s3399 = scalar_lea.vmem %s16, 96
        %v3400 = vld [vmem:[%s3399] sm:$0xff]
        %v3401 = vld [vmem:[%s3399 + $0x8] sm:$0xff]
        %v3402 = vld [vmem:[%s3399 + $0x10] sm:$0xff]
        %v3403 = vld [vmem:[%s3399 + $0x18] sm:$0xff]
        %s3404 = scalar_lea.vmem %s16, 128
        %v3405 = vld [vmem:[%s3404] sm:$0xff]
        %v3406 = vld [vmem:[%s3404 + $0x8] sm:$0xff]
        %v3407 = vld [vmem:[%s3404 + $0x10] sm:$0xff]
        %v3408 = vld [vmem:[%s3404 + $0x18] sm:$0xff]
        %v3409 = vsel %vm847, %v3387, 0
        %v3411 = vsel %vm847, %v3388, 0
        %3413 = vmatprep.subr.mxu0 0.0
        %3414 = vmatpush1.msra.mxu0 %v3405
        %3415 = vmatprep.subr.mxu0 0.0
        %3416 = vmatpush1.msra.mxu0 %v3406
        %3417 = vmatprep.subr.mxu0 0.0
        %3418 = vmatpush1.msra.mxu0 %v3407
        %3419 = vmatprep.subr.mxu0 0.0
        %3420 = vmatpush1.msra.mxu0 %v3408
        %3421 = vmatprep.subr.mxu0 0.0
        %3422 = vmatpush1.msra.mxu0 0.0
        %3423 = vmatprep.subr.mxu0 0.0
        %3424 = vmatpush1.msra.mxu0 0.0
        %3425 = vmatprep.subr.mxu0 0.0
        %3426 = vmatpush1.msra.mxu0 0.0
        %3427 = vmatprep.subr.mxu0 0.0
        %3428 = vmatpush1.msra.mxu0 0.0
        %3429 = vmatprep.subr.mxu0 0.0
        %3430 = vmatpush1.msra.mxu0 0.0
        %3431 = vmatprep.subr.mxu0 0.0
        %3432 = vmatpush1.msra.mxu0 0.0
        %3433 = vmatprep.subr.mxu0 0.0
        %3434 = vmatpush1.msra.mxu0 0.0
        %3435 = vmatprep.subr.mxu0 0.0
        %3436 = vmatpush1.msra.mxu0 0.0
        %3437 = vmatprep.subr.mxu0 0.0
        %3438 = vmatpush1.msra.mxu0 0.0
        %3439 = vmatprep.subr.mxu0 0.0
        %3440 = vmatpush1.msra.mxu0 0.0
        %3441 = vmatprep.subr.mxu0 0.0
        %3442 = vmatpush1.msra.mxu0 0.0
        %3443 = vmatprep.subr.mxu0 0.0
        %3444 = vmatpush1.msra.mxu0 0.0
        %3445 = vmatprep.subr.mxu0 0.0
        %3446 = vmatpush1.msra.mxu0 0.0
        %3447 = vmatprep.subr.mxu0 0.0
        %3448 = vmatpush1.msra.mxu0 0.0
        %3449 = vmatprep.subr.mxu0 0.0
        %3450 = vmatpush1.msra.mxu0 0.0
        %3451 = vmatprep.subr.mxu0 0.0
        %3452 = vmatpush1.msra.mxu0 0.0
        %3453 = vmatprep.subr.mxu0 0.0
        %3454 = vmatpush1.msra.mxu0 0.0
        %3455 = vmatprep.subr.mxu0 0.0
        %3456 = vmatpush1.msra.mxu0 0.0
        %3457 = vmatprep.subr.mxu0 0.0
        %3458 = vmatpush1.msra.mxu0 0.0
        %3459 = vmatprep.subr.mxu0 0.0
        %3460 = vmatpush1.msra.mxu0 0.0
        %3461 = vmatprep.subr.mxu0 0.0
        %3462 = vmatpush1.msra.mxu0 0.0
        %3463 = vmatprep.subr.mxu0 0.0
        %3464 = vmatpush1.msra.mxu0 0.0
        %3465 = vmatprep.subr.mxu0 0.0
        %3466 = vmatpush1.msra.mxu0 0.0
        %3467 = vmatprep.subr.mxu0 0.0
        %3468 = vmatpush1.msra.mxu0 0.0
        %3469 = vmatprep.subr.mxu0 0.0
        %3470 = vmatpush1.msra.mxu0 0.0
        %3471 = vmatprep.subr.mxu0 0.0
        %3472 = vmatpush1.msra.mxu0 0.0
        %3473 = vmatprep.subr.mxu0 0.0
        %3474 = vmatpush1.msra.mxu0 0.0
        %3475 = vmatprep.subr.mxu0 0.0
        %3476 = vmatpush1.msra.mxu0 0.0
        %3477 = vmatprep.mubr.f32.mxu0 0.0
        %3478 = vmatmul.mubr.f32.gmra.mrb[0].mxu0 %v3409
        %v3479 = vpop.f32.mrb[0].mxu0
        %v3480 = vadd.f32 0.0, %v3479
        %v3481 = vpop.f32.mrb[0].mxu0
        %3482 = vmatprep.mubr.f32.mxu0 0.0
        %3483 = vmatmul.mubr.f32.gmra.mrb[0].mxu0 %v3411
        %v3484 = vpop.f32.mrb[0].mxu0
        %v3485 = vadd.f32 0.0, %v3484
        %v3486 = vpop.f32.mrb[0].mxu0
        %3487 = vdwg.mxu0
        %v3489 = vsel %vm847, %v3397, 0
        %v3492 = vsel %vm847, %v3398, 0
        %3494 = vmatprep.subr.mxu0 0.0
        %3495 = vmatpush1.msra.mxu0 %v3400
        %3496 = vmatprep.subr.mxu0 0.0
        %3497 = vmatpush1.msra.mxu0 %v3401
        %3498 = vmatprep.subr.mxu0 0.0
        %3499 = vmatpush1.msra.mxu0 %v3402
        %3500 = vmatprep.subr.mxu0 0.0
        %3501 = vmatpush1.msra.mxu0 %v3403
        %3502 = vmatprep.subr.mxu0 0.0
        %3503 = vmatpush1.msra.mxu0 0.0
        %3504 = vmatprep.subr.mxu0 0.0
        %3505 = vmatpush1.msra.mxu0 0.0
        %3506 = vmatprep.subr.mxu0 0.0
        %3507 = vmatpush1.msra.mxu0 0.0
        %3508 = vmatprep.subr.mxu0 0.0
        %3509 = vmatpush1.msra.mxu0 0.0
        %3510 = vmatprep.subr.mxu0 0.0
        %3511 = vmatpush1.msra.mxu0 0.0
        %3512 = vmatprep.subr.mxu0 0.0
        %3513 = vmatpush1.msra.mxu0 0.0
        %3514 = vmatprep.subr.mxu0 0.0
        %3515 = vmatpush1.msra.mxu0 0.0
        %3516 = vmatprep.subr.mxu0 0.0
        %3517 = vmatpush1.msra.mxu0 0.0
        %3518 = vmatprep.subr.mxu0 0.0
        %3519 = vmatpush1.msra.mxu0 0.0
        %3520 = vmatprep.subr.mxu0 0.0
        %3521 = vmatpush1.msra.mxu0 0.0
        %3522 = vmatprep.subr.mxu0 0.0
        %3523 = vmatpush1.msra.mxu0 0.0
        %3524 = vmatprep.subr.mxu0 0.0
        %3525 = vmatpush1.msra.mxu0 0.0
        %3526 = vmatprep.subr.mxu0 0.0
        %3527 = vmatpush1.msra.mxu0 0.0
        %3528 = vmatprep.subr.mxu0 0.0
        %3529 = vmatpush1.msra.mxu0 0.0
        %3530 = vmatprep.subr.mxu0 0.0
        %3531 = vmatpush1.msra.mxu0 0.0
        %3532 = vmatprep.subr.mxu0 0.0
        %3533 = vmatpush1.msra.mxu0 0.0
        %3534 = vmatprep.subr.mxu0 0.0
        %3535 = vmatpush1.msra.mxu0 0.0
        %3536 = vmatprep.subr.mxu0 0.0
        %3537 = vmatpush1.msra.mxu0 0.0
        %3538 = vmatprep.subr.mxu0 0.0
        %3539 = vmatpush1.msra.mxu0 0.0
        %3540 = vmatprep.subr.mxu0 0.0
        %3541 = vmatpush1.msra.mxu0 0.0
        %3542 = vmatprep.subr.mxu0 0.0
        %3543 = vmatpush1.msra.mxu0 0.0
        %3544 = vmatprep.subr.mxu0 0.0
        %3545 = vmatpush1.msra.mxu0 0.0
        %3546 = vmatprep.subr.mxu0 0.0
        %3547 = vmatpush1.msra.mxu0 0.0
        %3548 = vmatprep.subr.mxu0 0.0
        %3549 = vmatpush1.msra.mxu0 0.0
        %3550 = vmatprep.subr.mxu0 0.0
        %3551 = vmatpush1.msra.mxu0 0.0
        %3552 = vmatprep.subr.mxu0 0.0
        %3553 = vmatpush1.msra.mxu0 0.0
        %3554 = vmatprep.subr.mxu0 0.0
        %3555 = vmatpush1.msra.mxu0 0.0
        %3556 = vmatprep.subr.mxu0 0.0
        %3557 = vmatpush1.msra.mxu0 0.0
        %3558 = vmatprep.mubr.f32.mxu0 0.0
        %3559 = vmatmul.mubr.f32.gmra.mrb[0].mxu0 %v3489
        %v3560 = vpop.f32.mrb[0].mxu0
        %v3561 = vadd.f32 %v3480, %v3560
        %v3562 = vpop.f32.mrb[0].mxu0
        %3563 = vmatprep.mubr.f32.mxu0 0.0
        %3564 = vmatmul.mubr.f32.gmra.mrb[0].mxu0 %v3492
        %v3565 = vpop.f32.mrb[0].mxu0
        %v3566 = vadd.f32 %v3485, %v3565
        %v3567 = vpop.f32.mrb[0].mxu0
        %3568 = vdwg.mxu0
        %v3569 = vrot.slane %v3387, 1
        %v3570 = vrot.slane %v3388, 1
        %v3571 = vsel %vm1096, %v3569, %v3570
        %v3574 = vsel %vm1096, %v3570, 0.0
        %v3575 = vmul.f32 %v3571, %v2275
        %v3576 = vmul.f32 %v3574, %v2280
        %s3577 = scalar_lea.vmem %s16, 160
        %v3578 = vld [vmem:[%s3577] sm:$0xff]
        %v3579 = vld [vmem:[%s3577 + $0x8] sm:$0xff]
        %v3580 = vld [vmem:[%s3577 + $0x10] sm:$0xff]
        %v3581 = vld [vmem:[%s3577 + $0x18] sm:$0xff]
        %v3583 = vsel %vm847, %v3575, 0
        %v3586 = vsel %vm847, %v3576, 0
        %3588 = vmatprep.subr.mxu0 0.0
        %3589 = vmatpush1.msra.mxu0 %v3578
        %3590 = vmatprep.subr.mxu0 0.0
        %3591 = vmatpush1.msra.mxu0 %v3579
        %3592 = vmatprep.subr.mxu0 0.0
        %3593 = vmatpush1.msra.mxu0 %v3580
        %3594 = vmatprep.subr.mxu0 0.0
        %3595 = vmatpush1.msra.mxu0 %v3581
        %3596 = vmatprep.subr.mxu0 0.0
        %3597 = vmatpush1.msra.mxu0 0.0
        %3598 = vmatprep.subr.mxu0 0.0
        %3599 = vmatpush1.msra.mxu0 0.0
        %3600 = vmatprep.subr.mxu0 0.0
        %3601 = vmatpush1.msra.mxu0 0.0
        %3602 = vmatprep.subr.mxu0 0.0
        %3603 = vmatpush1.msra.mxu0 0.0
        %3604 = vmatprep.subr.mxu0 0.0
        %3605 = vmatpush1.msra.mxu0 0.0
        %3606 = vmatprep.subr.mxu0 0.0
        %3607 = vmatpush1.msra.mxu0 0.0
        %3608 = vmatprep.subr.mxu0 0.0
        %3609 = vmatpush1.msra.mxu0 0.0
        %3610 = vmatprep.subr.mxu0 0.0
        %3611 = vmatpush1.msra.mxu0 0.0
        %3612 = vmatprep.subr.mxu0 0.0
        %3613 = vmatpush1.msra.mxu0 0.0
        %3614 = vmatprep.subr.mxu0 0.0
        %3615 = vmatpush1.msra.mxu0 0.0
        %3616 = vmatprep.subr.mxu0 0.0
        %3617 = vmatpush1.msra.mxu0 0.0
        %3618 = vmatprep.subr.mxu0 0.0
        %3619 = vmatpush1.msra.mxu0 0.0
        %3620 = vmatprep.subr.mxu0 0.0
        %3621 = vmatpush1.msra.mxu0 0.0
        %3622 = vmatprep.subr.mxu0 0.0
        %3623 = vmatpush1.msra.mxu0 0.0
        %3624 = vmatprep.subr.mxu0 0.0
        %3625 = vmatpush1.msra.mxu0 0.0
        %3626 = vmatprep.subr.mxu0 0.0
        %3627 = vmatpush1.msra.mxu0 0.0
        %3628 = vmatprep.subr.mxu0 0.0
        %3629 = vmatpush1.msra.mxu0 0.0
        %3630 = vmatprep.subr.mxu0 0.0
        %3631 = vmatpush1.msra.mxu0 0.0
        %3632 = vmatprep.subr.mxu0 0.0
        %3633 = vmatpush1.msra.mxu0 0.0
        %3634 = vmatprep.subr.mxu0 0.0
        %3635 = vmatpush1.msra.mxu0 0.0
        %3636 = vmatprep.subr.mxu0 0.0
        %3637 = vmatpush1.msra.mxu0 0.0
        %3638 = vmatprep.subr.mxu0 0.0
        %3639 = vmatpush1.msra.mxu0 0.0
        %3640 = vmatprep.subr.mxu0 0.0
        %3641 = vmatpush1.msra.mxu0 0.0
        %3642 = vmatprep.subr.mxu0 0.0
        %3643 = vmatpush1.msra.mxu0 0.0
        %3644 = vmatprep.subr.mxu0 0.0
        %3645 = vmatpush1.msra.mxu0 0.0
        %3646 = vmatprep.subr.mxu0 0.0
        %3647 = vmatpush1.msra.mxu0 0.0
        %3648 = vmatprep.subr.mxu0 0.0
        %3649 = vmatpush1.msra.mxu0 0.0
        %3650 = vmatprep.subr.mxu0 0.0
        %3651 = vmatpush1.msra.mxu0 0.0
        %3652 = vmatprep.mubr.f32.mxu0 0.0
        %3653 = vmatmul.mubr.f32.gmra.mrb[0].mxu0 %v3583
        %v3654 = vpop.f32.mrb[0].mxu0
        %v3655 = vadd.f32 0.0, %v3654
        %v3656 = vpop.f32.mrb[0].mxu0
        %3657 = vmatprep.mubr.f32.mxu0 0.0
        %3658 = vmatmul.mubr.f32.gmra.mrb[0].mxu0 %v3586
        %v3659 = vpop.f32.mrb[0].mxu0
        %v3660 = vadd.f32 0.0, %v3659
        %v3661 = vpop.f32.mrb[0].mxu0
        %3662 = vdwg.mxu0
        %v3663 = vadd.f32 %v3561, %v3655
        %v3664 = vadd.f32 %v3566, %v3660
        %s3665 = scalar_lea.vmem %s17, 1
        %v3666 = vld [vmem:[%s3665] sm:$0x1]
        %v3668 = vlaneseq
        %v3669 = vshrl.u32 %v3668, 7
        %v3670 = vsub.s32 0, %v3669
        %v3671 = vrot.slane %v3666, %v3670
        %v3673 = vadd.f32 %v3663, %v3671
        %v3674 = vadd.f32 %v3664, %v3671
        %v3675 = vmax.f32 %v3673, 0.0
        %v3676 = vmax.f32 %v3674, 0.0
        %v3679 = vrot.slane %v3675, 7
        %v3680 = vrot.slane %v3676, 7
        %v3681 = vsel %vm823, %v3679, %v3680
        %v3684 = vsel %vm823, 0.0, %v3679
        %v3685 = vmul.f32 %v3684, %v2088
        %v3686 = vmul.f32 %v3681, %v2093
        %s3687 = scalar_lea.vmem %s18, 384
        %v3688 = vld [vmem:[%s3687] sm:$0xff]
        %v3689 = vld [vmem:[%s3687 + $0x8] sm:$0xff]
        %v3690 = vld [vmem:[%s3687 + $0x10] sm:$0xff]
        %v3691 = vld [vmem:[%s3687 + $0x18] sm:$0xff]
        %v3692 = vld [vmem:[%s3687 + $0x20] sm:$0xff]
        %v3693 = vld [vmem:[%s3687 + $0x28] sm:$0xff]
        %v3694 = vld [vmem:[%s3687 + $0x30] sm:$0xff]
        %v3695 = vld [vmem:[%s3687 + $0x38] sm:$0xff]
        %v3696 = vld [vmem:[%s3687 + $0x40] sm:$0xff]
        %v3697 = vld [vmem:[%s3687 + $0x48] sm:$0xff]
        %v3698 = vld [vmem:[%s3687 + $0x50] sm:$0xff]
        %v3699 = vld [vmem:[%s3687 + $0x58] sm:$0xff]
        %v3700 = vld [vmem:[%s3687 + $0x60] sm:$0xff]
        %v3701 = vld [vmem:[%s3687 + $0x68] sm:$0xff]
        %v3702 = vld [vmem:[%s3687 + $0x70] sm:$0xff]
        %v3703 = vld [vmem:[%s3687 + $0x78] sm:$0xff]
        %s3704 = scalar_lea.vmem %s18, 512
        %v3705 = vld [vmem:[%s3704] sm:$0xff]
        %v3706 = vld [vmem:[%s3704 + $0x8] sm:$0xff]
        %v3707 = vld [vmem:[%s3704 + $0x10] sm:$0xff]
        %v3708 = vld [vmem:[%s3704 + $0x18] sm:$0xff]
        %v3709 = vld [vmem:[%s3704 + $0x20] sm:$0xff]
        %v3710 = vld [vmem:[%s3704 + $0x28] sm:$0xff]
        %v3711 = vld [vmem:[%s3704 + $0x30] sm:$0xff]
        %v3712 = vld [vmem:[%s3704 + $0x38] sm:$0xff]
        %v3713 = vld [vmem:[%s3704 + $0x40] sm:$0xff]
        %v3714 = vld [vmem:[%s3704 + $0x48] sm:$0xff]
        %v3715 = vld [vmem:[%s3704 + $0x50] sm:$0xff]
        %v3716 = vld [vmem:[%s3704 + $0x58] sm:$0xff]
        %v3717 = vld [vmem:[%s3704 + $0x60] sm:$0xff]
        %v3718 = vld [vmem:[%s3704 + $0x68] sm:$0xff]
        %v3719 = vld [vmem:[%s3704 + $0x70] sm:$0xff]
        %v3720 = vld [vmem:[%s3704 + $0x78] sm:$0xff]
        %3721 = vmatprep.subr.mxu0 0.0
        %3722 = vmatpush1.msra.mxu0 %v3705
        %3723 = vmatprep.subr.mxu0 0.0
        %3724 = vmatpush1.msra.mxu0 %v3706
        %3725 = vmatprep.subr.mxu0 0.0
        %3726 = vmatpush1.msra.mxu0 %v3707
        %3727 = vmatprep.subr.mxu0 0.0
        %3728 = vmatpush1.msra.mxu0 %v3708
        %3729 = vmatprep.subr.mxu0 0.0
        %3730 = vmatpush1.msra.mxu0 %v3709
        %3731 = vmatprep.subr.mxu0 0.0
        %3732 = vmatpush1.msra.mxu0 %v3710
        %3733 = vmatprep.subr.mxu0 0.0
        %3734 = vmatpush1.msra.mxu0 %v3711
        %3735 = vmatprep.subr.mxu0 0.0
        %3736 = vmatpush1.msra.mxu0 %v3712
        %3737 = vmatprep.subr.mxu0 0.0
        %3738 = vmatpush1.msra.mxu0 %v3713
        %3739 = vmatprep.subr.mxu0 0.0
        %3740 = vmatpush1.msra.mxu0 %v3714
        %3741 = vmatprep.subr.mxu0 0.0
        %3742 = vmatpush1.msra.mxu0 %v3715
        %3743 = vmatprep.subr.mxu0 0.0
        %3744 = vmatpush1.msra.mxu0 %v3716
        %3745 = vmatprep.subr.mxu0 0.0
        %3746 = vmatpush1.msra.mxu0 %v3717
        %3747 = vmatprep.subr.mxu0 0.0
        %3748 = vmatpush1.msra.mxu0 %v3718
        %3749 = vmatprep.subr.mxu0 0.0
        %3750 = vmatpush1.msra.mxu0 %v3719
        %3751 = vmatprep.subr.mxu0 0.0
        %3752 = vmatpush1.msra.mxu0 %v3720
        %3753 = vmatprep.subr.mxu0 0.0
        %3754 = vmatpush1.msra.mxu0 0.0
        %3755 = vmatprep.subr.mxu0 0.0
        %3756 = vmatpush1.msra.mxu0 0.0
        %3757 = vmatprep.subr.mxu0 0.0
        %3758 = vmatpush1.msra.mxu0 0.0
        %3759 = vmatprep.subr.mxu0 0.0
        %3760 = vmatpush1.msra.mxu0 0.0
        %3761 = vmatprep.subr.mxu0 0.0
        %3762 = vmatpush1.msra.mxu0 0.0
        %3763 = vmatprep.subr.mxu0 0.0
        %3764 = vmatpush1.msra.mxu0 0.0
        %3765 = vmatprep.subr.mxu0 0.0
        %3766 = vmatpush1.msra.mxu0 0.0
        %3767 = vmatprep.subr.mxu0 0.0
        %3768 = vmatpush1.msra.mxu0 0.0
        %3769 = vmatprep.subr.mxu0 0.0
        %3770 = vmatpush1.msra.mxu0 0.0
        %3771 = vmatprep.subr.mxu0 0.0
        %3772 = vmatpush1.msra.mxu0 0.0
        %3773 = vmatprep.subr.mxu0 0.0
        %3774 = vmatpush1.msra.mxu0 0.0
        %3775 = vmatprep.subr.mxu0 0.0
        %3776 = vmatpush1.msra.mxu0 0.0
        %3777 = vmatprep.subr.mxu0 0.0
        %3778 = vmatpush1.msra.mxu0 0.0
        %3779 = vmatprep.subr.mxu0 0.0
        %3780 = vmatpush1.msra.mxu0 0.0
        %3781 = vmatprep.subr.mxu0 0.0
        %3782 = vmatpush1.msra.mxu0 0.0
        %3783 = vmatprep.subr.mxu0 0.0
        %3784 = vmatpush1.msra.mxu0 0.0
        %3785 = vmatprep.mubr.f32.mxu0 0.0
        %3786 = vmatmul.mubr.f32.gmra.mrb[0].mxu0 %v3675
        %v3787 = vpop.f32.mrb[0].mxu0
        %v3788 = vadd.f32 0.0, %v3787
        %v3789 = vpop.f32.mrb[0].mxu0
        %3790 = vmatprep.mubr.f32.mxu0 0.0
        %3791 = vmatmul.mubr.f32.gmra.mrb[0].mxu0 %v3676
        %v3792 = vpop.f32.mrb[0].mxu0
        %v3793 = vadd.f32 0.0, %v3792
        %v3794 = vpop.f32.mrb[0].mxu0
        %3795 = vdwg.mxu0
        %3796 = vmatprep.subr.mxu0 0.0
        %3797 = vmatpush1.msra.mxu0 %v3688
        %3798 = vmatprep.subr.mxu0 0.0
        %3799 = vmatpush1.msra.mxu0 %v3689
        %3800 = vmatprep.subr.mxu0 0.0
        %3801 = vmatpush1.msra.mxu0 %v3690
        %3802 = vmatprep.subr.mxu0 0.0
        %3803 = vmatpush1.msra.mxu0 %v3691
        %3804 = vmatprep.subr.mxu0 0.0
        %3805 = vmatpush1.msra.mxu0 %v3692
        %3806 = vmatprep.subr.mxu0 0.0
        %3807 = vmatpush1.msra.mxu0 %v3693
        %3808 = vmatprep.subr.mxu0 0.0
        %3809 = vmatpush1.msra.mxu0 %v3694
        %3810 = vmatprep.subr.mxu0 0.0
        %3811 = vmatpush1.msra.mxu0 %v3695
        %3812 = vmatprep.subr.mxu0 0.0
        %3813 = vmatpush1.msra.mxu0 %v3696
        %3814 = vmatprep.subr.mxu0 0.0
        %3815 = vmatpush1.msra.mxu0 %v3697
        %3816 = vmatprep.subr.mxu0 0.0
        %3817 = vmatpush1.msra.mxu0 %v3698
        %3818 = vmatprep.subr.mxu0 0.0
        %3819 = vmatpush1.msra.mxu0 %v3699
        %3820 = vmatprep.subr.mxu0 0.0
        %3821 = vmatpush1.msra.mxu0 %v3700
        %3822 = vmatprep.subr.mxu0 0.0
        %3823 = vmatpush1.msra.mxu0 %v3701
        %3824 = vmatprep.subr.mxu0 0.0
        %3825 = vmatpush1.msra.mxu0 %v3702
        %3826 = vmatprep.subr.mxu0 0.0
        %3827 = vmatpush1.msra.mxu0 %v3703
        %3828 = vmatprep.subr.mxu0 0.0
        %3829 = vmatpush1.msra.mxu0 0.0
        %3830 = vmatprep.subr.mxu0 0.0
        %3831 = vmatpush1.msra.mxu0 0.0
        %3832 = vmatprep.subr.mxu0 0.0
        %3833 = vmatpush1.msra.mxu0 0.0
        %3834 = vmatprep.subr.mxu0 0.0
        %3835 = vmatpush1.msra.mxu0 0.0
        %3836 = vmatprep.subr.mxu0 0.0
        %3837 = vmatpush1.msra.mxu0 0.0
        %3838 = vmatprep.subr.mxu0 0.0
        %3839 = vmatpush1.msra.mxu0 0.0
        %3840 = vmatprep.subr.mxu0 0.0
        %3841 = vmatpush1.msra.mxu0 0.0
        %3842 = vmatprep.subr.mxu0 0.0
        %3843 = vmatpush1.msra.mxu0 0.0
        %3844 = vmatprep.subr.mxu0 0.0
        %3845 = vmatpush1.msra.mxu0 0.0
        %3846 = vmatprep.subr.mxu0 0.0
        %3847 = vmatpush1.msra.mxu0 0.0
        %3848 = vmatprep.subr.mxu0 0.0
        %3849 = vmatpush1.msra.mxu0 0.0
        %3850 = vmatprep.subr.mxu0 0.0
        %3851 = vmatpush1.msra.mxu0 0.0
        %3852 = vmatprep.subr.mxu0 0.0
        %3853 = vmatpush1.msra.mxu0 0.0
        %3854 = vmatprep.subr.mxu0 0.0
        %3855 = vmatpush1.msra.mxu0 0.0
        %3856 = vmatprep.subr.mxu0 0.0
        %3857 = vmatpush1.msra.mxu0 0.0
        %3858 = vmatprep.subr.mxu0 0.0
        %3859 = vmatpush1.msra.mxu0 0.0
        %3860 = vmatprep.mubr.f32.mxu0 0.0
        %3861 = vmatmul.mubr.f32.gmra.mrb[0].mxu0 %v3685
        %v3862 = vpop.f32.mrb[0].mxu0
        %v3863 = vadd.f32 %v3788, %v3862
        %v3864 = vpop.f32.mrb[0].mxu0
        %3865 = vmatprep.mubr.f32.mxu0 0.0
        %3866 = vmatmul.mubr.f32.gmra.mrb[0].mxu0 %v3686
        %v3867 = vpop.f32.mrb[0].mxu0
        %v3868 = vadd.f32 %v3793, %v3867
        %v3869 = vpop.f32.mrb[0].mxu0
        %3870 = vdwg.mxu0
        %v3871 = vrot.slane %v3675, 1
        %v3872 = vrot.slane %v3676, 1
        %v3873 = vsel %vm1096, %v3871, %v3872
        %v3876 = vsel %vm1096, %v3872, 0.0
        %v3877 = vmul.f32 %v3873, %v2275
        %v3878 = vmul.f32 %v3876, %v2280
        %s3879 = scalar_lea.vmem %s18, 640
        %v3880 = vld [vmem:[%s3879] sm:$0xff]
        %v3881 = vld [vmem:[%s3879 + $0x8] sm:$0xff]
        %v3882 = vld [vmem:[%s3879 + $0x10] sm:$0xff]
        %v3883 = vld [vmem:[%s3879 + $0x18] sm:$0xff]
        %v3884 = vld [vmem:[%s3879 + $0x20] sm:$0xff]
        %v3885 = vld [vmem:[%s3879 + $0x28] sm:$0xff]
        %v3886 = vld [vmem:[%s3879 + $0x30] sm:$0xff]
        %v3887 = vld [vmem:[%s3879 + $0x38] sm:$0xff]
        %v3888 = vld [vmem:[%s3879 + $0x40] sm:$0xff]
        %v3889 = vld [vmem:[%s3879 + $0x48] sm:$0xff]
        %v3890 = vld [vmem:[%s3879 + $0x50] sm:$0xff]
        %v3891 = vld [vmem:[%s3879 + $0x58] sm:$0xff]
        %v3892 = vld [vmem:[%s3879 + $0x60] sm:$0xff]
        %v3893 = vld [vmem:[%s3879 + $0x68] sm:$0xff]
        %v3894 = vld [vmem:[%s3879 + $0x70] sm:$0xff]
        %v3895 = vld [vmem:[%s3879 + $0x78] sm:$0xff]
        %3896 = vmatprep.subr.mxu0 0.0
        %3897 = vmatpush1.msra.mxu0 %v3880
        %3898 = vmatprep.subr.mxu0 0.0
        %3899 = vmatpush1.msra.mxu0 %v3881
        %3900 = vmatprep.subr.mxu0 0.0
        %3901 = vmatpush1.msra.mxu0 %v3882
        %3902 = vmatprep.subr.mxu0 0.0
        %3903 = vmatpush1.msra.mxu0 %v3883
        %3904 = vmatprep.subr.mxu0 0.0
        %3905 = vmatpush1.msra.mxu0 %v3884
        %3906 = vmatprep.subr.mxu0 0.0
        %3907 = vmatpush1.msra.mxu0 %v3885
        %3908 = vmatprep.subr.mxu0 0.0
        %3909 = vmatpush1.msra.mxu0 %v3886
        %3910 = vmatprep.subr.mxu0 0.0
        %3911 = vmatpush1.msra.mxu0 %v3887
        %3912 = vmatprep.subr.mxu0 0.0
        %3913 = vmatpush1.msra.mxu0 %v3888
        %3914 = vmatprep.subr.mxu0 0.0
        %3915 = vmatpush1.msra.mxu0 %v3889
        %3916 = vmatprep.subr.mxu0 0.0
        %3917 = vmatpush1.msra.mxu0 %v3890
        %3918 = vmatprep.subr.mxu0 0.0
        %3919 = vmatpush1.msra.mxu0 %v3891
        %3920 = vmatprep.subr.mxu0 0.0
        %3921 = vmatpush1.msra.mxu0 %v3892
        %3922 = vmatprep.subr.mxu0 0.0
        %3923 = vmatpush1.msra.mxu0 %v3893
        %3924 = vmatprep.subr.mxu0 0.0
        %3925 = vmatpush1.msra.mxu0 %v3894
        %3926 = vmatprep.subr.mxu0 0.0
        %3927 = vmatpush1.msra.mxu0 %v3895
        %3928 = vmatprep.subr.mxu0 0.0
        %3929 = vmatpush1.msra.mxu0 0.0
        %3930 = vmatprep.subr.mxu0 0.0
        %3931 = vmatpush1.msra.mxu0 0.0
        %3932 = vmatprep.subr.mxu0 0.0
        %3933 = vmatpush1.msra.mxu0 0.0
        %3934 = vmatprep.subr.mxu0 0.0
        %3935 = vmatpush1.msra.mxu0 0.0
        %3936 = vmatprep.subr.mxu0 0.0
        %3937 = vmatpush1.msra.mxu0 0.0
        %3938 = vmatprep.subr.mxu0 0.0
        %3939 = vmatpush1.msra.mxu0 0.0
        %3940 = vmatprep.subr.mxu0 0.0
        %3941 = vmatpush1.msra.mxu0 0.0
        %3942 = vmatprep.subr.mxu0 0.0
        %3943 = vmatpush1.msra.mxu0 0.0
        %3944 = vmatprep.subr.mxu0 0.0
        %3945 = vmatpush1.msra.mxu0 0.0
        %3946 = vmatprep.subr.mxu0 0.0
        %3947 = vmatpush1.msra.mxu0 0.0
        %3948 = vmatprep.subr.mxu0 0.0
        %3949 = vmatpush1.msra.mxu0 0.0
        %3950 = vmatprep.subr.mxu0 0.0
        %3951 = vmatpush1.msra.mxu0 0.0
        %3952 = vmatprep.subr.mxu0 0.0
        %3953 = vmatpush1.msra.mxu0 0.0
        %3954 = vmatprep.subr.mxu0 0.0
        %3955 = vmatpush1.msra.mxu0 0.0
        %3956 = vmatprep.subr.mxu0 0.0
        %3957 = vmatpush1.msra.mxu0 0.0
        %3958 = vmatprep.subr.mxu0 0.0
        %3959 = vmatpush1.msra.mxu0 0.0
        %3960 = vmatprep.mubr.f32.mxu0 0.0
        %3961 = vmatmul.mubr.f32.gmra.mrb[0].mxu0 %v3877
        %v3962 = vpop.f32.mrb[0].mxu0
        %v3963 = vadd.f32 0.0, %v3962
        %v3964 = vpop.f32.mrb[0].mxu0
        %3965 = vmatprep.mubr.f32.mxu0 0.0
        %3966 = vmatmul.mubr.f32.gmra.mrb[0].mxu0 %v3878
        %v3967 = vpop.f32.mrb[0].mxu0
        %v3968 = vadd.f32 0.0, %v3967
        %v3969 = vpop.f32.mrb[0].mxu0
        %3970 = vdwg.mxu0
        %v3971 = vadd.f32 %v3863, %v3963
        %v3972 = vadd.f32 %v3868, %v3968
        %s3973 = scalar_lea.vmem %s19, 1
        %v3974 = vld [vmem:[%s3973] sm:$0x1]
        %v3976 = vlaneseq
        %v3977 = vshrl.u32 %v3976, 7
        %v3978 = vsub.s32 0, %v3977
        %v3979 = vrot.slane %v3974, %v3978
        %v3981 = vadd.f32 %v3971, %v3979
        %v3982 = vadd.f32 %v3972, %v3979
        %v3983 = vadd.f32 %v3981, %v3387
        %v3984 = vadd.f32 %v3982, %v3388
        %s3985 = scalar_lea.vmem %s20, 1
        %v3986 = vld [vmem:[%s3985] sm:$0x1]
        %s3987 = scalar_lea.vmem %s21, 1
        %v3988 = vld [vmem:[%s3987] sm:$0x1]
        %v3989 = vsel %vm847, %v3983, 0.0
        %3990 = vadd.xlane.f32.xlu0 %v3989
        %v3991 = vpop.xlane.xlu0 %3990
        %v3992 = vsel %vm847, %v3984, 0.0
        %3993 = vadd.xlane.f32.xlu0 %v3992
        %v3994 = vpop.xlane.xlu0 %3993
        %v3995 = vmul.f32 %v3991, %v2038
        %v3996 = vmul.f32 %v3994, %v2038
        %v3997 = vsub.f32 %v3983, %v3995
        %v3998 = vsub.f32 %v3984, %v3996
        %v3999 = vmul.f32 %v3997, %v3997
        %v4000 = vmul.f32 %v3998, %v3998
        %v4001 = vsel %vm847, %v3999, 0.0
        %4002 = vadd.xlane.f32.xlu0 %v4001
        %v4003 = vpop.xlane.xlu0 %4002
        %v4004 = vsel %vm847, %v4000, 0.0
        %4005 = vadd.xlane.f32.xlu0 %v4004
        %v4006 = vpop.xlane.xlu0 %4005
        %v4007 = vmul.f32 %v4003, %v2038
        %v4008 = vmul.f32 %v4006, %v2038
        %v4009 = vadd.f32 %v4007, 1e-05
        %v4010 = vadd.f32 %v4008, 1e-05
        %v4011 = vrsqrt.pop %v4009
        %v4012 = vrsqrt.pop %v4010
        %v4013 = vmul.f32 %v3997, %v4011
        %v4014 = vmul.f32 %v3998, %v4012
        %v4016 = vlaneseq
        %v4017 = vshrl.u32 %v4016, 7
        %v4018 = vsub.s32 0, %v4017
        %v4019 = vrot.slane %v3986, %v4018
        %v4021 = vmul.f32 %v4013, %v4019
        %v4022 = vmul.f32 %v4014, %v4019
        %v4024 = vlaneseq
        %v4025 = vshrl.u32 %v4024, 7
        %v4026 = vsub.s32 0, %v4025
        %v4027 = vrot.slane %v3988, %v4026
        %v4029 = vadd.f32 %v4021, %v4027
        %v4030 = vadd.f32 %v4022, %v4027
        %v4031 = vmul.f32 %v4029, %v1419
        %v4032 = vmul.f32 %v4030, %v1424
        %v4033 = vld [vmem:[%s22] sm:$0xff]
        %v4034 = vld [vmem:[%s22 + $0x8] sm:$0xff]
        %v4035 = vld [vmem:[%s22 + $0x10] sm:$0xff]
        %v4036 = vld [vmem:[%s22 + $0x18] sm:$0xff]
        %v4038 = vsel %vm847, %v4031, 0
        %v4041 = vsel %vm847, %v4032, 0
        %4043 = vmatprep.subr.mxu0 0.0
        %4044 = vmatpush1.msra.mxu0 %v4033
        %4045 = vmatprep.subr.mxu0 0.0
        %4046 = vmatpush1.msra.mxu0 %v4034
        %4047 = vmatprep.subr.mxu0 0.0
        %4048 = vmatpush1.msra.mxu0 %v4035
        %4049 = vmatprep.subr.mxu0 0.0
        %4050 = vmatpush1.msra.mxu0 %v4036
        %4051 = vmatprep.subr.mxu0 0.0
        %4052 = vmatpush1.msra.mxu0 0.0
        %4053 = vmatprep.subr.mxu0 0.0
        %4054 = vmatpush1.msra.mxu0 0.0
        %4055 = vmatprep.subr.mxu0 0.0
        %4056 = vmatpush1.msra.mxu0 0.0
        %4057 = vmatprep.subr.mxu0 0.0
        %4058 = vmatpush1.msra.mxu0 0.0
        %4059 = vmatprep.subr.mxu0 0.0
        %4060 = vmatpush1.msra.mxu0 0.0
        %4061 = vmatprep.subr.mxu0 0.0
        %4062 = vmatpush1.msra.mxu0 0.0
        %4063 = vmatprep.subr.mxu0 0.0
        %4064 = vmatpush1.msra.mxu0 0.0
        %4065 = vmatprep.subr.mxu0 0.0
        %4066 = vmatpush1.msra.mxu0 0.0
        %4067 = vmatprep.subr.mxu0 0.0
        %4068 = vmatpush1.msra.mxu0 0.0
        %4069 = vmatprep.subr.mxu0 0.0
        %4070 = vmatpush1.msra.mxu0 0.0
        %4071 = vmatprep.subr.mxu0 0.0
        %4072 = vmatpush1.msra.mxu0 0.0
        %4073 = vmatprep.subr.mxu0 0.0
        %4074 = vmatpush1.msra.mxu0 0.0
        %4075 = vmatprep.subr.mxu0 0.0
        %4076 = vmatpush1.msra.mxu0 0.0
        %4077 = vmatprep.subr.mxu0 0.0
        %4078 = vmatpush1.msra.mxu0 0.0
        %4079 = vmatprep.subr.mxu0 0.0
        %4080 = vmatpush1.msra.mxu0 0.0
        %4081 = vmatprep.subr.mxu0 0.0
        %4082 = vmatpush1.msra.mxu0 0.0
        %4083 = vmatprep.subr.mxu0 0.0
        %4084 = vmatpush1.msra.mxu0 0.0
        %4085 = vmatprep.subr.mxu0 0.0
        %4086 = vmatpush1.msra.mxu0 0.0
        %4087 = vmatprep.subr.mxu0 0.0
        %4088 = vmatpush1.msra.mxu0 0.0
        %4089 = vmatprep.subr.mxu0 0.0
        %4090 = vmatpush1.msra.mxu0 0.0
        %4091 = vmatprep.subr.mxu0 0.0
        %4092 = vmatpush1.msra.mxu0 0.0
        %4093 = vmatprep.subr.mxu0 0.0
        %4094 = vmatpush1.msra.mxu0 0.0
        %4095 = vmatprep.subr.mxu0 0.0
        %4096 = vmatpush1.msra.mxu0 0.0
        %4097 = vmatprep.subr.mxu0 0.0
        %4098 = vmatpush1.msra.mxu0 0.0
        %4099 = vmatprep.subr.mxu0 0.0
        %4100 = vmatpush1.msra.mxu0 0.0
        %4101 = vmatprep.subr.mxu0 0.0
        %4102 = vmatpush1.msra.mxu0 0.0
        %4103 = vmatprep.subr.mxu0 0.0
        %4104 = vmatpush1.msra.mxu0 0.0
        %4105 = vmatprep.subr.mxu0 0.0
        %4106 = vmatpush1.msra.mxu0 0.0
        %4107 = vmatprep.mubr.f32.mxu0 0.0
        %4108 = vmatmul.mubr.f32.gmra.mrb[0].mxu0 %v4038
        %v4109 = vpop.f32.mrb[0].mxu0
        %v4110 = vadd.f32 0.0, %v4109
        %v4111 = vpop.f32.mrb[0].mxu0
        %4112 = vmatprep.mubr.f32.mxu0 0.0
        %4113 = vmatmul.mubr.f32.gmra.mrb[0].mxu0 %v4041
        %v4114 = vpop.f32.mrb[0].mxu0
        %v4115 = vadd.f32 0.0, %v4114
        %v4116 = vpop.f32.mrb[0].mxu0
        %4117 = vdwg.mxu0
        %v4118 = vmul.f32 %v4110, %v1419
        %v4119 = vmul.f32 %v4115, %v1424
        %4120 = vst [vmem:[%s751] sm:$0xff] %v4118
        %4121 = vst [vmem:[%s751 + $0x8] sm:$0xff] %v4119
        %s4122 = sand.u32 %s548, 1
        %s4123 = scalar_lea.sflag [#allocation3], %s4122
        %s4124 = sand.u32 %s548, 1
        %s4125 = smul.addr %s4124, 16
        %s4126 = scalar_lea.vmem [#allocation2], %s4125
        // Predicated region
        $region113: #{tpu_custom_call.1} parent=111 // pred_check
          %p4127 = pneg %p558
        $region114: #{tpu_custom_call.1} parent=111 // pred_check_branch
          %4129 = sbr.rel (%p4127) target = $region116
        $region115: #{tpu_custom_call.1} parent=111 // pred_region
          %s4130 = smul.u32 2, %s37
          %s4132 = ssub.s32 256, 256
          %4133 = vsyncadd %s4123, %s4132
          %s4134 = smul.addr %s4130, 128
          %s4135 = scalar_lea.hbm %s23, %s4134
          %s4136 = sshll.u32 %s4126, 4
          %s4137 = int_to_ptr.vmem [resolvable:$true] %s4136
          %4142 = dma.vmem_to_hbm [thread:$0]  %s4137, 256, %s4135, %s4123, 128, 128, 8
        $region116: #{tpu_custom_call.1} parent=111 // pred_fallthru
          _
      $region112: #{tpu_custom_call.1} parent=5 // pred_fallthru
        _
      %p4143 = scmp.le.s32.totalorder 2, %s32
      // Predicated region
      $region117: #{tpu_custom_call.1} parent=5 // pred_check
        %p4144 = pneg %p4143
      $region118: #{tpu_custom_call.1} parent=5 // pred_check_branch
        %4146 = sbr.rel (%p4144) target = $region120
      $region119: #{tpu_custom_call.1} parent=5 // pred_region
        %s4147 = ssub.s32 %s32, 2
        // Predicated region
        $region121: #{tpu_custom_call.1} parent=119 // pred_check
          %p4148 = pneg %p564
        $region122: #{tpu_custom_call.1} parent=119 // pred_check_branch
          %4150 = sbr.rel (%p4148) target = $region124
        $region123: #{tpu_custom_call.1} parent=119 // pred_region
          %s4151 = sand.u32 %s549, 1
          %s4152 = scalar_lea.sflag [#allocation3], %s4151
          %s4153 = sand.u32 %s549, 1
          %s4154 = smul.addr %s4153, 16
          %s4155 = scalar_lea.vmem [#allocation2], %s4154
          %4156 = dma.done %s4152, 256
        $region124: #{tpu_custom_call.1} parent=119 // pred_fallthru
          _
      $region120: #{tpu_custom_call.1} parent=5 // pred_fallthru
        _
    $region6: #{tpu_custom_call.1} parent=1 // loop_footer
      %s36 = sadd.s32 1, %s32
    $region7: #{tpu_custom_call.1} parent=1 // loop_footer_branch
      %31 = sbr.rel target = $region3
    $region8: #{tpu_custom_call.1} parent=1 // loop_exit
      _
    %4157 = vsyncpa [#allocation3], 1
    %s4158 = scalar_lea.sflag [#allocation3], 1
    %4159 = vsyncpa %s4158, 1

</llo_original>
